<compile_context>
chip_gen: v5e
topology: v5e:2x2
jax: 0.10.0
libtpu: 0.0.40
codegen_flags: <defaults>
</compile_context>

<pallas_src>
import functools

import jax
import jax.numpy as jnp
from jax.experimental import pallas as pl
from jax.experimental.pallas import tpu as pltpu


# ------------------------- model config & parameters -----------------------

CFG = dict(hidden=64, heads=4, layers=2, intermediate=128,
           num_query=8, vision_width=64, vocab=32, max_pos=64,
           cross_attention_freq=2, text_len=8, img_len=16)


def init_params(key, cfg):
    """Mini Q-Former parameters, already in the fused/2-D layout the kernel expects."""
    H, I = cfg["hidden"], cfg["intermediate"]
    V, P, Q = cfg["vocab"], cfg["max_pos"], cfg["num_query"]
    std = 0.02
    keys = iter(jax.random.split(key, 256))

    def normal(shape):
        return jax.random.normal(next(keys), shape, jnp.float32) * std

    def ln():
        return (jnp.ones((1, H), jnp.float32), jnp.zeros((1, H), jnp.float32))

    def attn_self():
        return dict(wqkv=normal((H, 3 * H)), bqkv=jnp.zeros((1, 3 * H), jnp.float32),
                    wo=normal((H, H)), bo=jnp.zeros((1, H), jnp.float32),
                    lng=jnp.ones((1, H), jnp.float32), lnb=jnp.zeros((1, H), jnp.float32))

    def attn_cross():
        return dict(wq=normal((H, H)), bq=jnp.zeros((1, H), jnp.float32),
                    wkv=normal((H, 2 * H)), bkv=jnp.zeros((1, 2 * H), jnp.float32),
                    wo=normal((H, H)), bo=jnp.zeros((1, H), jnp.float32),
                    lng=jnp.ones((1, H), jnp.float32), lnb=jnp.zeros((1, H), jnp.float32))

    def ffn_p():
        return dict(wi=normal((H, I)), bi=jnp.zeros((1, I), jnp.float32),
                    wo=normal((I, H)), bo=jnp.zeros((1, H), jnp.float32),
                    lng=jnp.ones((1, H), jnp.float32), lnb=jnp.zeros((1, H), jnp.float32))

    params = {
        "query_tokens": normal((1, Q, H)),
        "word_emb": normal((V, H)),
        "pos_emb": normal((P, H)),
        "ln_vision": ln(),
        "emb_ln": ln(),
        "fc1": (normal((Q * H, 2)), jnp.zeros((1, 2), jnp.float32)),
        "layers": [],
    }
    for l in range(cfg["layers"]):
        lp = {"sa": attn_self(), "ffn_q": ffn_p(), "ffn_t": ffn_p()}
        if l % cfg["cross_attention_freq"] == 0:
            lp["ca"] = attn_cross()
        params["layers"].append(lp)
    return params


# ------------------------------ fused kernel --------------------------------

def _qformer_kernel(*refs, treedef, cfg, n_weights):
    """Whole Q-Former forward for ONE batch element (grid axis = batch)."""
    img_ref, hid_ref, mask_ref = refs[0], refs[1], refs[2]
    wrefs = refs[3:3 + n_weights]
    out_ref = refs[3 + n_weights]
    w = jax.tree_util.tree_unflatten(treedef, wrefs)

    H = cfg["hidden"]
    nH = cfg["heads"]
    d = H // nH
    Q = cfg["num_query"]
    scale = 1.0 / float(d) ** 0.5
    eps = 1e-12

    # fp32 LayerNorm (matches the fp16-safe LayerNorm of the reference)
    def ln(x, g_ref, b_ref):
        xf = x.astype(jnp.float32)
        mu = jnp.mean(xf, axis=-1, keepdims=True)
        var = jnp.mean(jnp.square(xf - mu), axis=-1, keepdims=True)
        return (xf - mu) * jax.lax.rsqrt(var + eps) * g_ref[...] + b_ref[...]

    # multi-head scaled-dot-product attention; heads handled with static lane
    # slices (nH=4), scores via dot_general (no explicit K transpose), softmax
    # denominator via the EUP reciprocal.
    def mha(q, k, v, add_mask):
        outs = []
        for h in range(nH):
            sl = slice(h * d, (h + 1) * d)
            s = jax.lax.dot_general(
                q[:, sl], k[:, sl],
                (((1,), (1,)), ((), ())),
                preferred_element_type=jnp.float32) * scale
            if add_mask is not None:
                s = s + add_mask                      # (1, Lk) broadcast
            s = s - jnp.max(s, axis=-1, keepdims=True)
            p = jnp.exp(s)
            p = p * pl.reciprocal(jnp.sum(p, axis=-1, keepdims=True), approx=True)
            outs.append(jnp.dot(p, v[:, sl], preferred_element_type=jnp.float32))
        return jnp.concatenate(outs, axis=-1)         # (Lq, H)

    def self_attn(x, add_mask, p):
        qkv = jnp.dot(x, p["wqkv"][...],
                      preferred_element_type=jnp.float32) + p["bqkv"][...]
        ctx = mha(qkv[:, :H], qkv[:, H:2 * H], qkv[:, 2 * H:], add_mask)
        out = jnp.dot(ctx, p["wo"][...],
                      preferred_element_type=jnp.float32) + p["bo"][...]
        return ln(out + x, p["lng"], p["lnb"])

    def cross_attn(xq, xkv, p):
        # image attention mask is all-ones -> additive mask is zero, skip it.
        q = jnp.dot(xq, p["wq"][...],
                    preferred_element_type=jnp.float32) + p["bq"][...]
        kv = jnp.dot(xkv, p["wkv"][...],
                     preferred_element_type=jnp.float32) + p["bkv"][...]
        ctx = mha(q, kv[:, :H], kv[:, H:], None)
        out = jnp.dot(ctx, p["wo"][...],
                      preferred_element_type=jnp.float32) + p["bo"][...]
        return ln(out + xq, p["lng"], p["lnb"])

    def ffn(x, p):
        h1 = jnp.dot(x, p["wi"][...],
                     preferred_element_type=jnp.float32) + p["bi"][...]
        h1 = jax.nn.gelu(h1, approximate=True)
        out = jnp.dot(h1, p["wo"][...],
                      preferred_element_type=jnp.float32) + p["bo"][...]
        return ln(out + x, p["lng"], p["lnb"])

    # ---- vision LayerNorm, embedding LayerNorm, additive self-attn mask
    img_e = ln(img_ref[0], *w["ln_vision"])           # (Si, H)
    hidden = ln(hid_ref[0], *w["emb_ln"])             # (S, H)
    add_mask = mask_ref[0]                            # (1, S) additive, fp32

    # ---- Q-Former encoder layers (static unroll; structure is fixed)
    for lp in w["layers"]:
        hidden = self_attn(hidden, add_mask, lp["sa"])
        q_part = hidden[:Q, :]
        t_part = hidden[Q:, :]
        if "ca" in lp:                                # cross-attn on query tokens only
            q_part = cross_attn(q_part, img_e, lp["ca"])
        q_part = ffn(q_part, lp["ffn_q"])
        t_part = ffn(t_part, lp["ffn_t"])
        hidden = jnp.concatenate([q_part, t_part], axis=0)

    # ---- classifier head: flatten query tokens -> fc_1 -> mean -> sigmoid
    fc1_w, fc1_b = w["fc1"]
    q_final = hidden[:Q, :]                           # (Q, H)
    logits = fc1_b[...]                               # (1, 2)
    for i in range(Q):                                # (Q*H, 2) matmul as Q chunks
        logits = logits + jnp.dot(
            q_final[i:i + 1, :], fc1_w[i * H:(i + 1) * H, :],
            preferred_element_type=jnp.float32)
    m = jnp.mean(logits, axis=-1, keepdims=True)      # (1, 1)
    sig = 1.0 / (1.0 + jnp.exp(-m))
    out_ref[0] = sig.astype(out_ref.dtype)


# ------------------------------- forward pass -------------------------------

def npc_cls_forward(params, img, input_ids, attention_mask, cfg):
    B, Si, H = img.shape
    Q = cfg["num_query"]
    T = input_ids.shape[1]
    S = Q + T

    # ---- JAX glue (outside the kernel): token/position embedding gather,
    #      query-token prepend, BERT-style additive mask construction.
    text_emb = (jnp.take(params["word_emb"], input_ids, axis=0)
                + params["pos_emb"][:T][None])
    query_tokens = jnp.broadcast_to(params["query_tokens"], (B, Q, H))
    hidden_in = jnp.concatenate([query_tokens, text_emb], axis=1).astype(jnp.float32)

    qformer_atts = jnp.concatenate(
        [jnp.ones((B, Q), jnp.float32), attention_mask.astype(jnp.float32)], axis=1)
    self_add = ((1.0 - qformer_atts) * -10000.0).reshape(B, 1, S)

    # Weights that live in the kernel (everything except the embedding tables).
    kparams = {k: v for k, v in params.items()
               if k not in ("word_emb", "pos_emb", "query_tokens")}
    leaves, treedef = jax.tree_util.tree_flatten(kparams)

    kernel = functools.partial(_qformer_kernel, treedef=treedef, cfg=cfg,
                               n_weights=len(leaves))

    weight_specs = [pl.BlockSpec(tuple(l.shape), lambda b, nd=l.ndim: (0,) * nd)
                    for l in leaves]

    out = pl.pallas_call(
        kernel,
        out_shape=jax.ShapeDtypeStruct((B, 1, 1), jnp.float32),
        grid=(B,),
        in_specs=[pl.BlockSpec((1, Si, H), lambda b: (b, 0, 0)),   # img
                  pl.BlockSpec((1, S, H), lambda b: (b, 0, 0)),    # [query; text] embeds
                  pl.BlockSpec((1, 1, S), lambda b: (b, 0, 0))]    # additive self mask
                 + weight_specs,
        out_specs=pl.BlockSpec((1, 1, 1), lambda b: (b, 0, 0)),
        compiler_params=pltpu.CompilerParams(
            dimension_semantics=("parallel",)),                    # 2 TCs on v7x
    )(img.astype(jnp.float32), hidden_in, self_add, *leaves)

    return out.reshape(B)


# ----------------------------------- main -----------------------------------

if __name__ == "__main__":
    cfg = CFG
    key = jax.random.PRNGKey(0)
    kp, ki, kid = jax.random.split(key, 3)

    params = init_params(kp, cfg)

    B = 2
    img = jax.random.normal(ki, (B, cfg["img_len"], cfg["vision_width"]), jnp.float32)
    input_ids = jax.random.randint(kid, (B, cfg["text_len"]), 0, cfg["vocab"],
                                   dtype=jnp.int32)
    attention_mask = jnp.ones((B, cfg["text_len"]), jnp.int32)

    fwd = jax.jit(functools.partial(npc_cls_forward, cfg=cfg))
    out = jax.block_until_ready(fwd(params, img, input_ids, attention_mask))

    assert out.shape == (B,), out.shape
    assert bool(jnp.all(jnp.isfinite(out)))
    print("KERNEL_OK")
</pallas_src>

<mosaic_0001>
module attributes {stable_mosaic.version = 11 : i64} {
  func.func @_qformer_kernel(%arg0: i32, %arg1: memref<1x16x64xf32, #tpu.memory_space<vmem>>, %arg2: memref<1x16x64xf32, #tpu.memory_space<vmem>>, %arg3: memref<1x1x16xf32, #tpu.memory_space<vmem>>, %arg4: memref<1x64xf32, #tpu.memory_space<vmem>>, %arg5: memref<1x64xf32, #tpu.memory_space<vmem>>, %arg6: memref<512x2xf32, #tpu.memory_space<vmem>>, %arg7: memref<1x2xf32, #tpu.memory_space<vmem>>, %arg8: memref<1x128xf32, #tpu.memory_space<vmem>>, %arg9: memref<1x64xf32, #tpu.memory_space<vmem>>, %arg10: memref<1x64xf32, #tpu.memory_space<vmem>>, %arg11: memref<1x64xf32, #tpu.memory_space<vmem>>, %arg12: memref<1x64xf32, #tpu.memory_space<vmem>>, %arg13: memref<64x128xf32, #tpu.memory_space<vmem>>, %arg14: memref<64x64xf32, #tpu.memory_space<vmem>>, %arg15: memref<64x64xf32, #tpu.memory_space<vmem>>, %arg16: memref<1x128xf32, #tpu.memory_space<vmem>>, %arg17: memref<1x64xf32, #tpu.memory_space<vmem>>, %arg18: memref<1x64xf32, #tpu.memory_space<vmem>>, %arg19: memref<1x64xf32, #tpu.memory_space<vmem>>, %arg20: memref<64x128xf32, #tpu.memory_space<vmem>>, %arg21: memref<128x64xf32, #tpu.memory_space<vmem>>, %arg22: memref<1x128xf32, #tpu.memory_space<vmem>>, %arg23: memref<1x64xf32, #tpu.memory_space<vmem>>, %arg24: memref<1x64xf32, #tpu.memory_space<vmem>>, %arg25: memref<1x64xf32, #tpu.memory_space<vmem>>, %arg26: memref<64x128xf32, #tpu.memory_space<vmem>>, %arg27: memref<128x64xf32, #tpu.memory_space<vmem>>, %arg28: memref<1x64xf32, #tpu.memory_space<vmem>>, %arg29: memref<1x192xf32, #tpu.memory_space<vmem>>, %arg30: memref<1x64xf32, #tpu.memory_space<vmem>>, %arg31: memref<1x64xf32, #tpu.memory_space<vmem>>, %arg32: memref<64x64xf32, #tpu.memory_space<vmem>>, %arg33: memref<64x192xf32, #tpu.memory_space<vmem>>, %arg34: memref<1x128xf32, #tpu.memory_space<vmem>>, %arg35: memref<1x64xf32, #tpu.memory_space<vmem>>, %arg36: memref<1x64xf32, #tpu.memory_space<vmem>>, %arg37: memref<1x64xf32, #tpu.memory_space<vmem>>, %arg38: memref<64x128xf32, #tpu.memory_space<vmem>>, %arg39: memref<128x64xf32, #tpu.memory_space<vmem>>, %arg40: memref<1x128xf32, #tpu.memory_space<vmem>>, %arg41: memref<1x64xf32, #tpu.memory_space<vmem>>, %arg42: memref<1x64xf32, #tpu.memory_space<vmem>>, %arg43: memref<1x64xf32, #tpu.memory_space<vmem>>, %arg44: memref<64x128xf32, #tpu.memory_space<vmem>>, %arg45: memref<128x64xf32, #tpu.memory_space<vmem>>, %arg46: memref<1x64xf32, #tpu.memory_space<vmem>>, %arg47: memref<1x192xf32, #tpu.memory_space<vmem>>, %arg48: memref<1x64xf32, #tpu.memory_space<vmem>>, %arg49: memref<1x64xf32, #tpu.memory_space<vmem>>, %arg50: memref<64x64xf32, #tpu.memory_space<vmem>>, %arg51: memref<64x192xf32, #tpu.memory_space<vmem>>, %arg52: memref<1x64xf32, #tpu.memory_space<vmem>>, %arg53: memref<1x64xf32, #tpu.memory_space<vmem>>, %arg54: memref<1x1x1xf32, #tpu.memory_space<vmem>>) attributes {dimension_semantics = [#tpu.dimension_semantics<parallel>], iteration_bounds = array<i64: 2>, scalar_prefetch = 0 : i64, scratch_operands = 0 : i64, tpu.core_type = #tpu.core_type<tc>, window_params = [{transform_indices = @transform_0, window_bounds = array<i64: 1, 16, 64>}, {transform_indices = @transform_1, window_bounds = array<i64: 1, 16, 64>}, {transform_indices = @transform_2, window_bounds = array<i64: 1, 1, 16>}, {pipeline_mode = #tpu.pipeline_mode<synchronous>, transform_indices = @transform_3, window_bounds = array<i64: 1, 64>}, {pipeline_mode = #tpu.pipeline_mode<synchronous>, transform_indices = @transform_4, window_bounds = array<i64: 1, 64>}, {pipeline_mode = #tpu.pipeline_mode<synchronous>, transform_indices = @transform_5, window_bounds = array<i64: 512, 2>}, {pipeline_mode = #tpu.pipeline_mode<synchronous>, transform_indices = @transform_6, window_bounds = array<i64: 1, 2>}, {pipeline_mode = #tpu.pipeline_mode<synchronous>, transform_indices = @transform_7, window_bounds = array<i64: 1, 128>}, {pipeline_mode = #tpu.pipeline_mode<synchronous>, transform_indices = @transform_8, window_bounds = array<i64: 1, 64>}, {pipeline_mode = #tpu.pipeline_mode<synchronous>, transform_indices = @transform_9, window_bounds = array<i64: 1, 64>}, {pipeline_mode = #tpu.pipeline_mode<synchronous>, transform_indices = @transform_10, window_bounds = array<i64: 1, 64>}, {pipeline_mode = #tpu.pipeline_mode<synchronous>, transform_indices = @transform_11, window_bounds = array<i64: 1, 64>}, {pipeline_mode = #tpu.pipeline_mode<synchronous>, transform_indices = @transform_12, window_bounds = array<i64: 64, 128>}, {pipeline_mode = #tpu.pipeline_mode<synchronous>, transform_indices = @transform_13, window_bounds = array<i64: 64, 64>}, {pipeline_mode = #tpu.pipeline_mode<synchronous>, transform_indices = @transform_14, window_bounds = array<i64: 64, 64>}, {pipeline_mode = #tpu.pipeline_mode<synchronous>, transform_indices = @transform_15, window_bounds = array<i64: 1, 128>}, {pipeline_mode = #tpu.pipeline_mode<synchronous>, transform_indices = @transform_16, window_bounds = array<i64: 1, 64>}, {pipeline_mode = #tpu.pipeline_mode<synchronous>, transform_indices = @transform_17, window_bounds = array<i64: 1, 64>}, {pipeline_mode = #tpu.pipeline_mode<synchronous>, transform_indices = @transform_18, window_bounds = array<i64: 1, 64>}, {pipeline_mode = #tpu.pipeline_mode<synchronous>, transform_indices = @transform_19, window_bounds = array<i64: 64, 128>}, {pipeline_mode = #tpu.pipeline_mode<synchronous>, transform_indices = @transform_20, window_bounds = array<i64: 128, 64>}, {pipeline_mode = #tpu.pipeline_mode<synchronous>, transform_indices = @transform_21, window_bounds = array<i64: 1, 128>}, {pipeline_mode = #tpu.pipeline_mode<synchronous>, transform_indices = @transform_22, window_bounds = array<i64: 1, 64>}, {pipeline_mode = #tpu.pipeline_mode<synchronous>, transform_indices = @transform_23, window_bounds = array<i64: 1, 64>}, {pipeline_mode = #tpu.pipeline_mode<synchronous>, transform_indices = @transform_24, window_bounds = array<i64: 1, 64>}, {pipeline_mode = #tpu.pipeline_mode<synchronous>, transform_indices = @transform_25, window_bounds = array<i64: 64, 128>}, {pipeline_mode = #tpu.pipeline_mode<synchronous>, transform_indices = @transform_26, window_bounds = array<i64: 128, 64>}, {pipeline_mode = #tpu.pipeline_mode<synchronous>, transform_indices = @transform_27, window_bounds = array<i64: 1, 64>}, {pipeline_mode = #tpu.pipeline_mode<synchronous>, transform_indices = @transform_28, window_bounds = array<i64: 1, 192>}, {pipeline_mode = #tpu.pipeline_mode<synchronous>, transform_indices = @transform_29, window_bounds = array<i64: 1, 64>}, {pipeline_mode = #tpu.pipeline_mode<synchronous>, transform_indices = @transform_30, window_bounds = array<i64: 1, 64>}, {pipeline_mode = #tpu.pipeline_mode<synchronous>, transform_indices = @transform_31, window_bounds = array<i64: 64, 64>}, {pipeline_mode = #tpu.pipeline_mode<synchronous>, transform_indices = @transform_32, window_bounds = array<i64: 64, 192>}, {pipeline_mode = #tpu.pipeline_mode<synchronous>, transform_indices = @transform_33, window_bounds = array<i64: 1, 128>}, {pipeline_mode = #tpu.pipeline_mode<synchronous>, transform_indices = @transform_34, window_bounds = array<i64: 1, 64>}, {pipeline_mode = #tpu.pipeline_mode<synchronous>, transform_indices = @transform_35, window_bounds = array<i64: 1, 64>}, {pipeline_mode = #tpu.pipeline_mode<synchronous>, transform_indices = @transform_36, window_bounds = array<i64: 1, 64>}, {pipeline_mode = #tpu.pipeline_mode<synchronous>, transform_indices = @transform_37, window_bounds = array<i64: 64, 128>}, {pipeline_mode = #tpu.pipeline_mode<synchronous>, transform_indices = @transform_38, window_bounds = array<i64: 128, 64>}, {pipeline_mode = #tpu.pipeline_mode<synchronous>, transform_indices = @transform_39, window_bounds = array<i64: 1, 128>}, {pipeline_mode = #tpu.pipeline_mode<synchronous>, transform_indices = @transform_40, window_bounds = array<i64: 1, 64>}, {pipeline_mode = #tpu.pipeline_mode<synchronous>, transform_indices = @transform_41, window_bounds = array<i64: 1, 64>}, {pipeline_mode = #tpu.pipeline_mode<synchronous>, transform_indices = @transform_42, window_bounds = array<i64: 1, 64>}, {pipeline_mode = #tpu.pipeline_mode<synchronous>, transform_indices = @transform_43, window_bounds = array<i64: 64, 128>}, {pipeline_mode = #tpu.pipeline_mode<synchronous>, transform_indices = @transform_44, window_bounds = array<i64: 128, 64>}, {pipeline_mode = #tpu.pipeline_mode<synchronous>, transform_indices = @transform_45, window_bounds = array<i64: 1, 64>}, {pipeline_mode = #tpu.pipeline_mode<synchronous>, transform_indices = @transform_46, window_bounds = array<i64: 1, 192>}, {pipeline_mode = #tpu.pipeline_mode<synchronous>, transform_indices = @transform_47, window_bounds = array<i64: 1, 64>}, {pipeline_mode = #tpu.pipeline_mode<synchronous>, transform_indices = @transform_48, window_bounds = array<i64: 1, 64>}, {pipeline_mode = #tpu.pipeline_mode<synchronous>, transform_indices = @transform_49, window_bounds = array<i64: 64, 64>}, {pipeline_mode = #tpu.pipeline_mode<synchronous>, transform_indices = @transform_50, window_bounds = array<i64: 64, 192>}, {pipeline_mode = #tpu.pipeline_mode<synchronous>, transform_indices = @transform_51, window_bounds = array<i64: 1, 64>}, {pipeline_mode = #tpu.pipeline_mode<synchronous>, transform_indices = @transform_52, window_bounds = array<i64: 1, 64>}, {transform_indices = @transform_53, window_bounds = array<i64: 1, 1, 1>}]} {
    %c0 = arith.constant 0 : index
    %c0_0 = arith.constant 0 : index
    %c0_1 = arith.constant 0 : index
    %0 = vector.load %arg1[%c0, %c0_0, %c0_1] : memref<1x16x64xf32, #tpu.memory_space<vmem>>, vector<1x16x64xf32>
    %1 = vector.shape_cast %0 : vector<1x16x64xf32> to vector<16x64xf32>
    %cst = arith.constant dense<0.000000e+00> : vector<16xf32>
    %2 = vector.multi_reduction <add>, %1, %cst [1] : vector<16x64xf32> to vector<16xf32>
    %3 = vector.shape_cast %2 : vector<16xf32> to vector<16x1xf32>
    %cst_2 = arith.constant 6.400000e+01 : f32
    %4 = vector.broadcast %cst_2 : f32 to vector<16x1xf32>
    %5 = arith.divf %3, %4 : vector<16x1xf32>
    %6 = vector.broadcast %5 : vector<16x1xf32> to vector<16x64xf32>
    %7 = arith.subf %1, %6 : vector<16x64xf32>
    %8 = arith.mulf %7, %7 : vector<16x64xf32>
    %cst_3 = arith.constant dense<0.000000e+00> : vector<16xf32>
    %9 = vector.multi_reduction <add>, %8, %cst_3 [1] : vector<16x64xf32> to vector<16xf32>
    %10 = vector.shape_cast %9 : vector<16xf32> to vector<16x1xf32>
    %cst_4 = arith.constant 6.400000e+01 : f32
    %11 = vector.broadcast %cst_4 : f32 to vector<16x1xf32>
    %12 = arith.divf %10, %11 : vector<16x1xf32>
    %13 = vector.broadcast %5 : vector<16x1xf32> to vector<16x64xf32>
    %14 = arith.subf %1, %13 : vector<16x64xf32>
    %cst_5 = arith.constant 9.99999996E-13 : f32
    %15 = vector.broadcast %cst_5 : f32 to vector<16x1xf32>
    %16 = arith.addf %12, %15 : vector<16x1xf32>
    %17 = math.rsqrt %16 : vector<16x1xf32>
    %18 = vector.broadcast %17 : vector<16x1xf32> to vector<16x64xf32>
    %19 = arith.mulf %14, %18 : vector<16x64xf32>
    %c0_6 = arith.constant 0 : index
    %c0_7 = arith.constant 0 : index
    %20 = vector.load %arg52[%c0_6, %c0_7] : memref<1x64xf32, #tpu.memory_space<vmem>>, vector<1x64xf32>
    %21 = vector.broadcast %20 : vector<1x64xf32> to vector<16x64xf32>
    %22 = arith.mulf %19, %21 : vector<16x64xf32>
    %c0_8 = arith.constant 0 : index
    %c0_9 = arith.constant 0 : index
    %23 = vector.load %arg53[%c0_8, %c0_9] : memref<1x64xf32, #tpu.memory_space<vmem>>, vector<1x64xf32>
    %24 = vector.broadcast %23 : vector<1x64xf32> to vector<16x64xf32>
    %25 = arith.addf %22, %24 : vector<16x64xf32>
    %c0_10 = arith.constant 0 : index
    %c0_11 = arith.constant 0 : index
    %c0_12 = arith.constant 0 : index
    %26 = vector.load %arg2[%c0_10, %c0_11, %c0_12] : memref<1x16x64xf32, #tpu.memory_space<vmem>>, vector<1x16x64xf32>
    %27 = vector.shape_cast %26 : vector<1x16x64xf32> to vector<16x64xf32>
    %cst_13 = arith.constant dense<0.000000e+00> : vector<16xf32>
    %28 = vector.multi_reduction <add>, %27, %cst_13 [1] : vector<16x64xf32> to vector<16xf32>
    %29 = vector.shape_cast %28 : vector<16xf32> to vector<16x1xf32>
    %cst_14 = arith.constant 6.400000e+01 : f32
    %30 = vector.broadcast %cst_14 : f32 to vector<16x1xf32>
    %31 = arith.divf %29, %30 : vector<16x1xf32>
    %32 = vector.broadcast %31 : vector<16x1xf32> to vector<16x64xf32>
    %33 = arith.subf %27, %32 : vector<16x64xf32>
    %34 = arith.mulf %33, %33 : vector<16x64xf32>
    %cst_15 = arith.constant dense<0.000000e+00> : vector<16xf32>
    %35 = vector.multi_reduction <add>, %34, %cst_15 [1] : vector<16x64xf32> to vector<16xf32>
    %36 = vector.shape_cast %35 : vector<16xf32> to vector<16x1xf32>
    %cst_16 = arith.constant 6.400000e+01 : f32
    %37 = vector.broadcast %cst_16 : f32 to vector<16x1xf32>
    %38 = arith.divf %36, %37 : vector<16x1xf32>
    %39 = vector.broadcast %31 : vector<16x1xf32> to vector<16x64xf32>
    %40 = arith.subf %27, %39 : vector<16x64xf32>
    %cst_17 = arith.constant 9.99999996E-13 : f32
    %41 = vector.broadcast %cst_17 : f32 to vector<16x1xf32>
    %42 = arith.addf %38, %41 : vector<16x1xf32>
    %43 = math.rsqrt %42 : vector<16x1xf32>
    %44 = vector.broadcast %43 : vector<16x1xf32> to vector<16x64xf32>
    %45 = arith.mulf %40, %44 : vector<16x64xf32>
    %c0_18 = arith.constant 0 : index
    %c0_19 = arith.constant 0 : index
    %46 = vector.load %arg4[%c0_18, %c0_19] : memref<1x64xf32, #tpu.memory_space<vmem>>, vector<1x64xf32>
    %47 = vector.broadcast %46 : vector<1x64xf32> to vector<16x64xf32>
    %48 = arith.mulf %45, %47 : vector<16x64xf32>
    %c0_20 = arith.constant 0 : index
    %c0_21 = arith.constant 0 : index
    %49 = vector.load %arg5[%c0_20, %c0_21] : memref<1x64xf32, #tpu.memory_space<vmem>>, vector<1x64xf32>
    %50 = vector.broadcast %49 : vector<1x64xf32> to vector<16x64xf32>
    %51 = arith.addf %48, %50 : vector<16x64xf32>
    %c0_22 = arith.constant 0 : index
    %c0_23 = arith.constant 0 : index
    %c0_24 = arith.constant 0 : index
    %52 = vector.load %arg3[%c0_22, %c0_23, %c0_24] : memref<1x1x16xf32, #tpu.memory_space<vmem>>, vector<1x1x16xf32>
    %53 = vector.shape_cast %52 : vector<1x1x16xf32> to vector<1x16xf32>
    %c0_25 = arith.constant 0 : index
    %c0_26 = arith.constant 0 : index
    %54 = vector.load %arg33[%c0_25, %c0_26] : memref<64x192xf32, #tpu.memory_space<vmem>>, vector<64x192xf32>
    %cst_27 = arith.constant dense<0.000000e+00> : vector<16x192xf32>
    %55 = tpu.matmul %51, %54, %cst_27 {dimension_numbers = #tpu.dot_dimension_numbers<[1], [0], [0], [1], [0, 0, 1, 1], [], []>} : vector<16x64xf32>, vector<64x192xf32>, vector<16x192xf32> -> vector<16x192xf32>
    %c0_28 = arith.constant 0 : index
    %c0_29 = arith.constant 0 : index
    %56 = vector.load %arg29[%c0_28, %c0_29] : memref<1x192xf32, #tpu.memory_space<vmem>>, vector<1x192xf32>
    %57 = vector.broadcast %56 : vector<1x192xf32> to vector<16x192xf32>
    %58 = arith.addf %55, %57 : vector<16x192xf32>
    %59 = vector.extract_strided_slice %58 {offsets = [0, 0], sizes = [16, 64], strides = [1, 1]} : vector<16x192xf32> to vector<16x64xf32>
    %60 = vector.extract_strided_slice %58 {offsets = [0, 64], sizes = [16, 64], strides = [1, 1]} : vector<16x192xf32> to vector<16x64xf32>
    %61 = vector.extract_strided_slice %58 {offsets = [0, 128], sizes = [16, 64], strides = [1, 1]} : vector<16x192xf32> to vector<16x64xf32>
    %62 = vector.extract_strided_slice %59 {offsets = [0, 0], sizes = [16, 16], strides = [1, 1]} : vector<16x64xf32> to vector<16x16xf32>
    %63 = vector.extract_strided_slice %60 {offsets = [0, 0], sizes = [16, 16], strides = [1, 1]} : vector<16x64xf32> to vector<16x16xf32>
    %cst_30 = arith.constant dense<0.000000e+00> : vector<16x16xf32>
    %64 = tpu.matmul %62, %63, %cst_30 {dimension_numbers = #tpu.dot_dimension_numbers<[1], [1], [0], [0], [0, 0, 1, 0], [], []>} : vector<16x16xf32>, vector<16x16xf32>, vector<16x16xf32> -> vector<16x16xf32>
    %cst_31 = arith.constant 2.500000e-01 : f32
    %65 = vector.broadcast %cst_31 : f32 to vector<16x16xf32>
    %66 = arith.mulf %64, %65 : vector<16x16xf32>
    %67 = vector.broadcast %53 : vector<1x16xf32> to vector<16x16xf32>
    %68 = arith.addf %66, %67 : vector<16x16xf32>
    %cst_32 = arith.constant dense<0xFF800000> : vector<16xf32>
    %69 = vector.multi_reduction <maximumf>, %68, %cst_32 [1] : vector<16x16xf32> to vector<16xf32>
    %70 = vector.shape_cast %69 : vector<16xf32> to vector<16x1xf32>
    %71 = vector.broadcast %70 : vector<16x1xf32> to vector<16x16xf32>
    %72 = arith.subf %68, %71 : vector<16x16xf32>
    %73 = math.exp %72 : vector<16x16xf32>
    %cst_33 = arith.constant dense<0.000000e+00> : vector<16xf32>
    %74 = vector.multi_reduction <add>, %73, %cst_33 [1] : vector<16x16xf32> to vector<16xf32>
    %75 = vector.shape_cast %74 : vector<16xf32> to vector<16x1xf32>
    %76 = tpu.reciprocal %75 {approx = true} : vector<16x1xf32> -> vector<16x1xf32>
    %77 = vector.broadcast %76 : vector<16x1xf32> to vector<16x16xf32>
    %78 = arith.mulf %73, %77 : vector<16x16xf32>
    %79 = vector.extract_strided_slice %61 {offsets = [0, 0], sizes = [16, 16], strides = [1, 1]} : vector<16x64xf32> to vector<16x16xf32>
    %cst_34 = arith.constant dense<0.000000e+00> : vector<16x16xf32>
    %80 = tpu.matmul %78, %79, %cst_34 {dimension_numbers = #tpu.dot_dimension_numbers<[1], [0], [0], [1], [0, 0, 1, 1], [], []>} : vector<16x16xf32>, vector<16x16xf32>, vector<16x16xf32> -> vector<16x16xf32>
    %81 = vector.extract_strided_slice %59 {offsets = [0, 16], sizes = [16, 16], strides = [1, 1]} : vector<16x64xf32> to vector<16x16xf32>
    %82 = vector.extract_strided_slice %60 {offsets = [0, 16], sizes = [16, 16], strides = [1, 1]} : vector<16x64xf32> to vector<16x16xf32>
    %cst_35 = arith.constant dense<0.000000e+00> : vector<16x16xf32>
    %83 = tpu.matmul %81, %82, %cst_35 {dimension_numbers = #tpu.dot_dimension_numbers<[1], [1], [0], [0], [0, 0, 1, 0], [], []>} : vector<16x16xf32>, vector<16x16xf32>, vector<16x16xf32> -> vector<16x16xf32>
    %cst_36 = arith.constant 2.500000e-01 : f32
    %84 = vector.broadcast %cst_36 : f32 to vector<16x16xf32>
    %85 = arith.mulf %83, %84 : vector<16x16xf32>
    %86 = vector.broadcast %53 : vector<1x16xf32> to vector<16x16xf32>
    %87 = arith.addf %85, %86 : vector<16x16xf32>
    %cst_37 = arith.constant dense<0xFF800000> : vector<16xf32>
    %88 = vector.multi_reduction <maximumf>, %87, %cst_37 [1] : vector<16x16xf32> to vector<16xf32>
    %89 = vector.shape_cast %88 : vector<16xf32> to vector<16x1xf32>
    %90 = vector.broadcast %89 : vector<16x1xf32> to vector<16x16xf32>
    %91 = arith.subf %87, %90 : vector<16x16xf32>
    %92 = math.exp %91 : vector<16x16xf32>
    %cst_38 = arith.constant dense<0.000000e+00> : vector<16xf32>
    %93 = vector.multi_reduction <add>, %92, %cst_38 [1] : vector<16x16xf32> to vector<16xf32>
    %94 = vector.shape_cast %93 : vector<16xf32> to vector<16x1xf32>
    %95 = tpu.reciprocal %94 {approx = true} : vector<16x1xf32> -> vector<16x1xf32>
    %96 = vector.broadcast %95 : vector<16x1xf32> to vector<16x16xf32>
    %97 = arith.mulf %92, %96 : vector<16x16xf32>
    %98 = vector.extract_strided_slice %61 {offsets = [0, 16], sizes = [16, 16], strides = [1, 1]} : vector<16x64xf32> to vector<16x16xf32>
    %cst_39 = arith.constant dense<0.000000e+00> : vector<16x16xf32>
    %99 = tpu.matmul %97, %98, %cst_39 {dimension_numbers = #tpu.dot_dimension_numbers<[1], [0], [0], [1], [0, 0, 1, 1], [], []>} : vector<16x16xf32>, vector<16x16xf32>, vector<16x16xf32> -> vector<16x16xf32>
    %100 = vector.extract_strided_slice %59 {offsets = [0, 32], sizes = [16, 16], strides = [1, 1]} : vector<16x64xf32> to vector<16x16xf32>
    %101 = vector.extract_strided_slice %60 {offsets = [0, 32], sizes = [16, 16], strides = [1, 1]} : vector<16x64xf32> to vector<16x16xf32>
    %cst_40 = arith.constant dense<0.000000e+00> : vector<16x16xf32>
    %102 = tpu.matmul %100, %101, %cst_40 {dimension_numbers = #tpu.dot_dimension_numbers<[1], [1], [0], [0], [0, 0, 1, 0], [], []>} : vector<16x16xf32>, vector<16x16xf32>, vector<16x16xf32> -> vector<16x16xf32>
    %cst_41 = arith.constant 2.500000e-01 : f32
    %103 = vector.broadcast %cst_41 : f32 to vector<16x16xf32>
    %104 = arith.mulf %102, %103 : vector<16x16xf32>
    %105 = vector.broadcast %53 : vector<1x16xf32> to vector<16x16xf32>
    %106 = arith.addf %104, %105 : vector<16x16xf32>
    %cst_42 = arith.constant dense<0xFF800000> : vector<16xf32>
    %107 = vector.multi_reduction <maximumf>, %106, %cst_42 [1] : vector<16x16xf32> to vector<16xf32>
    %108 = vector.shape_cast %107 : vector<16xf32> to vector<16x1xf32>
    %109 = vector.broadcast %108 : vector<16x1xf32> to vector<16x16xf32>
    %110 = arith.subf %106, %109 : vector<16x16xf32>
    %111 = math.exp %110 : vector<16x16xf32>
    %cst_43 = arith.constant dense<0.000000e+00> : vector<16xf32>
    %112 = vector.multi_reduction <add>, %111, %cst_43 [1] : vector<16x16xf32> to vector<16xf32>
    %113 = vector.shape_cast %112 : vector<16xf32> to vector<16x1xf32>
    %114 = tpu.reciprocal %113 {approx = true} : vector<16x1xf32> -> vector<16x1xf32>
    %115 = vector.broadcast %114 : vector<16x1xf32> to vector<16x16xf32>
    %116 = arith.mulf %111, %115 : vector<16x16xf32>
    %117 = vector.extract_strided_slice %61 {offsets = [0, 32], sizes = [16, 16], strides = [1, 1]} : vector<16x64xf32> to vector<16x16xf32>
    %cst_44 = arith.constant dense<0.000000e+00> : vector<16x16xf32>
    %118 = tpu.matmul %116, %117, %cst_44 {dimension_numbers = #tpu.dot_dimension_numbers<[1], [0], [0], [1], [0, 0, 1, 1], [], []>} : vector<16x16xf32>, vector<16x16xf32>, vector<16x16xf32> -> vector<16x16xf32>
    %119 = vector.extract_strided_slice %59 {offsets = [0, 48], sizes = [16, 16], strides = [1, 1]} : vector<16x64xf32> to vector<16x16xf32>
    %120 = vector.extract_strided_slice %60 {offsets = [0, 48], sizes = [16, 16], strides = [1, 1]} : vector<16x64xf32> to vector<16x16xf32>
    %cst_45 = arith.constant dense<0.000000e+00> : vector<16x16xf32>
    %121 = tpu.matmul %119, %120, %cst_45 {dimension_numbers = #tpu.dot_dimension_numbers<[1], [1], [0], [0], [0, 0, 1, 0], [], []>} : vector<16x16xf32>, vector<16x16xf32>, vector<16x16xf32> -> vector<16x16xf32>
    %cst_46 = arith.constant 2.500000e-01 : f32
    %122 = vector.broadcast %cst_46 : f32 to vector<16x16xf32>
    %123 = arith.mulf %121, %122 : vector<16x16xf32>
    %124 = vector.broadcast %53 : vector<1x16xf32> to vector<16x16xf32>
    %125 = arith.addf %123, %124 : vector<16x16xf32>
    %cst_47 = arith.constant dense<0xFF800000> : vector<16xf32>
    %126 = vector.multi_reduction <maximumf>, %125, %cst_47 [1] : vector<16x16xf32> to vector<16xf32>
    %127 = vector.shape_cast %126 : vector<16xf32> to vector<16x1xf32>
    %128 = vector.broadcast %127 : vector<16x1xf32> to vector<16x16xf32>
    %129 = arith.subf %125, %128 : vector<16x16xf32>
    %130 = math.exp %129 : vector<16x16xf32>
    %cst_48 = arith.constant dense<0.000000e+00> : vector<16xf32>
    %131 = vector.multi_reduction <add>, %130, %cst_48 [1] : vector<16x16xf32> to vector<16xf32>
    %132 = vector.shape_cast %131 : vector<16xf32> to vector<16x1xf32>
    %133 = tpu.reciprocal %132 {approx = true} : vector<16x1xf32> -> vector<16x1xf32>
    %134 = vector.broadcast %133 : vector<16x1xf32> to vector<16x16xf32>
    %135 = arith.mulf %130, %134 : vector<16x16xf32>
    %136 = vector.extract_strided_slice %61 {offsets = [0, 48], sizes = [16, 16], strides = [1, 1]} : vector<16x64xf32> to vector<16x16xf32>
    %cst_49 = arith.constant dense<0.000000e+00> : vector<16x16xf32>
    %137 = tpu.matmul %135, %136, %cst_49 {dimension_numbers = #tpu.dot_dimension_numbers<[1], [0], [0], [1], [0, 0, 1, 1], [], []>} : vector<16x16xf32>, vector<16x16xf32>, vector<16x16xf32> -> vector<16x16xf32>
    %138 = tpu.concatenate %80, %99, %118, %137 in 1 : vector<16x16xf32>, vector<16x16xf32>, vector<16x16xf32>, vector<16x16xf32> -> vector<16x64xf32>
    %c0_50 = arith.constant 0 : index
    %c0_51 = arith.constant 0 : index
    %139 = vector.load %arg32[%c0_50, %c0_51] : memref<64x64xf32, #tpu.memory_space<vmem>>, vector<64x64xf32>
    %cst_52 = arith.constant dense<0.000000e+00> : vector<16x64xf32>
    %140 = tpu.matmul %138, %139, %cst_52 {dimension_numbers = #tpu.dot_dimension_numbers<[1], [0], [0], [1], [0, 0, 1, 1], [], []>} : vector<16x64xf32>, vector<64x64xf32>, vector<16x64xf32> -> vector<16x64xf32>
    %c0_53 = arith.constant 0 : index
    %c0_54 = arith.constant 0 : index
    %141 = vector.load %arg28[%c0_53, %c0_54] : memref<1x64xf32, #tpu.memory_space<vmem>>, vector<1x64xf32>
    %142 = vector.broadcast %141 : vector<1x64xf32> to vector<16x64xf32>
    %143 = arith.addf %140, %142 : vector<16x64xf32>
    %144 = arith.addf %143, %51 : vector<16x64xf32>
    %cst_55 = arith.constant dense<0.000000e+00> : vector<16xf32>
    %145 = vector.multi_reduction <add>, %144, %cst_55 [1] : vector<16x64xf32> to vector<16xf32>
    %146 = vector.shape_cast %145 : vector<16xf32> to vector<16x1xf32>
    %cst_56 = arith.constant 6.400000e+01 : f32
    %147 = vector.broadcast %cst_56 : f32 to vector<16x1xf32>
    %148 = arith.divf %146, %147 : vector<16x1xf32>
    %149 = vector.broadcast %148 : vector<16x1xf32> to vector<16x64xf32>
    %150 = arith.subf %144, %149 : vector<16x64xf32>
    %151 = arith.mulf %150, %150 : vector<16x64xf32>
    %cst_57 = arith.constant dense<0.000000e+00> : vector<16xf32>
    %152 = vector.multi_reduction <add>, %151, %cst_57 [1] : vector<16x64xf32> to vector<16xf32>
    %153 = vector.shape_cast %152 : vector<16xf32> to vector<16x1xf32>
    %cst_58 = arith.constant 6.400000e+01 : f32
    %154 = vector.broadcast %cst_58 : f32 to vector<16x1xf32>
    %155 = arith.divf %153, %154 : vector<16x1xf32>
    %156 = vector.broadcast %148 : vector<16x1xf32> to vector<16x64xf32>
    %157 = arith.subf %144, %156 : vector<16x64xf32>
    %cst_59 = arith.constant 9.99999996E-13 : f32
    %158 = vector.broadcast %cst_59 : f32 to vector<16x1xf32>
    %159 = arith.addf %155, %158 : vector<16x1xf32>
    %160 = math.rsqrt %159 : vector<16x1xf32>
    %161 = vector.broadcast %160 : vector<16x1xf32> to vector<16x64xf32>
    %162 = arith.mulf %157, %161 : vector<16x64xf32>
    %c0_60 = arith.constant 0 : index
    %c0_61 = arith.constant 0 : index
    %163 = vector.load %arg31[%c0_60, %c0_61] : memref<1x64xf32, #tpu.memory_space<vmem>>, vector<1x64xf32>
    %164 = vector.broadcast %163 : vector<1x64xf32> to vector<16x64xf32>
    %165 = arith.mulf %162, %164 : vector<16x64xf32>
    %c0_62 = arith.constant 0 : index
    %c0_63 = arith.constant 0 : index
    %166 = vector.load %arg30[%c0_62, %c0_63] : memref<1x64xf32, #tpu.memory_space<vmem>>, vector<1x64xf32>
    %167 = vector.broadcast %166 : vector<1x64xf32> to vector<16x64xf32>
    %168 = arith.addf %165, %167 : vector<16x64xf32>
    %169 = vector.extract_strided_slice %168 {offsets = [0, 0], sizes = [8, 64], strides = [1, 1]} : vector<16x64xf32> to vector<8x64xf32>
    %170 = vector.extract_strided_slice %168 {offsets = [8, 0], sizes = [8, 64], strides = [1, 1]} : vector<16x64xf32> to vector<8x64xf32>
    %c0_64 = arith.constant 0 : index
    %c0_65 = arith.constant 0 : index
    %171 = vector.load %arg15[%c0_64, %c0_65] : memref<64x64xf32, #tpu.memory_space<vmem>>, vector<64x64xf32>
    %cst_66 = arith.constant dense<0.000000e+00> : vector<8x64xf32>
    %172 = tpu.matmul %169, %171, %cst_66 {dimension_numbers = #tpu.dot_dimension_numbers<[1], [0], [0], [1], [0, 0, 1, 1], [], []>} : vector<8x64xf32>, vector<64x64xf32>, vector<8x64xf32> -> vector<8x64xf32>
    %c0_67 = arith.constant 0 : index
    %c0_68 = arith.constant 0 : index
    %173 = vector.load %arg10[%c0_67, %c0_68] : memref<1x64xf32, #tpu.memory_space<vmem>>, vector<1x64xf32>
    %174 = vector.broadcast %173 : vector<1x64xf32> to vector<8x64xf32>
    %175 = arith.addf %172, %174 : vector<8x64xf32>
    %c0_69 = arith.constant 0 : index
    %c0_70 = arith.constant 0 : index
    %176 = vector.load %arg13[%c0_69, %c0_70] : memref<64x128xf32, #tpu.memory_space<vmem>>, vector<64x128xf32>
    %cst_71 = arith.constant dense<0.000000e+00> : vector<16x128xf32>
    %177 = tpu.matmul %25, %176, %cst_71 {dimension_numbers = #tpu.dot_dimension_numbers<[1], [0], [0], [1], [0, 0, 1, 1], [], []>} : vector<16x64xf32>, vector<64x128xf32>, vector<16x128xf32> -> vector<16x128xf32>
    %c0_72 = arith.constant 0 : index
    %c0_73 = arith.constant 0 : index
    %178 = vector.load %arg8[%c0_72, %c0_73] : memref<1x128xf32, #tpu.memory_space<vmem>>, vector<1x128xf32>
    %179 = vector.broadcast %178 : vector<1x128xf32> to vector<16x128xf32>
    %180 = arith.addf %177, %179 : vector<16x128xf32>
    %181 = vector.extract_strided_slice %180 {offsets = [0, 0], sizes = [16, 64], strides = [1, 1]} : vector<16x128xf32> to vector<16x64xf32>
    %182 = vector.extract_strided_slice %180 {offsets = [0, 64], sizes = [16, 64], strides = [1, 1]} : vector<16x128xf32> to vector<16x64xf32>
    %183 = vector.extract_strided_slice %175 {offsets = [0, 0], sizes = [8, 16], strides = [1, 1]} : vector<8x64xf32> to vector<8x16xf32>
    %184 = vector.extract_strided_slice %181 {offsets = [0, 0], sizes = [16, 16], strides = [1, 1]} : vector<16x64xf32> to vector<16x16xf32>
    %cst_74 = arith.constant dense<0.000000e+00> : vector<8x16xf32>
    %185 = tpu.matmul %183, %184, %cst_74 {dimension_numbers = #tpu.dot_dimension_numbers<[1], [1], [0], [0], [0, 0, 1, 0], [], []>} : vector<8x16xf32>, vector<16x16xf32>, vector<8x16xf32> -> vector<8x16xf32>
    %cst_75 = arith.constant 2.500000e-01 : f32
    %186 = vector.broadcast %cst_75 : f32 to vector<8x16xf32>
    %187 = arith.mulf %185, %186 : vector<8x16xf32>
    %cst_76 = arith.constant dense<0xFF800000> : vector<8xf32>
    %188 = vector.multi_reduction <maximumf>, %187, %cst_76 [1] : vector<8x16xf32> to vector<8xf32>
    %189 = vector.shape_cast %188 : vector<8xf32> to vector<8x1xf32>
    %190 = vector.broadcast %189 : vector<8x1xf32> to vector<8x16xf32>
    %191 = arith.subf %187, %190 : vector<8x16xf32>
    %192 = math.exp %191 : vector<8x16xf32>
    %cst_77 = arith.constant dense<0.000000e+00> : vector<8xf32>
    %193 = vector.multi_reduction <add>, %192, %cst_77 [1] : vector<8x16xf32> to vector<8xf32>
    %194 = vector.shape_cast %193 : vector<8xf32> to vector<8x1xf32>
    %195 = tpu.reciprocal %194 {approx = true} : vector<8x1xf32> -> vector<8x1xf32>
    %196 = vector.broadcast %195 : vector<8x1xf32> to vector<8x16xf32>
    %197 = arith.mulf %192, %196 : vector<8x16xf32>
    %198 = vector.extract_strided_slice %182 {offsets = [0, 0], sizes = [16, 16], strides = [1, 1]} : vector<16x64xf32> to vector<16x16xf32>
    %cst_78 = arith.constant dense<0.000000e+00> : vector<8x16xf32>
    %199 = tpu.matmul %197, %198, %cst_78 {dimension_numbers = #tpu.dot_dimension_numbers<[1], [0], [0], [1], [0, 0, 1, 1], [], []>} : vector<8x16xf32>, vector<16x16xf32>, vector<8x16xf32> -> vector<8x16xf32>
    %200 = vector.extract_strided_slice %175 {offsets = [0, 16], sizes = [8, 16], strides = [1, 1]} : vector<8x64xf32> to vector<8x16xf32>
    %201 = vector.extract_strided_slice %181 {offsets = [0, 16], sizes = [16, 16], strides = [1, 1]} : vector<16x64xf32> to vector<16x16xf32>
    %cst_79 = arith.constant dense<0.000000e+00> : vector<8x16xf32>
    %202 = tpu.matmul %200, %201, %cst_79 {dimension_numbers = #tpu.dot_dimension_numbers<[1], [1], [0], [0], [0, 0, 1, 0], [], []>} : vector<8x16xf32>, vector<16x16xf32>, vector<8x16xf32> -> vector<8x16xf32>
    %cst_80 = arith.constant 2.500000e-01 : f32
    %203 = vector.broadcast %cst_80 : f32 to vector<8x16xf32>
    %204 = arith.mulf %202, %203 : vector<8x16xf32>
    %cst_81 = arith.constant dense<0xFF800000> : vector<8xf32>
    %205 = vector.multi_reduction <maximumf>, %204, %cst_81 [1] : vector<8x16xf32> to vector<8xf32>
    %206 = vector.shape_cast %205 : vector<8xf32> to vector<8x1xf32>
    %207 = vector.broadcast %206 : vector<8x1xf32> to vector<8x16xf32>
    %208 = arith.subf %204, %207 : vector<8x16xf32>
    %209 = math.exp %208 : vector<8x16xf32>
    %cst_82 = arith.constant dense<0.000000e+00> : vector<8xf32>
    %210 = vector.multi_reduction <add>, %209, %cst_82 [1] : vector<8x16xf32> to vector<8xf32>
    %211 = vector.shape_cast %210 : vector<8xf32> to vector<8x1xf32>
    %212 = tpu.reciprocal %211 {approx = true} : vector<8x1xf32> -> vector<8x1xf32>
    %213 = vector.broadcast %212 : vector<8x1xf32> to vector<8x16xf32>
    %214 = arith.mulf %209, %213 : vector<8x16xf32>
    %215 = vector.extract_strided_slice %182 {offsets = [0, 16], sizes = [16, 16], strides = [1, 1]} : vector<16x64xf32> to vector<16x16xf32>
    %cst_83 = arith.constant dense<0.000000e+00> : vector<8x16xf32>
    %216 = tpu.matmul %214, %215, %cst_83 {dimension_numbers = #tpu.dot_dimension_numbers<[1], [0], [0], [1], [0, 0, 1, 1], [], []>} : vector<8x16xf32>, vector<16x16xf32>, vector<8x16xf32> -> vector<8x16xf32>
    %217 = vector.extract_strided_slice %175 {offsets = [0, 32], sizes = [8, 16], strides = [1, 1]} : vector<8x64xf32> to vector<8x16xf32>
    %218 = vector.extract_strided_slice %181 {offsets = [0, 32], sizes = [16, 16], strides = [1, 1]} : vector<16x64xf32> to vector<16x16xf32>
    %cst_84 = arith.constant dense<0.000000e+00> : vector<8x16xf32>
    %219 = tpu.matmul %217, %218, %cst_84 {dimension_numbers = #tpu.dot_dimension_numbers<[1], [1], [0], [0], [0, 0, 1, 0], [], []>} : vector<8x16xf32>, vector<16x16xf32>, vector<8x16xf32> -> vector<8x16xf32>
    %cst_85 = arith.constant 2.500000e-01 : f32
    %220 = vector.broadcast %cst_85 : f32 to vector<8x16xf32>
    %221 = arith.mulf %219, %220 : vector<8x16xf32>
    %cst_86 = arith.constant dense<0xFF800000> : vector<8xf32>
    %222 = vector.multi_reduction <maximumf>, %221, %cst_86 [1] : vector<8x16xf32> to vector<8xf32>
    %223 = vector.shape_cast %222 : vector<8xf32> to vector<8x1xf32>
    %224 = vector.broadcast %223 : vector<8x1xf32> to vector<8x16xf32>
    %225 = arith.subf %221, %224 : vector<8x16xf32>
    %226 = math.exp %225 : vector<8x16xf32>
    %cst_87 = arith.constant dense<0.000000e+00> : vector<8xf32>
    %227 = vector.multi_reduction <add>, %226, %cst_87 [1] : vector<8x16xf32> to vector<8xf32>
    %228 = vector.shape_cast %227 : vector<8xf32> to vector<8x1xf32>
    %229 = tpu.reciprocal %228 {approx = true} : vector<8x1xf32> -> vector<8x1xf32>
    %230 = vector.broadcast %229 : vector<8x1xf32> to vector<8x16xf32>
    %231 = arith.mulf %226, %230 : vector<8x16xf32>
    %232 = vector.extract_strided_slice %182 {offsets = [0, 32], sizes = [16, 16], strides = [1, 1]} : vector<16x64xf32> to vector<16x16xf32>
    %cst_88 = arith.constant dense<0.000000e+00> : vector<8x16xf32>
    %233 = tpu.matmul %231, %232, %cst_88 {dimension_numbers = #tpu.dot_dimension_numbers<[1], [0], [0], [1], [0, 0, 1, 1], [], []>} : vector<8x16xf32>, vector<16x16xf32>, vector<8x16xf32> -> vector<8x16xf32>
    %234 = vector.extract_strided_slice %175 {offsets = [0, 48], sizes = [8, 16], strides = [1, 1]} : vector<8x64xf32> to vector<8x16xf32>
    %235 = vector.extract_strided_slice %181 {offsets = [0, 48], sizes = [16, 16], strides = [1, 1]} : vector<16x64xf32> to vector<16x16xf32>
    %cst_89 = arith.constant dense<0.000000e+00> : vector<8x16xf32>
    %236 = tpu.matmul %234, %235, %cst_89 {dimension_numbers = #tpu.dot_dimension_numbers<[1], [1], [0], [0], [0, 0, 1, 0], [], []>} : vector<8x16xf32>, vector<16x16xf32>, vector<8x16xf32> -> vector<8x16xf32>
    %cst_90 = arith.constant 2.500000e-01 : f32
    %237 = vector.broadcast %cst_90 : f32 to vector<8x16xf32>
    %238 = arith.mulf %236, %237 : vector<8x16xf32>
    %cst_91 = arith.constant dense<0xFF800000> : vector<8xf32>
    %239 = vector.multi_reduction <maximumf>, %238, %cst_91 [1] : vector<8x16xf32> to vector<8xf32>
    %240 = vector.shape_cast %239 : vector<8xf32> to vector<8x1xf32>
    %241 = vector.broadcast %240 : vector<8x1xf32> to vector<8x16xf32>
    %242 = arith.subf %238, %241 : vector<8x16xf32>
    %243 = math.exp %242 : vector<8x16xf32>
    %cst_92 = arith.constant dense<0.000000e+00> : vector<8xf32>
    %244 = vector.multi_reduction <add>, %243, %cst_92 [1] : vector<8x16xf32> to vector<8xf32>
    %245 = vector.shape_cast %244 : vector<8xf32> to vector<8x1xf32>
    %246 = tpu.reciprocal %245 {approx = true} : vector<8x1xf32> -> vector<8x1xf32>
    %247 = vector.broadcast %246 : vector<8x1xf32> to vector<8x16xf32>
    %248 = arith.mulf %243, %247 : vector<8x16xf32>
    %249 = vector.extract_strided_slice %182 {offsets = [0, 48], sizes = [16, 16], strides = [1, 1]} : vector<16x64xf32> to vector<16x16xf32>
    %cst_93 = arith.constant dense<0.000000e+00> : vector<8x16xf32>
    %250 = tpu.matmul %248, %249, %cst_93 {dimension_numbers = #tpu.dot_dimension_numbers<[1], [0], [0], [1], [0, 0, 1, 1], [], []>} : vector<8x16xf32>, vector<16x16xf32>, vector<8x16xf32> -> vector<8x16xf32>
    %251 = tpu.concatenate %199, %216, %233, %250 in 1 : vector<8x16xf32>, vector<8x16xf32>, vector<8x16xf32>, vector<8x16xf32> -> vector<8x64xf32>
    %c0_94 = arith.constant 0 : index
    %c0_95 = arith.constant 0 : index
    %252 = vector.load %arg14[%c0_94, %c0_95] : memref<64x64xf32, #tpu.memory_space<vmem>>, vector<64x64xf32>
    %cst_96 = arith.constant dense<0.000000e+00> : vector<8x64xf32>
    %253 = tpu.matmul %251, %252, %cst_96 {dimension_numbers = #tpu.dot_dimension_numbers<[1], [0], [0], [1], [0, 0, 1, 1], [], []>} : vector<8x64xf32>, vector<64x64xf32>, vector<8x64xf32> -> vector<8x64xf32>
    %c0_97 = arith.constant 0 : index
    %c0_98 = arith.constant 0 : index
    %254 = vector.load %arg9[%c0_97, %c0_98] : memref<1x64xf32, #tpu.memory_space<vmem>>, vector<1x64xf32>
    %255 = vector.broadcast %254 : vector<1x64xf32> to vector<8x64xf32>
    %256 = arith.addf %253, %255 : vector<8x64xf32>
    %257 = arith.addf %256, %169 : vector<8x64xf32>
    %cst_99 = arith.constant dense<0.000000e+00> : vector<8xf32>
    %258 = vector.multi_reduction <add>, %257, %cst_99 [1] : vector<8x64xf32> to vector<8xf32>
    %259 = vector.shape_cast %258 : vector<8xf32> to vector<8x1xf32>
    %cst_100 = arith.constant 6.400000e+01 : f32
    %260 = vector.broadcast %cst_100 : f32 to vector<8x1xf32>
    %261 = arith.divf %259, %260 : vector<8x1xf32>
    %262 = vector.broadcast %261 : vector<8x1xf32> to vector<8x64xf32>
    %263 = arith.subf %257, %262 : vector<8x64xf32>
    %264 = arith.mulf %263, %263 : vector<8x64xf32>
    %cst_101 = arith.constant dense<0.000000e+00> : vector<8xf32>
    %265 = vector.multi_reduction <add>, %264, %cst_101 [1] : vector<8x64xf32> to vector<8xf32>
    %266 = vector.shape_cast %265 : vector<8xf32> to vector<8x1xf32>
    %cst_102 = arith.constant 6.400000e+01 : f32
    %267 = vector.broadcast %cst_102 : f32 to vector<8x1xf32>
    %268 = arith.divf %266, %267 : vector<8x1xf32>
    %269 = vector.broadcast %261 : vector<8x1xf32> to vector<8x64xf32>
    %270 = arith.subf %257, %269 : vector<8x64xf32>
    %cst_103 = arith.constant 9.99999996E-13 : f32
    %271 = vector.broadcast %cst_103 : f32 to vector<8x1xf32>
    %272 = arith.addf %268, %271 : vector<8x1xf32>
    %273 = math.rsqrt %272 : vector<8x1xf32>
    %274 = vector.broadcast %273 : vector<8x1xf32> to vector<8x64xf32>
    %275 = arith.mulf %270, %274 : vector<8x64xf32>
    %c0_104 = arith.constant 0 : index
    %c0_105 = arith.constant 0 : index
    %276 = vector.load %arg12[%c0_104, %c0_105] : memref<1x64xf32, #tpu.memory_space<vmem>>, vector<1x64xf32>
    %277 = vector.broadcast %276 : vector<1x64xf32> to vector<8x64xf32>
    %278 = arith.mulf %275, %277 : vector<8x64xf32>
    %c0_106 = arith.constant 0 : index
    %c0_107 = arith.constant 0 : index
    %279 = vector.load %arg11[%c0_106, %c0_107] : memref<1x64xf32, #tpu.memory_space<vmem>>, vector<1x64xf32>
    %280 = vector.broadcast %279 : vector<1x64xf32> to vector<8x64xf32>
    %281 = arith.addf %278, %280 : vector<8x64xf32>
    %c0_108 = arith.constant 0 : index
    %c0_109 = arith.constant 0 : index
    %282 = vector.load %arg20[%c0_108, %c0_109] : memref<64x128xf32, #tpu.memory_space<vmem>>, vector<64x128xf32>
    %cst_110 = arith.constant dense<0.000000e+00> : vector<8x128xf32>
    %283 = tpu.matmul %281, %282, %cst_110 {dimension_numbers = #tpu.dot_dimension_numbers<[1], [0], [0], [1], [0, 0, 1, 1], [], []>} : vector<8x64xf32>, vector<64x128xf32>, vector<8x128xf32> -> vector<8x128xf32>
    %c0_111 = arith.constant 0 : index
    %c0_112 = arith.constant 0 : index
    %284 = vector.load %arg16[%c0_111, %c0_112] : memref<1x128xf32, #tpu.memory_space<vmem>>, vector<1x128xf32>
    %285 = vector.broadcast %284 : vector<1x128xf32> to vector<8x128xf32>
    %286 = arith.addf %283, %285 : vector<8x128xf32>
    %287 = arith.mulf %286, %286 : vector<8x128xf32>
    %288 = arith.mulf %286, %287 : vector<8x128xf32>
    %cst_113 = arith.constant 4.471500e-02 : f32
    %289 = vector.broadcast %cst_113 : f32 to vector<8x128xf32>
    %290 = arith.mulf %289, %288 : vector<8x128xf32>
    %291 = arith.addf %286, %290 : vector<8x128xf32>
    %cst_114 = arith.constant 0.797884583 : f32
    %292 = vector.broadcast %cst_114 : f32 to vector<8x128xf32>
    %293 = arith.mulf %292, %291 : vector<8x128xf32>
    %294 = math.tanh %293 : vector<8x128xf32>
    %cst_115 = arith.constant 1.000000e+00 : f32
    %295 = vector.broadcast %cst_115 : f32 to vector<8x128xf32>
    %296 = arith.addf %295, %294 : vector<8x128xf32>
    %cst_116 = arith.constant 5.000000e-01 : f32
    %297 = vector.broadcast %cst_116 : f32 to vector<8x128xf32>
    %298 = arith.mulf %297, %296 : vector<8x128xf32>
    %299 = arith.mulf %286, %298 : vector<8x128xf32>
    %c0_117 = arith.constant 0 : index
    %c0_118 = arith.constant 0 : index
    %300 = vector.load %arg21[%c0_117, %c0_118] : memref<128x64xf32, #tpu.memory_space<vmem>>, vector<128x64xf32>
    %cst_119 = arith.constant dense<0.000000e+00> : vector<8x64xf32>
    %301 = tpu.matmul %299, %300, %cst_119 {dimension_numbers = #tpu.dot_dimension_numbers<[1], [0], [0], [1], [0, 0, 1, 1], [], []>} : vector<8x128xf32>, vector<128x64xf32>, vector<8x64xf32> -> vector<8x64xf32>
    %c0_120 = arith.constant 0 : index
    %c0_121 = arith.constant 0 : index
    %302 = vector.load %arg17[%c0_120, %c0_121] : memref<1x64xf32, #tpu.memory_space<vmem>>, vector<1x64xf32>
    %303 = vector.broadcast %302 : vector<1x64xf32> to vector<8x64xf32>
    %304 = arith.addf %301, %303 : vector<8x64xf32>
    %305 = arith.addf %304, %281 : vector<8x64xf32>
    %cst_122 = arith.constant dense<0.000000e+00> : vector<8xf32>
    %306 = vector.multi_reduction <add>, %305, %cst_122 [1] : vector<8x64xf32> to vector<8xf32>
    %307 = vector.shape_cast %306 : vector<8xf32> to vector<8x1xf32>
    %cst_123 = arith.constant 6.400000e+01 : f32
    %308 = vector.broadcast %cst_123 : f32 to vector<8x1xf32>
    %309 = arith.divf %307, %308 : vector<8x1xf32>
    %310 = vector.broadcast %309 : vector<8x1xf32> to vector<8x64xf32>
    %311 = arith.subf %305, %310 : vector<8x64xf32>
    %312 = arith.mulf %311, %311 : vector<8x64xf32>
    %cst_124 = arith.constant dense<0.000000e+00> : vector<8xf32>
    %313 = vector.multi_reduction <add>, %312, %cst_124 [1] : vector<8x64xf32> to vector<8xf32>
    %314 = vector.shape_cast %313 : vector<8xf32> to vector<8x1xf32>
    %cst_125 = arith.constant 6.400000e+01 : f32
    %315 = vector.broadcast %cst_125 : f32 to vector<8x1xf32>
    %316 = arith.divf %314, %315 : vector<8x1xf32>
    %317 = vector.broadcast %309 : vector<8x1xf32> to vector<8x64xf32>
    %318 = arith.subf %305, %317 : vector<8x64xf32>
    %cst_126 = arith.constant 9.99999996E-13 : f32
    %319 = vector.broadcast %cst_126 : f32 to vector<8x1xf32>
    %320 = arith.addf %316, %319 : vector<8x1xf32>
    %321 = math.rsqrt %320 : vector<8x1xf32>
    %322 = vector.broadcast %321 : vector<8x1xf32> to vector<8x64xf32>
    %323 = arith.mulf %318, %322 : vector<8x64xf32>
    %c0_127 = arith.constant 0 : index
    %c0_128 = arith.constant 0 : index
    %324 = vector.load %arg19[%c0_127, %c0_128] : memref<1x64xf32, #tpu.memory_space<vmem>>, vector<1x64xf32>
    %325 = vector.broadcast %324 : vector<1x64xf32> to vector<8x64xf32>
    %326 = arith.mulf %323, %325 : vector<8x64xf32>
    %c0_129 = arith.constant 0 : index
    %c0_130 = arith.constant 0 : index
    %327 = vector.load %arg18[%c0_129, %c0_130] : memref<1x64xf32, #tpu.memory_space<vmem>>, vector<1x64xf32>
    %328 = vector.broadcast %327 : vector<1x64xf32> to vector<8x64xf32>
    %329 = arith.addf %326, %328 : vector<8x64xf32>
    %c0_131 = arith.constant 0 : index
    %c0_132 = arith.constant 0 : index
    %330 = vector.load %arg26[%c0_131, %c0_132] : memref<64x128xf32, #tpu.memory_space<vmem>>, vector<64x128xf32>
    %cst_133 = arith.constant dense<0.000000e+00> : vector<8x128xf32>
    %331 = tpu.matmul %170, %330, %cst_133 {dimension_numbers = #tpu.dot_dimension_numbers<[1], [0], [0], [1], [0, 0, 1, 1], [], []>} : vector<8x64xf32>, vector<64x128xf32>, vector<8x128xf32> -> vector<8x128xf32>
    %c0_134 = arith.constant 0 : index
    %c0_135 = arith.constant 0 : index
    %332 = vector.load %arg22[%c0_134, %c0_135] : memref<1x128xf32, #tpu.memory_space<vmem>>, vector<1x128xf32>
    %333 = vector.broadcast %332 : vector<1x128xf32> to vector<8x128xf32>
    %334 = arith.addf %331, %333 : vector<8x128xf32>
    %335 = arith.mulf %334, %334 : vector<8x128xf32>
    %336 = arith.mulf %334, %335 : vector<8x128xf32>
    %cst_136 = arith.constant 4.471500e-02 : f32
    %337 = vector.broadcast %cst_136 : f32 to vector<8x128xf32>
    %338 = arith.mulf %337, %336 : vector<8x128xf32>
    %339 = arith.addf %334, %338 : vector<8x128xf32>
    %cst_137 = arith.constant 0.797884583 : f32
    %340 = vector.broadcast %cst_137 : f32 to vector<8x128xf32>
    %341 = arith.mulf %340, %339 : vector<8x128xf32>
    %342 = math.tanh %341 : vector<8x128xf32>
    %cst_138 = arith.constant 1.000000e+00 : f32
    %343 = vector.broadcast %cst_138 : f32 to vector<8x128xf32>
    %344 = arith.addf %343, %342 : vector<8x128xf32>
    %cst_139 = arith.constant 5.000000e-01 : f32
    %345 = vector.broadcast %cst_139 : f32 to vector<8x128xf32>
    %346 = arith.mulf %345, %344 : vector<8x128xf32>
    %347 = arith.mulf %334, %346 : vector<8x128xf32>
    %c0_140 = arith.constant 0 : index
    %c0_141 = arith.constant 0 : index
    %348 = vector.load %arg27[%c0_140, %c0_141] : memref<128x64xf32, #tpu.memory_space<vmem>>, vector<128x64xf32>
    %cst_142 = arith.constant dense<0.000000e+00> : vector<8x64xf32>
    %349 = tpu.matmul %347, %348, %cst_142 {dimension_numbers = #tpu.dot_dimension_numbers<[1], [0], [0], [1], [0, 0, 1, 1], [], []>} : vector<8x128xf32>, vector<128x64xf32>, vector<8x64xf32> -> vector<8x64xf32>
    %c0_143 = arith.constant 0 : index
    %c0_144 = arith.constant 0 : index
    %350 = vector.load %arg23[%c0_143, %c0_144] : memref<1x64xf32, #tpu.memory_space<vmem>>, vector<1x64xf32>
    %351 = vector.broadcast %350 : vector<1x64xf32> to vector<8x64xf32>
    %352 = arith.addf %349, %351 : vector<8x64xf32>
    %353 = arith.addf %352, %170 : vector<8x64xf32>
    %cst_145 = arith.constant dense<0.000000e+00> : vector<8xf32>
    %354 = vector.multi_reduction <add>, %353, %cst_145 [1] : vector<8x64xf32> to vector<8xf32>
    %355 = vector.shape_cast %354 : vector<8xf32> to vector<8x1xf32>
    %cst_146 = arith.constant 6.400000e+01 : f32
    %356 = vector.broadcast %cst_146 : f32 to vector<8x1xf32>
    %357 = arith.divf %355, %356 : vector<8x1xf32>
    %358 = vector.broadcast %357 : vector<8x1xf32> to vector<8x64xf32>
    %359 = arith.subf %353, %358 : vector<8x64xf32>
    %360 = arith.mulf %359, %359 : vector<8x64xf32>
    %cst_147 = arith.constant dense<0.000000e+00> : vector<8xf32>
    %361 = vector.multi_reduction <add>, %360, %cst_147 [1] : vector<8x64xf32> to vector<8xf32>
    %362 = vector.shape_cast %361 : vector<8xf32> to vector<8x1xf32>
    %cst_148 = arith.constant 6.400000e+01 : f32
    %363 = vector.broadcast %cst_148 : f32 to vector<8x1xf32>
    %364 = arith.divf %362, %363 : vector<8x1xf32>
    %365 = vector.broadcast %357 : vector<8x1xf32> to vector<8x64xf32>
    %366 = arith.subf %353, %365 : vector<8x64xf32>
    %cst_149 = arith.constant 9.99999996E-13 : f32
    %367 = vector.broadcast %cst_149 : f32 to vector<8x1xf32>
    %368 = arith.addf %364, %367 : vector<8x1xf32>
    %369 = math.rsqrt %368 : vector<8x1xf32>
    %370 = vector.broadcast %369 : vector<8x1xf32> to vector<8x64xf32>
    %371 = arith.mulf %366, %370 : vector<8x64xf32>
    %c0_150 = arith.constant 0 : index
    %c0_151 = arith.constant 0 : index
    %372 = vector.load %arg25[%c0_150, %c0_151] : memref<1x64xf32, #tpu.memory_space<vmem>>, vector<1x64xf32>
    %373 = vector.broadcast %372 : vector<1x64xf32> to vector<8x64xf32>
    %374 = arith.mulf %371, %373 : vector<8x64xf32>
    %c0_152 = arith.constant 0 : index
    %c0_153 = arith.constant 0 : index
    %375 = vector.load %arg24[%c0_152, %c0_153] : memref<1x64xf32, #tpu.memory_space<vmem>>, vector<1x64xf32>
    %376 = vector.broadcast %375 : vector<1x64xf32> to vector<8x64xf32>
    %377 = arith.addf %374, %376 : vector<8x64xf32>
    %378 = tpu.concatenate %329, %377 in 0 : vector<8x64xf32>, vector<8x64xf32> -> vector<16x64xf32>
    %c0_154 = arith.constant 0 : index
    %c0_155 = arith.constant 0 : index
    %379 = vector.load %arg51[%c0_154, %c0_155] : memref<64x192xf32, #tpu.memory_space<vmem>>, vector<64x192xf32>
    %cst_156 = arith.constant dense<0.000000e+00> : vector<16x192xf32>
    %380 = tpu.matmul %378, %379, %cst_156 {dimension_numbers = #tpu.dot_dimension_numbers<[1], [0], [0], [1], [0, 0, 1, 1], [], []>} : vector<16x64xf32>, vector<64x192xf32>, vector<16x192xf32> -> vector<16x192xf32>
    %c0_157 = arith.constant 0 : index
    %c0_158 = arith.constant 0 : index
    %381 = vector.load %arg47[%c0_157, %c0_158] : memref<1x192xf32, #tpu.memory_space<vmem>>, vector<1x192xf32>
    %382 = vector.broadcast %381 : vector<1x192xf32> to vector<16x192xf32>
    %383 = arith.addf %380, %382 : vector<16x192xf32>
    %384 = vector.extract_strided_slice %383 {offsets = [0, 0], sizes = [16, 64], strides = [1, 1]} : vector<16x192xf32> to vector<16x64xf32>
    %385 = vector.extract_strided_slice %383 {offsets = [0, 64], sizes = [16, 64], strides = [1, 1]} : vector<16x192xf32> to vector<16x64xf32>
    %386 = vector.extract_strided_slice %383 {offsets = [0, 128], sizes = [16, 64], strides = [1, 1]} : vector<16x192xf32> to vector<16x64xf32>
    %387 = vector.extract_strided_slice %384 {offsets = [0, 0], sizes = [16, 16], strides = [1, 1]} : vector<16x64xf32> to vector<16x16xf32>
    %388 = vector.extract_strided_slice %385 {offsets = [0, 0], sizes = [16, 16], strides = [1, 1]} : vector<16x64xf32> to vector<16x16xf32>
    %cst_159 = arith.constant dense<0.000000e+00> : vector<16x16xf32>
    %389 = tpu.matmul %387, %388, %cst_159 {dimension_numbers = #tpu.dot_dimension_numbers<[1], [1], [0], [0], [0, 0, 1, 0], [], []>} : vector<16x16xf32>, vector<16x16xf32>, vector<16x16xf32> -> vector<16x16xf32>
    %cst_160 = arith.constant 2.500000e-01 : f32
    %390 = vector.broadcast %cst_160 : f32 to vector<16x16xf32>
    %391 = arith.mulf %389, %390 : vector<16x16xf32>
    %392 = vector.broadcast %53 : vector<1x16xf32> to vector<16x16xf32>
    %393 = arith.addf %391, %392 : vector<16x16xf32>
    %cst_161 = arith.constant dense<0xFF800000> : vector<16xf32>
    %394 = vector.multi_reduction <maximumf>, %393, %cst_161 [1] : vector<16x16xf32> to vector<16xf32>
    %395 = vector.shape_cast %394 : vector<16xf32> to vector<16x1xf32>
    %396 = vector.broadcast %395 : vector<16x1xf32> to vector<16x16xf32>
    %397 = arith.subf %393, %396 : vector<16x16xf32>
    %398 = math.exp %397 : vector<16x16xf32>
    %cst_162 = arith.constant dense<0.000000e+00> : vector<16xf32>
    %399 = vector.multi_reduction <add>, %398, %cst_162 [1] : vector<16x16xf32> to vector<16xf32>
    %400 = vector.shape_cast %399 : vector<16xf32> to vector<16x1xf32>
    %401 = tpu.reciprocal %400 {approx = true} : vector<16x1xf32> -> vector<16x1xf32>
    %402 = vector.broadcast %401 : vector<16x1xf32> to vector<16x16xf32>
    %403 = arith.mulf %398, %402 : vector<16x16xf32>
    %404 = vector.extract_strided_slice %386 {offsets = [0, 0], sizes = [16, 16], strides = [1, 1]} : vector<16x64xf32> to vector<16x16xf32>
    %cst_163 = arith.constant dense<0.000000e+00> : vector<16x16xf32>
    %405 = tpu.matmul %403, %404, %cst_163 {dimension_numbers = #tpu.dot_dimension_numbers<[1], [0], [0], [1], [0, 0, 1, 1], [], []>} : vector<16x16xf32>, vector<16x16xf32>, vector<16x16xf32> -> vector<16x16xf32>
    %406 = vector.extract_strided_slice %384 {offsets = [0, 16], sizes = [16, 16], strides = [1, 1]} : vector<16x64xf32> to vector<16x16xf32>
    %407 = vector.extract_strided_slice %385 {offsets = [0, 16], sizes = [16, 16], strides = [1, 1]} : vector<16x64xf32> to vector<16x16xf32>
    %cst_164 = arith.constant dense<0.000000e+00> : vector<16x16xf32>
    %408 = tpu.matmul %406, %407, %cst_164 {dimension_numbers = #tpu.dot_dimension_numbers<[1], [1], [0], [0], [0, 0, 1, 0], [], []>} : vector<16x16xf32>, vector<16x16xf32>, vector<16x16xf32> -> vector<16x16xf32>
    %cst_165 = arith.constant 2.500000e-01 : f32
    %409 = vector.broadcast %cst_165 : f32 to vector<16x16xf32>
    %410 = arith.mulf %408, %409 : vector<16x16xf32>
    %411 = vector.broadcast %53 : vector<1x16xf32> to vector<16x16xf32>
    %412 = arith.addf %410, %411 : vector<16x16xf32>
    %cst_166 = arith.constant dense<0xFF800000> : vector<16xf32>
    %413 = vector.multi_reduction <maximumf>, %412, %cst_166 [1] : vector<16x16xf32> to vector<16xf32>
    %414 = vector.shape_cast %413 : vector<16xf32> to vector<16x1xf32>
    %415 = vector.broadcast %414 : vector<16x1xf32> to vector<16x16xf32>
    %416 = arith.subf %412, %415 : vector<16x16xf32>
    %417 = math.exp %416 : vector<16x16xf32>
    %cst_167 = arith.constant dense<0.000000e+00> : vector<16xf32>
    %418 = vector.multi_reduction <add>, %417, %cst_167 [1] : vector<16x16xf32> to vector<16xf32>
    %419 = vector.shape_cast %418 : vector<16xf32> to vector<16x1xf32>
    %420 = tpu.reciprocal %419 {approx = true} : vector<16x1xf32> -> vector<16x1xf32>
    %421 = vector.broadcast %420 : vector<16x1xf32> to vector<16x16xf32>
    %422 = arith.mulf %417, %421 : vector<16x16xf32>
    %423 = vector.extract_strided_slice %386 {offsets = [0, 16], sizes = [16, 16], strides = [1, 1]} : vector<16x64xf32> to vector<16x16xf32>
    %cst_168 = arith.constant dense<0.000000e+00> : vector<16x16xf32>
    %424 = tpu.matmul %422, %423, %cst_168 {dimension_numbers = #tpu.dot_dimension_numbers<[1], [0], [0], [1], [0, 0, 1, 1], [], []>} : vector<16x16xf32>, vector<16x16xf32>, vector<16x16xf32> -> vector<16x16xf32>
    %425 = vector.extract_strided_slice %384 {offsets = [0, 32], sizes = [16, 16], strides = [1, 1]} : vector<16x64xf32> to vector<16x16xf32>
    %426 = vector.extract_strided_slice %385 {offsets = [0, 32], sizes = [16, 16], strides = [1, 1]} : vector<16x64xf32> to vector<16x16xf32>
    %cst_169 = arith.constant dense<0.000000e+00> : vector<16x16xf32>
    %427 = tpu.matmul %425, %426, %cst_169 {dimension_numbers = #tpu.dot_dimension_numbers<[1], [1], [0], [0], [0, 0, 1, 0], [], []>} : vector<16x16xf32>, vector<16x16xf32>, vector<16x16xf32> -> vector<16x16xf32>
    %cst_170 = arith.constant 2.500000e-01 : f32
    %428 = vector.broadcast %cst_170 : f32 to vector<16x16xf32>
    %429 = arith.mulf %427, %428 : vector<16x16xf32>
    %430 = vector.broadcast %53 : vector<1x16xf32> to vector<16x16xf32>
    %431 = arith.addf %429, %430 : vector<16x16xf32>
    %cst_171 = arith.constant dense<0xFF800000> : vector<16xf32>
    %432 = vector.multi_reduction <maximumf>, %431, %cst_171 [1] : vector<16x16xf32> to vector<16xf32>
    %433 = vector.shape_cast %432 : vector<16xf32> to vector<16x1xf32>
    %434 = vector.broadcast %433 : vector<16x1xf32> to vector<16x16xf32>
    %435 = arith.subf %431, %434 : vector<16x16xf32>
    %436 = math.exp %435 : vector<16x16xf32>
    %cst_172 = arith.constant dense<0.000000e+00> : vector<16xf32>
    %437 = vector.multi_reduction <add>, %436, %cst_172 [1] : vector<16x16xf32> to vector<16xf32>
    %438 = vector.shape_cast %437 : vector<16xf32> to vector<16x1xf32>
    %439 = tpu.reciprocal %438 {approx = true} : vector<16x1xf32> -> vector<16x1xf32>
    %440 = vector.broadcast %439 : vector<16x1xf32> to vector<16x16xf32>
    %441 = arith.mulf %436, %440 : vector<16x16xf32>
    %442 = vector.extract_strided_slice %386 {offsets = [0, 32], sizes = [16, 16], strides = [1, 1]} : vector<16x64xf32> to vector<16x16xf32>
    %cst_173 = arith.constant dense<0.000000e+00> : vector<16x16xf32>
    %443 = tpu.matmul %441, %442, %cst_173 {dimension_numbers = #tpu.dot_dimension_numbers<[1], [0], [0], [1], [0, 0, 1, 1], [], []>} : vector<16x16xf32>, vector<16x16xf32>, vector<16x16xf32> -> vector<16x16xf32>
    %444 = vector.extract_strided_slice %384 {offsets = [0, 48], sizes = [16, 16], strides = [1, 1]} : vector<16x64xf32> to vector<16x16xf32>
    %445 = vector.extract_strided_slice %385 {offsets = [0, 48], sizes = [16, 16], strides = [1, 1]} : vector<16x64xf32> to vector<16x16xf32>
    %cst_174 = arith.constant dense<0.000000e+00> : vector<16x16xf32>
    %446 = tpu.matmul %444, %445, %cst_174 {dimension_numbers = #tpu.dot_dimension_numbers<[1], [1], [0], [0], [0, 0, 1, 0], [], []>} : vector<16x16xf32>, vector<16x16xf32>, vector<16x16xf32> -> vector<16x16xf32>
    %cst_175 = arith.constant 2.500000e-01 : f32
    %447 = vector.broadcast %cst_175 : f32 to vector<16x16xf32>
    %448 = arith.mulf %446, %447 : vector<16x16xf32>
    %449 = vector.broadcast %53 : vector<1x16xf32> to vector<16x16xf32>
    %450 = arith.addf %448, %449 : vector<16x16xf32>
    %cst_176 = arith.constant dense<0xFF800000> : vector<16xf32>
    %451 = vector.multi_reduction <maximumf>, %450, %cst_176 [1] : vector<16x16xf32> to vector<16xf32>
    %452 = vector.shape_cast %451 : vector<16xf32> to vector<16x1xf32>
    %453 = vector.broadcast %452 : vector<16x1xf32> to vector<16x16xf32>
    %454 = arith.subf %450, %453 : vector<16x16xf32>
    %455 = math.exp %454 : vector<16x16xf32>
    %cst_177 = arith.constant dense<0.000000e+00> : vector<16xf32>
    %456 = vector.multi_reduction <add>, %455, %cst_177 [1] : vector<16x16xf32> to vector<16xf32>
    %457 = vector.shape_cast %456 : vector<16xf32> to vector<16x1xf32>
    %458 = tpu.reciprocal %457 {approx = true} : vector<16x1xf32> -> vector<16x1xf32>
    %459 = vector.broadcast %458 : vector<16x1xf32> to vector<16x16xf32>
    %460 = arith.mulf %455, %459 : vector<16x16xf32>
    %461 = vector.extract_strided_slice %386 {offsets = [0, 48], sizes = [16, 16], strides = [1, 1]} : vector<16x64xf32> to vector<16x16xf32>
    %cst_178 = arith.constant dense<0.000000e+00> : vector<16x16xf32>
    %462 = tpu.matmul %460, %461, %cst_178 {dimension_numbers = #tpu.dot_dimension_numbers<[1], [0], [0], [1], [0, 0, 1, 1], [], []>} : vector<16x16xf32>, vector<16x16xf32>, vector<16x16xf32> -> vector<16x16xf32>
    %463 = tpu.concatenate %405, %424, %443, %462 in 1 : vector<16x16xf32>, vector<16x16xf32>, vector<16x16xf32>, vector<16x16xf32> -> vector<16x64xf32>
    %c0_179 = arith.constant 0 : index
    %c0_180 = arith.constant 0 : index
    %464 = vector.load %arg50[%c0_179, %c0_180] : memref<64x64xf32, #tpu.memory_space<vmem>>, vector<64x64xf32>
    %cst_181 = arith.constant dense<0.000000e+00> : vector<16x64xf32>
    %465 = tpu.matmul %463, %464, %cst_181 {dimension_numbers = #tpu.dot_dimension_numbers<[1], [0], [0], [1], [0, 0, 1, 1], [], []>} : vector<16x64xf32>, vector<64x64xf32>, vector<16x64xf32> -> vector<16x64xf32>
    %c0_182 = arith.constant 0 : index
    %c0_183 = arith.constant 0 : index
    %466 = vector.load %arg46[%c0_182, %c0_183] : memref<1x64xf32, #tpu.memory_space<vmem>>, vector<1x64xf32>
    %467 = vector.broadcast %466 : vector<1x64xf32> to vector<16x64xf32>
    %468 = arith.addf %465, %467 : vector<16x64xf32>
    %469 = arith.addf %468, %378 : vector<16x64xf32>
    %cst_184 = arith.constant dense<0.000000e+00> : vector<16xf32>
    %470 = vector.multi_reduction <add>, %469, %cst_184 [1] : vector<16x64xf32> to vector<16xf32>
    %471 = vector.shape_cast %470 : vector<16xf32> to vector<16x1xf32>
    %cst_185 = arith.constant 6.400000e+01 : f32
    %472 = vector.broadcast %cst_185 : f32 to vector<16x1xf32>
    %473 = arith.divf %471, %472 : vector<16x1xf32>
    %474 = vector.broadcast %473 : vector<16x1xf32> to vector<16x64xf32>
    %475 = arith.subf %469, %474 : vector<16x64xf32>
    %476 = arith.mulf %475, %475 : vector<16x64xf32>
    %cst_186 = arith.constant dense<0.000000e+00> : vector<16xf32>
    %477 = vector.multi_reduction <add>, %476, %cst_186 [1] : vector<16x64xf32> to vector<16xf32>
    %478 = vector.shape_cast %477 : vector<16xf32> to vector<16x1xf32>
    %cst_187 = arith.constant 6.400000e+01 : f32
    %479 = vector.broadcast %cst_187 : f32 to vector<16x1xf32>
    %480 = arith.divf %478, %479 : vector<16x1xf32>
    %481 = vector.broadcast %473 : vector<16x1xf32> to vector<16x64xf32>
    %482 = arith.subf %469, %481 : vector<16x64xf32>
    %cst_188 = arith.constant 9.99999996E-13 : f32
    %483 = vector.broadcast %cst_188 : f32 to vector<16x1xf32>
    %484 = arith.addf %480, %483 : vector<16x1xf32>
    %485 = math.rsqrt %484 : vector<16x1xf32>
    %486 = vector.broadcast %485 : vector<16x1xf32> to vector<16x64xf32>
    %487 = arith.mulf %482, %486 : vector<16x64xf32>
    %c0_189 = arith.constant 0 : index
    %c0_190 = arith.constant 0 : index
    %488 = vector.load %arg49[%c0_189, %c0_190] : memref<1x64xf32, #tpu.memory_space<vmem>>, vector<1x64xf32>
    %489 = vector.broadcast %488 : vector<1x64xf32> to vector<16x64xf32>
    %490 = arith.mulf %487, %489 : vector<16x64xf32>
    %c0_191 = arith.constant 0 : index
    %c0_192 = arith.constant 0 : index
    %491 = vector.load %arg48[%c0_191, %c0_192] : memref<1x64xf32, #tpu.memory_space<vmem>>, vector<1x64xf32>
    %492 = vector.broadcast %491 : vector<1x64xf32> to vector<16x64xf32>
    %493 = arith.addf %490, %492 : vector<16x64xf32>
    %494 = vector.extract_strided_slice %493 {offsets = [0, 0], sizes = [8, 64], strides = [1, 1]} : vector<16x64xf32> to vector<8x64xf32>
    %495 = vector.extract_strided_slice %493 {offsets = [8, 0], sizes = [8, 64], strides = [1, 1]} : vector<16x64xf32> to vector<8x64xf32>
    %c0_193 = arith.constant 0 : index
    %c0_194 = arith.constant 0 : index
    %496 = vector.load %arg38[%c0_193, %c0_194] : memref<64x128xf32, #tpu.memory_space<vmem>>, vector<64x128xf32>
    %cst_195 = arith.constant dense<0.000000e+00> : vector<8x128xf32>
    %497 = tpu.matmul %494, %496, %cst_195 {dimension_numbers = #tpu.dot_dimension_numbers<[1], [0], [0], [1], [0, 0, 1, 1], [], []>} : vector<8x64xf32>, vector<64x128xf32>, vector<8x128xf32> -> vector<8x128xf32>
    %c0_196 = arith.constant 0 : index
    %c0_197 = arith.constant 0 : index
    %498 = vector.load %arg34[%c0_196, %c0_197] : memref<1x128xf32, #tpu.memory_space<vmem>>, vector<1x128xf32>
    %499 = vector.broadcast %498 : vector<1x128xf32> to vector<8x128xf32>
    %500 = arith.addf %497, %499 : vector<8x128xf32>
    %501 = arith.mulf %500, %500 : vector<8x128xf32>
    %502 = arith.mulf %500, %501 : vector<8x128xf32>
    %cst_198 = arith.constant 4.471500e-02 : f32
    %503 = vector.broadcast %cst_198 : f32 to vector<8x128xf32>
    %504 = arith.mulf %503, %502 : vector<8x128xf32>
    %505 = arith.addf %500, %504 : vector<8x128xf32>
    %cst_199 = arith.constant 0.797884583 : f32
    %506 = vector.broadcast %cst_199 : f32 to vector<8x128xf32>
    %507 = arith.mulf %506, %505 : vector<8x128xf32>
    %508 = math.tanh %507 : vector<8x128xf32>
    %cst_200 = arith.constant 1.000000e+00 : f32
    %509 = vector.broadcast %cst_200 : f32 to vector<8x128xf32>
    %510 = arith.addf %509, %508 : vector<8x128xf32>
    %cst_201 = arith.constant 5.000000e-01 : f32
    %511 = vector.broadcast %cst_201 : f32 to vector<8x128xf32>
    %512 = arith.mulf %511, %510 : vector<8x128xf32>
    %513 = arith.mulf %500, %512 : vector<8x128xf32>
    %c0_202 = arith.constant 0 : index
    %c0_203 = arith.constant 0 : index
    %514 = vector.load %arg39[%c0_202, %c0_203] : memref<128x64xf32, #tpu.memory_space<vmem>>, vector<128x64xf32>
    %cst_204 = arith.constant dense<0.000000e+00> : vector<8x64xf32>
    %515 = tpu.matmul %513, %514, %cst_204 {dimension_numbers = #tpu.dot_dimension_numbers<[1], [0], [0], [1], [0, 0, 1, 1], [], []>} : vector<8x128xf32>, vector<128x64xf32>, vector<8x64xf32> -> vector<8x64xf32>
    %c0_205 = arith.constant 0 : index
    %c0_206 = arith.constant 0 : index
    %516 = vector.load %arg35[%c0_205, %c0_206] : memref<1x64xf32, #tpu.memory_space<vmem>>, vector<1x64xf32>
    %517 = vector.broadcast %516 : vector<1x64xf32> to vector<8x64xf32>
    %518 = arith.addf %515, %517 : vector<8x64xf32>
    %519 = arith.addf %518, %494 : vector<8x64xf32>
    %cst_207 = arith.constant dense<0.000000e+00> : vector<8xf32>
    %520 = vector.multi_reduction <add>, %519, %cst_207 [1] : vector<8x64xf32> to vector<8xf32>
    %521 = vector.shape_cast %520 : vector<8xf32> to vector<8x1xf32>
    %cst_208 = arith.constant 6.400000e+01 : f32
    %522 = vector.broadcast %cst_208 : f32 to vector<8x1xf32>
    %523 = arith.divf %521, %522 : vector<8x1xf32>
    %524 = vector.broadcast %523 : vector<8x1xf32> to vector<8x64xf32>
    %525 = arith.subf %519, %524 : vector<8x64xf32>
    %526 = arith.mulf %525, %525 : vector<8x64xf32>
    %cst_209 = arith.constant dense<0.000000e+00> : vector<8xf32>
    %527 = vector.multi_reduction <add>, %526, %cst_209 [1] : vector<8x64xf32> to vector<8xf32>
    %528 = vector.shape_cast %527 : vector<8xf32> to vector<8x1xf32>
    %cst_210 = arith.constant 6.400000e+01 : f32
    %529 = vector.broadcast %cst_210 : f32 to vector<8x1xf32>
    %530 = arith.divf %528, %529 : vector<8x1xf32>
    %531 = vector.broadcast %523 : vector<8x1xf32> to vector<8x64xf32>
    %532 = arith.subf %519, %531 : vector<8x64xf32>
    %cst_211 = arith.constant 9.99999996E-13 : f32
    %533 = vector.broadcast %cst_211 : f32 to vector<8x1xf32>
    %534 = arith.addf %530, %533 : vector<8x1xf32>
    %535 = math.rsqrt %534 : vector<8x1xf32>
    %536 = vector.broadcast %535 : vector<8x1xf32> to vector<8x64xf32>
    %537 = arith.mulf %532, %536 : vector<8x64xf32>
    %c0_212 = arith.constant 0 : index
    %c0_213 = arith.constant 0 : index
    %538 = vector.load %arg37[%c0_212, %c0_213] : memref<1x64xf32, #tpu.memory_space<vmem>>, vector<1x64xf32>
    %539 = vector.broadcast %538 : vector<1x64xf32> to vector<8x64xf32>
    %540 = arith.mulf %537, %539 : vector<8x64xf32>
    %c0_214 = arith.constant 0 : index
    %c0_215 = arith.constant 0 : index
    %541 = vector.load %arg36[%c0_214, %c0_215] : memref<1x64xf32, #tpu.memory_space<vmem>>, vector<1x64xf32>
    %542 = vector.broadcast %541 : vector<1x64xf32> to vector<8x64xf32>
    %543 = arith.addf %540, %542 : vector<8x64xf32>
    %c0_216 = arith.constant 0 : index
    %c0_217 = arith.constant 0 : index
    %544 = vector.load %arg44[%c0_216, %c0_217] : memref<64x128xf32, #tpu.memory_space<vmem>>, vector<64x128xf32>
    %cst_218 = arith.constant dense<0.000000e+00> : vector<8x128xf32>
    %545 = tpu.matmul %495, %544, %cst_218 {dimension_numbers = #tpu.dot_dimension_numbers<[1], [0], [0], [1], [0, 0, 1, 1], [], []>} : vector<8x64xf32>, vector<64x128xf32>, vector<8x128xf32> -> vector<8x128xf32>
    %c0_219 = arith.constant 0 : index
    %c0_220 = arith.constant 0 : index
    %546 = vector.load %arg40[%c0_219, %c0_220] : memref<1x128xf32, #tpu.memory_space<vmem>>, vector<1x128xf32>
    %547 = vector.broadcast %546 : vector<1x128xf32> to vector<8x128xf32>
    %548 = arith.addf %545, %547 : vector<8x128xf32>
    %549 = arith.mulf %548, %548 : vector<8x128xf32>
    %550 = arith.mulf %548, %549 : vector<8x128xf32>
    %cst_221 = arith.constant 4.471500e-02 : f32
    %551 = vector.broadcast %cst_221 : f32 to vector<8x128xf32>
    %552 = arith.mulf %551, %550 : vector<8x128xf32>
    %553 = arith.addf %548, %552 : vector<8x128xf32>
    %cst_222 = arith.constant 0.797884583 : f32
    %554 = vector.broadcast %cst_222 : f32 to vector<8x128xf32>
    %555 = arith.mulf %554, %553 : vector<8x128xf32>
    %556 = math.tanh %555 : vector<8x128xf32>
    %cst_223 = arith.constant 1.000000e+00 : f32
    %557 = vector.broadcast %cst_223 : f32 to vector<8x128xf32>
    %558 = arith.addf %557, %556 : vector<8x128xf32>
    %cst_224 = arith.constant 5.000000e-01 : f32
    %559 = vector.broadcast %cst_224 : f32 to vector<8x128xf32>
    %560 = arith.mulf %559, %558 : vector<8x128xf32>
    %561 = arith.mulf %548, %560 : vector<8x128xf32>
    %c0_225 = arith.constant 0 : index
    %c0_226 = arith.constant 0 : index
    %562 = vector.load %arg45[%c0_225, %c0_226] : memref<128x64xf32, #tpu.memory_space<vmem>>, vector<128x64xf32>
    %cst_227 = arith.constant dense<0.000000e+00> : vector<8x64xf32>
    %563 = tpu.matmul %561, %562, %cst_227 {dimension_numbers = #tpu.dot_dimension_numbers<[1], [0], [0], [1], [0, 0, 1, 1], [], []>} : vector<8x128xf32>, vector<128x64xf32>, vector<8x64xf32> -> vector<8x64xf32>
    %c0_228 = arith.constant 0 : index
    %c0_229 = arith.constant 0 : index
    %564 = vector.load %arg41[%c0_228, %c0_229] : memref<1x64xf32, #tpu.memory_space<vmem>>, vector<1x64xf32>
    %565 = vector.broadcast %564 : vector<1x64xf32> to vector<8x64xf32>
    %566 = arith.addf %563, %565 : vector<8x64xf32>
    %567 = arith.addf %566, %495 : vector<8x64xf32>
    %cst_230 = arith.constant dense<0.000000e+00> : vector<8xf32>
    %568 = vector.multi_reduction <add>, %567, %cst_230 [1] : vector<8x64xf32> to vector<8xf32>
    %569 = vector.shape_cast %568 : vector<8xf32> to vector<8x1xf32>
    %cst_231 = arith.constant 6.400000e+01 : f32
    %570 = vector.broadcast %cst_231 : f32 to vector<8x1xf32>
    %571 = arith.divf %569, %570 : vector<8x1xf32>
    %572 = vector.broadcast %571 : vector<8x1xf32> to vector<8x64xf32>
    %573 = arith.subf %567, %572 : vector<8x64xf32>
    %574 = arith.mulf %573, %573 : vector<8x64xf32>
    %cst_232 = arith.constant dense<0.000000e+00> : vector<8xf32>
    %575 = vector.multi_reduction <add>, %574, %cst_232 [1] : vector<8x64xf32> to vector<8xf32>
    %576 = vector.shape_cast %575 : vector<8xf32> to vector<8x1xf32>
    %cst_233 = arith.constant 6.400000e+01 : f32
    %577 = vector.broadcast %cst_233 : f32 to vector<8x1xf32>
    %578 = arith.divf %576, %577 : vector<8x1xf32>
    %579 = vector.broadcast %571 : vector<8x1xf32> to vector<8x64xf32>
    %580 = arith.subf %567, %579 : vector<8x64xf32>
    %cst_234 = arith.constant 9.99999996E-13 : f32
    %581 = vector.broadcast %cst_234 : f32 to vector<8x1xf32>
    %582 = arith.addf %578, %581 : vector<8x1xf32>
    %583 = math.rsqrt %582 : vector<8x1xf32>
    %584 = vector.broadcast %583 : vector<8x1xf32> to vector<8x64xf32>
    %585 = arith.mulf %580, %584 : vector<8x64xf32>
    %c0_235 = arith.constant 0 : index
    %c0_236 = arith.constant 0 : index
    %586 = vector.load %arg43[%c0_235, %c0_236] : memref<1x64xf32, #tpu.memory_space<vmem>>, vector<1x64xf32>
    %587 = vector.broadcast %586 : vector<1x64xf32> to vector<8x64xf32>
    %588 = arith.mulf %585, %587 : vector<8x64xf32>
    %c0_237 = arith.constant 0 : index
    %c0_238 = arith.constant 0 : index
    %589 = vector.load %arg42[%c0_237, %c0_238] : memref<1x64xf32, #tpu.memory_space<vmem>>, vector<1x64xf32>
    %590 = vector.broadcast %589 : vector<1x64xf32> to vector<8x64xf32>
    %591 = arith.addf %588, %590 : vector<8x64xf32>
    %592 = tpu.concatenate %543, %591 in 0 : vector<8x64xf32>, vector<8x64xf32> -> vector<16x64xf32>
    %593 = vector.extract_strided_slice %592 {offsets = [0, 0], sizes = [8, 64], strides = [1, 1]} : vector<16x64xf32> to vector<8x64xf32>
    %c0_239 = arith.constant 0 : index
    %c0_240 = arith.constant 0 : index
    %594 = vector.load %arg7[%c0_239, %c0_240] : memref<1x2xf32, #tpu.memory_space<vmem>>, vector<1x2xf32>
    %595 = vector.extract_strided_slice %593 {offsets = [0, 0], sizes = [1, 64], strides = [1, 1]} : vector<8x64xf32> to vector<1x64xf32>
    %c0_241 = arith.constant 0 : index
    %c0_242 = arith.constant 0 : index
    %596 = vector.load %arg6[%c0_241, %c0_242] : memref<512x2xf32, #tpu.memory_space<vmem>>, vector<64x2xf32>
    %cst_243 = arith.constant dense<0.000000e+00> : vector<1x2xf32>
    %597 = tpu.matmul %595, %596, %cst_243 {dimension_numbers = #tpu.dot_dimension_numbers<[1], [0], [0], [1], [0, 0, 1, 1], [], []>} : vector<1x64xf32>, vector<64x2xf32>, vector<1x2xf32> -> vector<1x2xf32>
    %598 = arith.addf %594, %597 : vector<1x2xf32>
    %599 = vector.extract_strided_slice %593 {offsets = [1, 0], sizes = [1, 64], strides = [1, 1]} : vector<8x64xf32> to vector<1x64xf32>
    %c64 = arith.constant 64 : index
    %c0_244 = arith.constant 0 : index
    %600 = vector.load %arg6[%c64, %c0_244] : memref<512x2xf32, #tpu.memory_space<vmem>>, vector<64x2xf32>
    %cst_245 = arith.constant dense<0.000000e+00> : vector<1x2xf32>
    %601 = tpu.matmul %599, %600, %cst_245 {dimension_numbers = #tpu.dot_dimension_numbers<[1], [0], [0], [1], [0, 0, 1, 1], [], []>} : vector<1x64xf32>, vector<64x2xf32>, vector<1x2xf32> -> vector<1x2xf32>
    %602 = arith.addf %598, %601 : vector<1x2xf32>
    %603 = vector.extract_strided_slice %593 {offsets = [2, 0], sizes = [1, 64], strides = [1, 1]} : vector<8x64xf32> to vector<1x64xf32>
    %c128 = arith.constant 128 : index
    %c0_246 = arith.constant 0 : index
    %604 = vector.load %arg6[%c128, %c0_246] : memref<512x2xf32, #tpu.memory_space<vmem>>, vector<64x2xf32>
    %cst_247 = arith.constant dense<0.000000e+00> : vector<1x2xf32>
    %605 = tpu.matmul %603, %604, %cst_247 {dimension_numbers = #tpu.dot_dimension_numbers<[1], [0], [0], [1], [0, 0, 1, 1], [], []>} : vector<1x64xf32>, vector<64x2xf32>, vector<1x2xf32> -> vector<1x2xf32>
    %606 = arith.addf %602, %605 : vector<1x2xf32>
    %607 = vector.extract_strided_slice %593 {offsets = [3, 0], sizes = [1, 64], strides = [1, 1]} : vector<8x64xf32> to vector<1x64xf32>
    %c192 = arith.constant 192 : index
    %c0_248 = arith.constant 0 : index
    %608 = vector.load %arg6[%c192, %c0_248] : memref<512x2xf32, #tpu.memory_space<vmem>>, vector<64x2xf32>
    %cst_249 = arith.constant dense<0.000000e+00> : vector<1x2xf32>
    %609 = tpu.matmul %607, %608, %cst_249 {dimension_numbers = #tpu.dot_dimension_numbers<[1], [0], [0], [1], [0, 0, 1, 1], [], []>} : vector<1x64xf32>, vector<64x2xf32>, vector<1x2xf32> -> vector<1x2xf32>
    %610 = arith.addf %606, %609 : vector<1x2xf32>
    %611 = vector.extract_strided_slice %593 {offsets = [4, 0], sizes = [1, 64], strides = [1, 1]} : vector<8x64xf32> to vector<1x64xf32>
    %c256 = arith.constant 256 : index
    %c0_250 = arith.constant 0 : index
    %612 = vector.load %arg6[%c256, %c0_250] : memref<512x2xf32, #tpu.memory_space<vmem>>, vector<64x2xf32>
    %cst_251 = arith.constant dense<0.000000e+00> : vector<1x2xf32>
    %613 = tpu.matmul %611, %612, %cst_251 {dimension_numbers = #tpu.dot_dimension_numbers<[1], [0], [0], [1], [0, 0, 1, 1], [], []>} : vector<1x64xf32>, vector<64x2xf32>, vector<1x2xf32> -> vector<1x2xf32>
    %614 = arith.addf %610, %613 : vector<1x2xf32>
    %615 = vector.extract_strided_slice %593 {offsets = [5, 0], sizes = [1, 64], strides = [1, 1]} : vector<8x64xf32> to vector<1x64xf32>
    %c320 = arith.constant 320 : index
    %c0_252 = arith.constant 0 : index
    %616 = vector.load %arg6[%c320, %c0_252] : memref<512x2xf32, #tpu.memory_space<vmem>>, vector<64x2xf32>
    %cst_253 = arith.constant dense<0.000000e+00> : vector<1x2xf32>
    %617 = tpu.matmul %615, %616, %cst_253 {dimension_numbers = #tpu.dot_dimension_numbers<[1], [0], [0], [1], [0, 0, 1, 1], [], []>} : vector<1x64xf32>, vector<64x2xf32>, vector<1x2xf32> -> vector<1x2xf32>
    %618 = arith.addf %614, %617 : vector<1x2xf32>
    %619 = vector.extract_strided_slice %593 {offsets = [6, 0], sizes = [1, 64], strides = [1, 1]} : vector<8x64xf32> to vector<1x64xf32>
    %c384 = arith.constant 384 : index
    %c0_254 = arith.constant 0 : index
    %620 = vector.load %arg6[%c384, %c0_254] : memref<512x2xf32, #tpu.memory_space<vmem>>, vector<64x2xf32>
    %cst_255 = arith.constant dense<0.000000e+00> : vector<1x2xf32>
    %621 = tpu.matmul %619, %620, %cst_255 {dimension_numbers = #tpu.dot_dimension_numbers<[1], [0], [0], [1], [0, 0, 1, 1], [], []>} : vector<1x64xf32>, vector<64x2xf32>, vector<1x2xf32> -> vector<1x2xf32>
    %622 = arith.addf %618, %621 : vector<1x2xf32>
    %623 = vector.extract_strided_slice %593 {offsets = [7, 0], sizes = [1, 64], strides = [1, 1]} : vector<8x64xf32> to vector<1x64xf32>
    %c448 = arith.constant 448 : index
    %c0_256 = arith.constant 0 : index
    %624 = vector.load %arg6[%c448, %c0_256] : memref<512x2xf32, #tpu.memory_space<vmem>>, vector<64x2xf32>
    %cst_257 = arith.constant dense<0.000000e+00> : vector<1x2xf32>
    %625 = tpu.matmul %623, %624, %cst_257 {dimension_numbers = #tpu.dot_dimension_numbers<[1], [0], [0], [1], [0, 0, 1, 1], [], []>} : vector<1x64xf32>, vector<64x2xf32>, vector<1x2xf32> -> vector<1x2xf32>
    %626 = arith.addf %622, %625 : vector<1x2xf32>
    %cst_258 = arith.constant dense<0.000000e+00> : vector<1xf32>
    %627 = vector.multi_reduction <add>, %626, %cst_258 [1] : vector<1x2xf32> to vector<1xf32>
    %628 = vector.shape_cast %627 : vector<1xf32> to vector<1x1xf32>
    %cst_259 = arith.constant 2.000000e+00 : f32
    %629 = vector.broadcast %cst_259 : f32 to vector<1x1xf32>
    %630 = arith.divf %628, %629 : vector<1x1xf32>
    %cst_260 = arith.constant 0.000000e+00 : f32
    %631 = vector.broadcast %cst_260 : f32 to vector<1x1xf32>
    %632 = arith.subf %631, %630 : vector<1x1xf32>
    %633 = math.exp %632 : vector<1x1xf32>
    %cst_261 = arith.constant 1.000000e+00 : f32
    %634 = vector.broadcast %cst_261 : f32 to vector<1x1xf32>
    %635 = arith.addf %634, %633 : vector<1x1xf32>
    %cst_262 = arith.constant 1.000000e+00 : f32
    %636 = vector.broadcast %cst_262 : f32 to vector<1x1xf32>
    %637 = arith.divf %636, %635 : vector<1x1xf32>
    %c0_263 = arith.constant 0 : index
    %c0_264 = arith.constant 0 : index
    %c0_265 = arith.constant 0 : index
    %638 = vector.load %arg54[%c0_263, %c0_264, %c0_265] : memref<1x1x1xf32, #tpu.memory_space<vmem>>, vector<1x1x1xf32>
    %639 = vector.shape_cast %638 : vector<1x1x1xf32> to vector<1x1xf32>
    %640 = vector.shape_cast %637 : vector<1x1xf32> to vector<1x1x1xf32>
    tpu.vector_store %arg54[%c0_263, %c0_264, %c0_265], %640 {strides = array<i32>} : memref<1x1x1xf32, #tpu.memory_space<vmem>>, vector<1x1x1xf32>,
    return
  }
  func.func @transform_0(%arg0: i32) -> (i32, i32, i32) {
    %c0_i32 = arith.constant 0 : i32
    %c0_i32_0 = arith.constant 0 : i32
    %c0_i32_1 = arith.constant 0 : i32
    return %arg0, %c0_i32, %c0_i32_0 : i32, i32, i32
  }
  func.func @transform_1(%arg0: i32) -> (i32, i32, i32) {
    %c0_i32 = arith.constant 0 : i32
    %c0_i32_0 = arith.constant 0 : i32
    %c0_i32_1 = arith.constant 0 : i32
    return %arg0, %c0_i32, %c0_i32_0 : i32, i32, i32
  }
  func.func @transform_2(%arg0: i32) -> (i32, i32, i32) {
    %c0_i32 = arith.constant 0 : i32
    %c0_i32_0 = arith.constant 0 : i32
    %c0_i32_1 = arith.constant 0 : i32
    return %arg0, %c0_i32, %c0_i32_0 : i32, i32, i32
  }
  func.func @transform_3(%arg0: i32) -> (i32, i32) {
    %c0_i32 = arith.constant 0 : i32
    %c0_i32_0 = arith.constant 0 : i32
    %c0_i32_1 = arith.constant 0 : i32
    return %c0_i32, %c0_i32_0 : i32, i32
  }
  func.func @transform_4(%arg0: i32) -> (i32, i32) {
    %c0_i32 = arith.constant 0 : i32
    %c0_i32_0 = arith.constant 0 : i32
    %c0_i32_1 = arith.constant 0 : i32
    return %c0_i32, %c0_i32_0 : i32, i32
  }
  func.func @transform_5(%arg0: i32) -> (i32, i32) {
    %c0_i32 = arith.constant 0 : i32
    %c0_i32_0 = arith.constant 0 : i32
    %c0_i32_1 = arith.constant 0 : i32
    return %c0_i32, %c0_i32_0 : i32, i32
  }
  func.func @transform_6(%arg0: i32) -> (i32, i32) {
    %c0_i32 = arith.constant 0 : i32
    %c0_i32_0 = arith.constant 0 : i32
    %c0_i32_1 = arith.constant 0 : i32
    return %c0_i32, %c0_i32_0 : i32, i32
  }
  func.func @transform_7(%arg0: i32) -> (i32, i32) {
    %c0_i32 = arith.constant 0 : i32
    %c0_i32_0 = arith.constant 0 : i32
    %c0_i32_1 = arith.constant 0 : i32
    return %c0_i32, %c0_i32_0 : i32, i32
  }
  func.func @transform_8(%arg0: i32) -> (i32, i32) {
    %c0_i32 = arith.constant 0 : i32
    %c0_i32_0 = arith.constant 0 : i32
    %c0_i32_1 = arith.constant 0 : i32
    return %c0_i32, %c0_i32_0 : i32, i32
  }
  func.func @transform_9(%arg0: i32) -> (i32, i32) {
    %c0_i32 = arith.constant 0 : i32
    %c0_i32_0 = arith.constant 0 : i32
    %c0_i32_1 = arith.constant 0 : i32
    return %c0_i32, %c0_i32_0 : i32, i32
  }
  func.func @transform_10(%arg0: i32) -> (i32, i32) {
    %c0_i32 = arith.constant 0 : i32
    %c0_i32_0 = arith.constant 0 : i32
    %c0_i32_1 = arith.constant 0 : i32
    return %c0_i32, %c0_i32_0 : i32, i32
  }
  func.func @transform_11(%arg0: i32) -> (i32, i32) {
    %c0_i32 = arith.constant 0 : i32
    %c0_i32_0 = arith.constant 0 : i32
    %c0_i32_1 = arith.constant 0 : i32
    return %c0_i32, %c0_i32_0 : i32, i32
  }
  func.func @transform_12(%arg0: i32) -> (i32, i32) {
    %c0_i32 = arith.constant 0 : i32
    %c0_i32_0 = arith.constant 0 : i32
    %c0_i32_1 = arith.constant 0 : i32
    return %c0_i32, %c0_i32_0 : i32, i32
  }
  func.func @transform_13(%arg0: i32) -> (i32, i32) {
    %c0_i32 = arith.constant 0 : i32
    %c0_i32_0 = arith.constant 0 : i32
    %c0_i32_1 = arith.constant 0 : i32
    return %c0_i32, %c0_i32_0 : i32, i32
  }
  func.func @transform_14(%arg0: i32) -> (i32, i32) {
    %c0_i32 = arith.constant 0 : i32
    %c0_i32_0 = arith.constant 0 : i32
    %c0_i32_1 = arith.constant 0 : i32
    return %c0_i32, %c0_i32_0 : i32, i32
  }
  func.func @transform_15(%arg0: i32) -> (i32, i32) {
    %c0_i32 = arith.constant 0 : i32
    %c0_i32_0 = arith.constant 0 : i32
    %c0_i32_1 = arith.constant 0 : i32
    return %c0_i32, %c0_i32_0 : i32, i32
  }
  func.func @transform_16(%arg0: i32) -> (i32, i32) {
    %c0_i32 = arith.constant 0 : i32
    %c0_i32_0 = arith.constant 0 : i32
    %c0_i32_1 = arith.constant 0 : i32
    return %c0_i32, %c0_i32_0 : i32, i32
  }
  func.func @transform_17(%arg0: i32) -> (i32, i32) {
    %c0_i32 = arith.constant 0 : i32
    %c0_i32_0 = arith.constant 0 : i32
    %c0_i32_1 = arith.constant 0 : i32
    return %c0_i32, %c0_i32_0 : i32, i32
  }
  func.func @transform_18(%arg0: i32) -> (i32, i32) {
    %c0_i32 = arith.constant 0 : i32
    %c0_i32_0 = arith.constant 0 : i32
    %c0_i32_1 = arith.constant 0 : i32
    return %c0_i32, %c0_i32_0 : i32, i32
  }
  func.func @transform_19(%arg0: i32) -> (i32, i32) {
    %c0_i32 = arith.constant 0 : i32
    %c0_i32_0 = arith.constant 0 : i32
    %c0_i32_1 = arith.constant 0 : i32
    return %c0_i32, %c0_i32_0 : i32, i32
  }
  func.func @transform_20(%arg0: i32) -> (i32, i32) {
    %c0_i32 = arith.constant 0 : i32
    %c0_i32_0 = arith.constant 0 : i32
    %c0_i32_1 = arith.constant 0 : i32
    return %c0_i32, %c0_i32_0 : i32, i32
  }
  func.func @transform_21(%arg0: i32) -> (i32, i32) {
    %c0_i32 = arith.constant 0 : i32
    %c0_i32_0 = arith.constant 0 : i32
    %c0_i32_1 = arith.constant 0 : i32
    return %c0_i32, %c0_i32_0 : i32, i32
  }
  func.func @transform_22(%arg0: i32) -> (i32, i32) {
    %c0_i32 = arith.constant 0 : i32
    %c0_i32_0 = arith.constant 0 : i32
    %c0_i32_1 = arith.constant 0 : i32
    return %c0_i32, %c0_i32_0 : i32, i32
  }
  func.func @transform_23(%arg0: i32) -> (i32, i32) {
    %c0_i32 = arith.constant 0 : i32
    %c0_i32_0 = arith.constant 0 : i32
    %c0_i32_1 = arith.constant 0 : i32
    return %c0_i32, %c0_i32_0 : i32, i32
  }
  func.func @transform_24(%arg0: i32) -> (i32, i32) {
    %c0_i32 = arith.constant 0 : i32
    %c0_i32_0 = arith.constant 0 : i32
    %c0_i32_1 = arith.constant 0 : i32
    return %c0_i32, %c0_i32_0 : i32, i32
  }
  func.func @transform_25(%arg0: i32) -> (i32, i32) {
    %c0_i32 = arith.constant 0 : i32
    %c0_i32_0 = arith.constant 0 : i32
    %c0_i32_1 = arith.constant 0 : i32
    return %c0_i32, %c0_i32_0 : i32, i32
  }
  func.func @transform_26(%arg0: i32) -> (i32, i32) {
    %c0_i32 = arith.constant 0 : i32
    %c0_i32_0 = arith.constant 0 : i32
    %c0_i32_1 = arith.constant 0 : i32
    return %c0_i32, %c0_i32_0 : i32, i32
  }
  func.func @transform_27(%arg0: i32) -> (i32, i32) {
    %c0_i32 = arith.constant 0 : i32
    %c0_i32_0 = arith.constant 0 : i32
    %c0_i32_1 = arith.constant 0 : i32
    return %c0_i32, %c0_i32_0 : i32, i32
  }
  func.func @transform_28(%arg0: i32) -> (i32, i32) {
    %c0_i32 = arith.constant 0 : i32
    %c0_i32_0 = arith.constant 0 : i32
    %c0_i32_1 = arith.constant 0 : i32
    return %c0_i32, %c0_i32_0 : i32, i32
  }
  func.func @transform_29(%arg0: i32) -> (i32, i32) {
    %c0_i32 = arith.constant 0 : i32
    %c0_i32_0 = arith.constant 0 : i32
    %c0_i32_1 = arith.constant 0 : i32
    return %c0_i32, %c0_i32_0 : i32, i32
  }
  func.func @transform_30(%arg0: i32) -> (i32, i32) {
    %c0_i32 = arith.constant 0 : i32
    %c0_i32_0 = arith.constant 0 : i32
    %c0_i32_1 = arith.constant 0 : i32
    return %c0_i32, %c0_i32_0 : i32, i32
  }
  func.func @transform_31(%arg0: i32) -> (i32, i32) {
    %c0_i32 = arith.constant 0 : i32
    %c0_i32_0 = arith.constant 0 : i32
    %c0_i32_1 = arith.constant 0 : i32
    return %c0_i32, %c0_i32_0 : i32, i32
  }
  func.func @transform_32(%arg0: i32) -> (i32, i32) {
    %c0_i32 = arith.constant 0 : i32
    %c0_i32_0 = arith.constant 0 : i32
    %c0_i32_1 = arith.constant 0 : i32
    return %c0_i32, %c0_i32_0 : i32, i32
  }
  func.func @transform_33(%arg0: i32) -> (i32, i32) {
    %c0_i32 = arith.constant 0 : i32
    %c0_i32_0 = arith.constant 0 : i32
    %c0_i32_1 = arith.constant 0 : i32
    return %c0_i32, %c0_i32_0 : i32, i32
  }
  func.func @transform_34(%arg0: i32) -> (i32, i32) {
    %c0_i32 = arith.constant 0 : i32
    %c0_i32_0 = arith.constant 0 : i32
    %c0_i32_1 = arith.constant 0 : i32
    return %c0_i32, %c0_i32_0 : i32, i32
  }
  func.func @transform_35(%arg0: i32) -> (i32, i32) {
    %c0_i32 = arith.constant 0 : i32
    %c0_i32_0 = arith.constant 0 : i32
    %c0_i32_1 = arith.constant 0 : i32
    return %c0_i32, %c0_i32_0 : i32, i32
  }
  func.func @transform_36(%arg0: i32) -> (i32, i32) {
    %c0_i32 = arith.constant 0 : i32
    %c0_i32_0 = arith.constant 0 : i32
    %c0_i32_1 = arith.constant 0 : i32
    return %c0_i32, %c0_i32_0 : i32, i32
  }
  func.func @transform_37(%arg0: i32) -> (i32, i32) {
    %c0_i32 = arith.constant 0 : i32
    %c0_i32_0 = arith.constant 0 : i32
    %c0_i32_1 = arith.constant 0 : i32
    return %c0_i32, %c0_i32_0 : i32, i32
  }
  func.func @transform_38(%arg0: i32) -> (i32, i32) {
    %c0_i32 = arith.constant 0 : i32
    %c0_i32_0 = arith.constant 0 : i32
    %c0_i32_1 = arith.constant 0 : i32
    return %c0_i32, %c0_i32_0 : i32, i32
  }
  func.func @transform_39(%arg0: i32) -> (i32, i32) {
    %c0_i32 = arith.constant 0 : i32
    %c0_i32_0 = arith.constant 0 : i32
    %c0_i32_1 = arith.constant 0 : i32
    return %c0_i32, %c0_i32_0 : i32, i32
  }
  func.func @transform_40(%arg0: i32) -> (i32, i32) {
    %c0_i32 = arith.constant 0 : i32
    %c0_i32_0 = arith.constant 0 : i32
    %c0_i32_1 = arith.constant 0 : i32
    return %c0_i32, %c0_i32_0 : i32, i32
  }
  func.func @transform_41(%arg0: i32) -> (i32, i32) {
    %c0_i32 = arith.constant 0 : i32
    %c0_i32_0 = arith.constant 0 : i32
    %c0_i32_1 = arith.constant 0 : i32
    return %c0_i32, %c0_i32_0 : i32, i32
  }
  func.func @transform_42(%arg0: i32) -> (i32, i32) {
    %c0_i32 = arith.constant 0 : i32
    %c0_i32_0 = arith.constant 0 : i32
    %c0_i32_1 = arith.constant 0 : i32
    return %c0_i32, %c0_i32_0 : i32, i32
  }
  func.func @transform_43(%arg0: i32) -> (i32, i32) {
    %c0_i32 = arith.constant 0 : i32
    %c0_i32_0 = arith.constant 0 : i32
    %c0_i32_1 = arith.constant 0 : i32
    return %c0_i32, %c0_i32_0 : i32, i32
  }
  func.func @transform_44(%arg0: i32) -> (i32, i32) {
    %c0_i32 = arith.constant 0 : i32
    %c0_i32_0 = arith.constant 0 : i32
    %c0_i32_1 = arith.constant 0 : i32
    return %c0_i32, %c0_i32_0 : i32, i32
  }
  func.func @transform_45(%arg0: i32) -> (i32, i32) {
    %c0_i32 = arith.constant 0 : i32
    %c0_i32_0 = arith.constant 0 : i32
    %c0_i32_1 = arith.constant 0 : i32
    return %c0_i32, %c0_i32_0 : i32, i32
  }
  func.func @transform_46(%arg0: i32) -> (i32, i32) {
    %c0_i32 = arith.constant 0 : i32
    %c0_i32_0 = arith.constant 0 : i32
    %c0_i32_1 = arith.constant 0 : i32
    return %c0_i32, %c0_i32_0 : i32, i32
  }
  func.func @transform_47(%arg0: i32) -> (i32, i32) {
    %c0_i32 = arith.constant 0 : i32
    %c0_i32_0 = arith.constant 0 : i32
    %c0_i32_1 = arith.constant 0 : i32
    return %c0_i32, %c0_i32_0 : i32, i32
  }
  func.func @transform_48(%arg0: i32) -> (i32, i32) {
    %c0_i32 = arith.constant 0 : i32
    %c0_i32_0 = arith.constant 0 : i32
    %c0_i32_1 = arith.constant 0 : i32
    return %c0_i32, %c0_i32_0 : i32, i32
  }
  func.func @transform_49(%arg0: i32) -> (i32, i32) {
    %c0_i32 = arith.constant 0 : i32
    %c0_i32_0 = arith.constant 0 : i32
    %c0_i32_1 = arith.constant 0 : i32
    return %c0_i32, %c0_i32_0 : i32, i32
  }
  func.func @transform_50(%arg0: i32) -> (i32, i32) {
    %c0_i32 = arith.constant 0 : i32
    %c0_i32_0 = arith.constant 0 : i32
    %c0_i32_1 = arith.constant 0 : i32
    return %c0_i32, %c0_i32_0 : i32, i32
  }
  func.func @transform_51(%arg0: i32) -> (i32, i32) {
    %c0_i32 = arith.constant 0 : i32
    %c0_i32_0 = arith.constant 0 : i32
    %c0_i32_1 = arith.constant 0 : i32
    return %c0_i32, %c0_i32_0 : i32, i32
  }
  func.func @transform_52(%arg0: i32) -> (i32, i32) {
    %c0_i32 = arith.constant 0 : i32
    %c0_i32_0 = arith.constant 0 : i32
    %c0_i32_1 = arith.constant 0 : i32
    return %c0_i32, %c0_i32_0 : i32, i32
  }
  func.func @transform_53(%arg0: i32) -> (i32, i32, i32) {
    %c0_i32 = arith.constant 0 : i32
    %c0_i32_0 = arith.constant 0 : i32
    %c0_i32_1 = arith.constant 0 : i32
    return %arg0, %c0_i32, %c0_i32_0 : i32, i32, i32
  }
}

</mosaic_0001>

<llo_original>
// kernel: npc_cls_forward.1
$region0: #{npc_cls_forward.1}
  #allocation0 [shape = 'u32[]', space=smem, size = 0x4, offset = 0x4, fixed_abs, tag = 'smem constant byte address 0x4 - core index']
  #allocation1 [shape = 'u32[72,128]{1,0:T(1,128)}', space=vmem, size = 0x9000, scoped, tag = 'internal scratch']
  %s0 = inlined_call_operand.smem [shape: u32[54], index: -1, kind: input, shape index: {}]
  %s1 = sld [smem:[%s0]]
  %s2 = scalar_lea.smem %s0, 1
  %s3 = sld [smem:[%s2]]
  %s4 = scalar_lea.smem %s0, 2
  %s5 = sld [smem:[%s4]]
  %s6 = scalar_lea.smem %s0, 3
  %s7 = sld [smem:[%s6]]
  %s8 = scalar_lea.smem %s0, 4
  %s9 = sld [smem:[%s8]]
  %s10 = scalar_lea.smem %s0, 5
  %s11 = sld [smem:[%s10]]
  %s12 = scalar_lea.smem %s0, 6
  %s13 = sld [smem:[%s12]]
  %s14 = scalar_lea.smem %s0, 7
  %s15 = sld [smem:[%s14]]
  %s16 = scalar_lea.smem %s0, 8
  %s17 = sld [smem:[%s16]]
  %s18 = scalar_lea.smem %s0, 9
  %s19 = sld [smem:[%s18]]
  %s20 = scalar_lea.smem %s0, 10
  %s21 = sld [smem:[%s20]]
  %s22 = scalar_lea.smem %s0, 11
  %s23 = sld [smem:[%s22]]
  %s24 = scalar_lea.smem %s0, 12
  %s25 = sld [smem:[%s24]]
  %s26 = scalar_lea.smem %s0, 13
  %s27 = sld [smem:[%s26]]
  %s28 = scalar_lea.smem %s0, 14
  %s29 = sld [smem:[%s28]]
  %s30 = scalar_lea.smem %s0, 15
  %s31 = sld [smem:[%s30]]
  %s32 = scalar_lea.smem %s0, 16
  %s33 = sld [smem:[%s32]]
  %s34 = scalar_lea.smem %s0, 17
  %s35 = sld [smem:[%s34]]
  %s36 = scalar_lea.smem %s0, 18
  %s37 = sld [smem:[%s36]]
  %s38 = scalar_lea.smem %s0, 19
  %s39 = sld [smem:[%s38]]
  %s40 = scalar_lea.smem %s0, 20
  %s41 = sld [smem:[%s40]]
  %s42 = scalar_lea.smem %s0, 21
  %s43 = sld [smem:[%s42]]
  %s44 = scalar_lea.smem %s0, 22
  %s45 = sld [smem:[%s44]]
  %s46 = scalar_lea.smem %s0, 23
  %s47 = sld [smem:[%s46]]
  %s48 = scalar_lea.smem %s0, 24
  %s49 = sld [smem:[%s48]]
  %s50 = scalar_lea.smem %s0, 25
  %s51 = sld [smem:[%s50]]
  %s52 = scalar_lea.smem %s0, 26
  %s53 = sld [smem:[%s52]]
  %s54 = scalar_lea.smem %s0, 27
  %s55 = sld [smem:[%s54]]
  %s56 = scalar_lea.smem %s0, 28
  %s57 = sld [smem:[%s56]]
  %s58 = scalar_lea.smem %s0, 29
  %s59 = sld [smem:[%s58]]
  %s60 = scalar_lea.smem %s0, 30
  %s61 = sld [smem:[%s60]]
  %s62 = scalar_lea.smem %s0, 31
  %s63 = sld [smem:[%s62]]
  %s64 = scalar_lea.smem %s0, 32
  %s65 = sld [smem:[%s64]]
  %s66 = scalar_lea.smem %s0, 33
  %s67 = sld [smem:[%s66]]
  %s68 = scalar_lea.smem %s0, 34
  %s69 = sld [smem:[%s68]]
  %s70 = scalar_lea.smem %s0, 35
  %s71 = sld [smem:[%s70]]
  %s72 = scalar_lea.smem %s0, 36
  %s73 = sld [smem:[%s72]]
  %s74 = scalar_lea.smem %s0, 37
  %s75 = sld [smem:[%s74]]
  %s76 = scalar_lea.smem %s0, 38
  %s77 = sld [smem:[%s76]]
  %s78 = scalar_lea.smem %s0, 39
  %s79 = sld [smem:[%s78]]
  %s80 = scalar_lea.smem %s0, 40
  %s81 = sld [smem:[%s80]]
  %s82 = scalar_lea.smem %s0, 41
  %s83 = sld [smem:[%s82]]
  %s84 = scalar_lea.smem %s0, 42
  %s85 = sld [smem:[%s84]]
  %s86 = scalar_lea.smem %s0, 43
  %s87 = sld [smem:[%s86]]
  %s88 = scalar_lea.smem %s0, 44
  %s89 = sld [smem:[%s88]]
  %s90 = scalar_lea.smem %s0, 45
  %s91 = sld [smem:[%s90]]
  %s92 = scalar_lea.smem %s0, 46
  %s93 = sld [smem:[%s92]]
  %s94 = scalar_lea.smem %s0, 47
  %s95 = sld [smem:[%s94]]
  %s96 = scalar_lea.smem %s0, 48
  %s97 = sld [smem:[%s96]]
  %s98 = scalar_lea.smem %s0, 49
  %s99 = sld [smem:[%s98]]
  %s100 = scalar_lea.smem %s0, 50
  %s101 = sld [smem:[%s100]]
  %s102 = scalar_lea.smem %s0, 51
  %s103 = sld [smem:[%s102]]
  %s104 = scalar_lea.smem %s0, 52
  %s105 = sld [smem:[%s104]]
  %s106 = scalar_lea.smem %s0, 53
  %s107 = sld [smem:[%s106]]
  %s108 = sld [smem:[#allocation0]]
  $region289: #{npc_cls_forward.1} parent=0
    _
  %s110 = ssub.s32 1, %s108
  %s111 = scalar_select 0, %s110, %s108
  $region1: #{npc_cls_forward.1} parent=0
    #allocation2 [shape = 'u8[512]{0}', space=vmem, size = 0x400, scoped, tag = 'input window, operand 35, single buffered']
    #allocation3 [shape = 's32[2]{0}', space=sflag, size = 0x8, scoped, tag = 'scoped memory for npc_cls_forward.1']
    #allocation4 [shape = 'u8[512]{0}', space=vmem, size = 0x400, scoped, tag = 'input window, operand 36, single buffered']
    #allocation5 [shape = 's32[1]{0}', space=sflag, size = 0x4, scoped, tag = 'scoped memory for npc_cls_forward.1']
    #allocation6 [shape = 'u8[512]{0}', space=vmem, size = 0x400, scoped, tag = 'input window, operand 39, single buffered']
    #allocation7 [shape = 'u8[512]{0}', space=vmem, size = 0x400, scoped, tag = 'input window, operand 40, single buffered']
    #allocation8 [shape = 's32[1]{0}', space=sflag, size = 0x4, scoped, tag = 'scoped memory for npc_cls_forward.1']
    #allocation9 [shape = 'u8[512]{0}', space=vmem, size = 0x400, scoped, tag = 'input window, operand 41, single buffered']
    #allocation10 [shape = 'u8[512]{0}', space=vmem, size = 0x400, scoped, tag = 'input window, operand 42, single buffered']
    #allocation11 [shape = 's32[1]{0}', space=sflag, size = 0x4, scoped, tag = 'scoped memory for npc_cls_forward.1']
    #allocation12 [shape = 'u8[512]{0}', space=vmem, size = 0x400, scoped, tag = 'input window, operand 45, single buffered']
    #allocation13 [shape = 'u8[512]{0}', space=vmem, size = 0x400, scoped, tag = 'input window, operand 47, single buffered']
    #allocation14 [shape = 's32[1]{0}', space=sflag, size = 0x4, scoped, tag = 'scoped memory for npc_cls_forward.1']
    #allocation15 [shape = 'u8[512]{0}', space=vmem, size = 0x400, scoped, tag = 'input window, operand 48, single buffered']
    #allocation16 [shape = 'u8[512]{0}', space=vmem, size = 0x400, scoped, tag = 'input window, operand 51, single buffered']
    #allocation17 [shape = 's32[1]{0}', space=sflag, size = 0x4, scoped, tag = 'scoped memory for npc_cls_forward.1']
    #allocation18 [shape = 'u8[512]{0}', space=vmem, size = 0x400, scoped, tag = 'input window, operand 52, single buffered']
    %112 = vsyncpa [#allocation3], 0
    %113 = vsyncpa [#allocation5], 0
    %114 = vsyncpa [#allocation8], 0
    %115 = vsyncpa [#allocation11], 0
    %116 = vsyncpa [#allocation14], 0
    %117 = vsyncpa [#allocation17], 0
    loop: start=0, step=1, limit=4
    $region2: #{npc_cls_forward.1} parent=1 // loop_pre_header
      _
    $region3: #{npc_cls_forward.1} parent=1 // loop_header
      %s119 = sphi 0, %s123
      %p120 = scmp.ge.s32.totalorder %s119, 4
      %s129 = sphi 0, %s131
      %s132 = sphi 0, %s129
      %s133 = sphi 0, %s132
      %s149 = sphi 0, %s133
      %s155 = sphi 0, %s157
      %s158 = sphi 0, %s155
      %s159 = sphi 0, %s158
      %s175 = sphi 0, %s159
      %s181 = sphi 0, %s183
      %s184 = sphi 0, %s181
      %s185 = sphi 0, %s184
      %s201 = sphi 0, %s185
      %s205 = sphi 0, %s205
      %s207 = sphi 0, %s205
      %s208 = sphi 0, %s207
      %s222 = sphi 0, %s208
      %s226 = sphi 0, %s226
      %s228 = sphi 0, %s226
      %s229 = sphi 0, %s228
      %s243 = sphi 0, %s229
      %s247 = sphi 0, %s247
      %s249 = sphi 0, %s247
      %s250 = sphi 0, %s249
      %s264 = sphi 0, %s250
      %s268 = sphi 0, %s268
      %s270 = sphi 0, %s268
      %s271 = sphi 0, %s270
      %s285 = sphi 0, %s271
      %s289 = sphi 0, %s289
      %s291 = sphi 0, %s289
      %s292 = sphi 0, %s291
      %s306 = sphi 0, %s292
      %s310 = sphi 0, %s310
      %s312 = sphi 0, %s310
      %s313 = sphi 0, %s312
      %s327 = sphi 0, %s313
      %s331 = sphi 0, %s331
      %s333 = sphi 0, %s331
      %s334 = sphi 0, %s333
      %s348 = sphi 0, %s334
      %s352 = sphi 0, %s352
      %s354 = sphi 0, %s352
      %s355 = sphi 0, %s354
      %s369 = sphi 0, %s355
      %s373 = sphi 0, %s373
      %s375 = sphi 0, %s373
      %s376 = sphi 0, %s375
      %s390 = sphi 0, %s376
      %s394 = sphi 0, %s394
      %s396 = sphi 0, %s394
      %s397 = sphi 0, %s396
      %s411 = sphi 0, %s397
      %s415 = sphi 0, %s415
      %s417 = sphi 0, %s415
      %s418 = sphi 0, %s417
      %s432 = sphi 0, %s418
      %s436 = sphi 0, %s436
      %s438 = sphi 0, %s436
      %s439 = sphi 0, %s438
      %s453 = sphi 0, %s439
      %s457 = sphi 0, %s457
      %s459 = sphi 0, %s457
      %s460 = sphi 0, %s459
      %s474 = sphi 0, %s460
      %s478 = sphi 0, %s478
      %s480 = sphi 0, %s478
      %s481 = sphi 0, %s480
      %s495 = sphi 0, %s481
      %s499 = sphi 0, %s499
      %s501 = sphi 0, %s499
      %s502 = sphi 0, %s501
      %s516 = sphi 0, %s502
      %s520 = sphi 0, %s520
      %s522 = sphi 0, %s520
      %s523 = sphi 0, %s522
      %s537 = sphi 0, %s523
      %s541 = sphi 0, %s541
      %s543 = sphi 0, %s541
      %s544 = sphi 0, %s543
      %s558 = sphi 0, %s544
      %s562 = sphi 0, %s562
      %s564 = sphi 0, %s562
      %s565 = sphi 0, %s564
      %s579 = sphi 0, %s565
      %s583 = sphi 0, %s583
      %s585 = sphi 0, %s583
      %s586 = sphi 0, %s585
      %s600 = sphi 0, %s586
      %s604 = sphi 0, %s604
      %s606 = sphi 0, %s604
      %s607 = sphi 0, %s606
      %s621 = sphi 0, %s607
      %s625 = sphi 0, %s625
      %s627 = sphi 0, %s625
      %s628 = sphi 0, %s627
      %s642 = sphi 0, %s628
      %s646 = sphi 0, %s646
      %s648 = sphi 0, %s646
      %s649 = sphi 0, %s648
      %s663 = sphi 0, %s649
      %s667 = sphi 0, %s667
      %s669 = sphi 0, %s667
      %s670 = sphi 0, %s669
      %s684 = sphi 0, %s670
      %s688 = sphi 0, %s688
      %s690 = sphi 0, %s688
      %s691 = sphi 0, %s690
      %s705 = sphi 0, %s691
      %s709 = sphi 0, %s709
      %s711 = sphi 0, %s709
      %s712 = sphi 0, %s711
      %s726 = sphi 0, %s712
      %s730 = sphi 0, %s730
      %s732 = sphi 0, %s730
      %s733 = sphi 0, %s732
      %s747 = sphi 0, %s733
      %s751 = sphi 0, %s751
      %s753 = sphi 0, %s751
      %s754 = sphi 0, %s753
      %s768 = sphi 0, %s754
      %s772 = sphi 0, %s772
      %s774 = sphi 0, %s772
      %s775 = sphi 0, %s774
      %s789 = sphi 0, %s775
      %s793 = sphi 0, %s793
      %s795 = sphi 0, %s793
      %s796 = sphi 0, %s795
      %s810 = sphi 0, %s796
      %s814 = sphi 0, %s814
      %s816 = sphi 0, %s814
      %s817 = sphi 0, %s816
      %s831 = sphi 0, %s817
      %s835 = sphi 0, %s835
      %s837 = sphi 0, %s835
      %s838 = sphi 0, %s837
      %s852 = sphi 0, %s838
      %s856 = sphi 0, %s856
      %s858 = sphi 0, %s856
      %s859 = sphi 0, %s858
      %s873 = sphi 0, %s859
      %s877 = sphi 0, %s877
      %s879 = sphi 0, %s877
      %s880 = sphi 0, %s879
      %s894 = sphi 0, %s880
      %s898 = sphi 0, %s898
      %s900 = sphi 0, %s898
      %s901 = sphi 0, %s900
      %s915 = sphi 0, %s901
      %s919 = sphi 0, %s919
      %s921 = sphi 0, %s919
      %s922 = sphi 0, %s921
      %s936 = sphi 0, %s922
      %s940 = sphi 0, %s940
      %s942 = sphi 0, %s940
      %s943 = sphi 0, %s942
      %s957 = sphi 0, %s943
      %s961 = sphi 0, %s961
      %s963 = sphi 0, %s961
      %s964 = sphi 0, %s963
      %s978 = sphi 0, %s964
      %s982 = sphi 0, %s982
      %s984 = sphi 0, %s982
      %s985 = sphi 0, %s984
      %s999 = sphi 0, %s985
      %s1003 = sphi 0, %s1003
      %s1005 = sphi 0, %s1003
      %s1006 = sphi 0, %s1005
      %s1020 = sphi 0, %s1006
      %s1024 = sphi 0, %s1024
      %s1026 = sphi 0, %s1024
      %s1027 = sphi 0, %s1026
      %s1041 = sphi 0, %s1027
      %s1045 = sphi 0, %s1045
      %s1047 = sphi 0, %s1045
      %s1048 = sphi 0, %s1047
      %s1062 = sphi 0, %s1048
      %s1066 = sphi 0, %s1066
      %s1068 = sphi 0, %s1066
      %s1069 = sphi 0, %s1068
      %s1083 = sphi 0, %s1069
      %s1087 = sphi 0, %s1087
      %s1089 = sphi 0, %s1087
      %s1090 = sphi 0, %s1089
      %s1104 = sphi 0, %s1090
      %s1108 = sphi 0, %s1108
      %s1110 = sphi 0, %s1108
      %s1111 = sphi 0, %s1110
      %s1125 = sphi 0, %s1111
      %s1129 = sphi 0, %s1129
      %s1131 = sphi 0, %s1129
      %s1132 = sphi 0, %s1131
      %s1146 = sphi 0, %s1132
      %s1150 = sphi 0, %s1150
      %s1152 = sphi 0, %s1150
      %s1153 = sphi 0, %s1152
      %s1167 = sphi 0, %s1153
      %s1171 = sphi 0, %s1171
      %s1173 = sphi 0, %s1171
      %s1174 = sphi 0, %s1173
      %s1188 = sphi 0, %s1174
      %s1192 = sphi 0, %s1192
      %s1194 = sphi 0, %s1192
      %s1195 = sphi 0, %s1194
      %s1209 = sphi 0, %s1195
      %s1213 = sphi 0, %s1213
      %s1215 = sphi 0, %s1213
      %s1216 = sphi 0, %s1215
      %s1230 = sphi 0, %s1216
      %s1234 = sphi 0, %s1234
      %s1236 = sphi 0, %s1234
      %s1237 = sphi 0, %s1236
      %s1251 = sphi 0, %s1237
      %s1257 = sphi 0, %s1259
      %s1260 = sphi 0, %s1257
      %s1261 = sphi 0, %s1260
      %s1277 = sphi 0, %s1261
    $region4: #{npc_cls_forward.1} parent=1 // loop_header_branch
      %122 = sbr.rel (%p120) target = $region8
    $region5: #{npc_cls_forward.1} parent=1 // loop_body
      %s124 = ssub.s32 %s119, 1
      %s125 = ssub.s32 %s119, 2
      %s126 = sadd.s32 %s119, 1
      %s127 = ssub.s32 %s119, %s126
      %p128 = scmp.eq.s32.totalorder %s127, 0
      %s130 = sadd.s32 %s129, 1
      %s131 = scalar_select %p128, %s129, %s130
      %p134 = pneg %p128
      %p135 = scmp.eq.s32.totalorder %s119, 1
      %p136 = por %p134, %p135
      %p137 = scmp.ne.s32.totalorder %s129, %s132
      %p138 = scmp.eq.s32.totalorder %s119, 0
      %p139 = por %p137, %p138
      %p140 = scmp.ne.s32.totalorder %s129, %s132
      %p141 = scmp.eq.s32.totalorder %s124, 1
      %p142 = por %p140, %p141
      %p143 = scmp.ne.s32.totalorder %s132, %s133
      %p144 = scmp.eq.s32.totalorder %s124, 0
      %p145 = por %p143, %p144
      %p146 = scmp.ne.s32.totalorder %s132, %s133
      %p147 = scmp.eq.s32.totalorder %s125, 1
      %p148 = por %p146, %p147
      %p150 = scmp.ne.s32.totalorder %s133, %s149
      %p151 = scmp.eq.s32.totalorder %s125, 0
      %p152 = por %p150, %p151
      %s153 = ssub.s32 %s119, %s126
      %p154 = scmp.eq.s32.totalorder %s153, 0
      %s156 = sadd.s32 %s155, 1
      %s157 = scalar_select %p154, %s155, %s156
      %p160 = pneg %p154
      %p161 = scmp.eq.s32.totalorder %s119, 1
      %p162 = por %p160, %p161
      %p163 = scmp.ne.s32.totalorder %s155, %s158
      %p164 = scmp.eq.s32.totalorder %s119, 0
      %p165 = por %p163, %p164
      %p166 = scmp.ne.s32.totalorder %s155, %s158
      %p167 = scmp.eq.s32.totalorder %s124, 1
      %p168 = por %p166, %p167
      %p169 = scmp.ne.s32.totalorder %s158, %s159
      %p170 = scmp.eq.s32.totalorder %s124, 0
      %p171 = por %p169, %p170
      %p172 = scmp.ne.s32.totalorder %s158, %s159
      %p173 = scmp.eq.s32.totalorder %s125, 1
      %p174 = por %p172, %p173
      %p176 = scmp.ne.s32.totalorder %s159, %s175
      %p177 = scmp.eq.s32.totalorder %s125, 0
      %p178 = por %p176, %p177
      %s179 = ssub.s32 %s119, %s126
      %p180 = scmp.eq.s32.totalorder %s179, 0
      %s182 = sadd.s32 %s181, 1
      %s183 = scalar_select %p180, %s181, %s182
      %p186 = pneg %p180
      %p187 = scmp.eq.s32.totalorder %s119, 1
      %p188 = por %p186, %p187
      %p189 = scmp.ne.s32.totalorder %s181, %s184
      %p190 = scmp.eq.s32.totalorder %s119, 0
      %p191 = por %p189, %p190
      %p192 = scmp.ne.s32.totalorder %s181, %s184
      %p193 = scmp.eq.s32.totalorder %s124, 1
      %p194 = por %p192, %p193
      %p195 = scmp.ne.s32.totalorder %s184, %s185
      %p196 = scmp.eq.s32.totalorder %s124, 0
      %p197 = por %p195, %p196
      %p198 = scmp.ne.s32.totalorder %s184, %s185
      %p199 = scmp.eq.s32.totalorder %s125, 1
      %p200 = por %p198, %p199
      %p202 = scmp.ne.s32.totalorder %s185, %s201
      %p203 = scmp.eq.s32.totalorder %s125, 0
      %p204 = por %p202, %p203
      %s206 = sadd.s32 %s205, 1
      %p209 = scmp.eq.s32.totalorder %s119, 1
      %p210 = scmp.ne.s32.totalorder %s205, %s207
      %p211 = scmp.eq.s32.totalorder %s119, 0
      %p212 = por %p210, %p211
      %p213 = scmp.ne.s32.totalorder %s205, %s207
      %p214 = scmp.eq.s32.totalorder %s124, 1
      %p215 = por %p213, %p214
      %p216 = scmp.ne.s32.totalorder %s207, %s208
      %p217 = scmp.eq.s32.totalorder %s124, 0
      %p218 = por %p216, %p217
      %p219 = scmp.ne.s32.totalorder %s207, %s208
      %p220 = scmp.eq.s32.totalorder %s125, 1
      %p221 = por %p219, %p220
      %p223 = scmp.ne.s32.totalorder %s208, %s222
      %p224 = scmp.eq.s32.totalorder %s125, 0
      %p225 = por %p223, %p224
      %s227 = sadd.s32 %s226, 1
      %p230 = scmp.eq.s32.totalorder %s119, 1
      %p231 = scmp.ne.s32.totalorder %s226, %s228
      %p232 = scmp.eq.s32.totalorder %s119, 0
      %p233 = por %p231, %p232
      %p234 = scmp.ne.s32.totalorder %s226, %s228
      %p235 = scmp.eq.s32.totalorder %s124, 1
      %p236 = por %p234, %p235
      %p237 = scmp.ne.s32.totalorder %s228, %s229
      %p238 = scmp.eq.s32.totalorder %s124, 0
      %p239 = por %p237, %p238
      %p240 = scmp.ne.s32.totalorder %s228, %s229
      %p241 = scmp.eq.s32.totalorder %s125, 1
      %p242 = por %p240, %p241
      %p244 = scmp.ne.s32.totalorder %s229, %s243
      %p245 = scmp.eq.s32.totalorder %s125, 0
      %p246 = por %p244, %p245
      %s248 = sadd.s32 %s247, 1
      %p251 = scmp.eq.s32.totalorder %s119, 1
      %p252 = scmp.ne.s32.totalorder %s247, %s249
      %p253 = scmp.eq.s32.totalorder %s119, 0
      %p254 = por %p252, %p253
      %p255 = scmp.ne.s32.totalorder %s247, %s249
      %p256 = scmp.eq.s32.totalorder %s124, 1
      %p257 = por %p255, %p256
      %p258 = scmp.ne.s32.totalorder %s249, %s250
      %p259 = scmp.eq.s32.totalorder %s124, 0
      %p260 = por %p258, %p259
      %p261 = scmp.ne.s32.totalorder %s249, %s250
      %p262 = scmp.eq.s32.totalorder %s125, 1
      %p263 = por %p261, %p262
      %p265 = scmp.ne.s32.totalorder %s250, %s264
      %p266 = scmp.eq.s32.totalorder %s125, 0
      %p267 = por %p265, %p266
      %s269 = sadd.s32 %s268, 1
      %p272 = scmp.eq.s32.totalorder %s119, 1
      %p273 = scmp.ne.s32.totalorder %s268, %s270
      %p274 = scmp.eq.s32.totalorder %s119, 0
      %p275 = por %p273, %p274
      %p276 = scmp.ne.s32.totalorder %s268, %s270
      %p277 = scmp.eq.s32.totalorder %s124, 1
      %p278 = por %p276, %p277
      %p279 = scmp.ne.s32.totalorder %s270, %s271
      %p280 = scmp.eq.s32.totalorder %s124, 0
      %p281 = por %p279, %p280
      %p282 = scmp.ne.s32.totalorder %s270, %s271
      %p283 = scmp.eq.s32.totalorder %s125, 1
      %p284 = por %p282, %p283
      %p286 = scmp.ne.s32.totalorder %s271, %s285
      %p287 = scmp.eq.s32.totalorder %s125, 0
      %p288 = por %p286, %p287
      %s290 = sadd.s32 %s289, 1
      %p293 = scmp.eq.s32.totalorder %s119, 1
      %p294 = scmp.ne.s32.totalorder %s289, %s291
      %p295 = scmp.eq.s32.totalorder %s119, 0
      %p296 = por %p294, %p295
      %p297 = scmp.ne.s32.totalorder %s289, %s291
      %p298 = scmp.eq.s32.totalorder %s124, 1
      %p299 = por %p297, %p298
      %p300 = scmp.ne.s32.totalorder %s291, %s292
      %p301 = scmp.eq.s32.totalorder %s124, 0
      %p302 = por %p300, %p301
      %p303 = scmp.ne.s32.totalorder %s291, %s292
      %p304 = scmp.eq.s32.totalorder %s125, 1
      %p305 = por %p303, %p304
      %p307 = scmp.ne.s32.totalorder %s292, %s306
      %p308 = scmp.eq.s32.totalorder %s125, 0
      %p309 = por %p307, %p308
      %s311 = sadd.s32 %s310, 1
      %p314 = scmp.eq.s32.totalorder %s119, 1
      %p315 = scmp.ne.s32.totalorder %s310, %s312
      %p316 = scmp.eq.s32.totalorder %s119, 0
      %p317 = por %p315, %p316
      %p318 = scmp.ne.s32.totalorder %s310, %s312
      %p319 = scmp.eq.s32.totalorder %s124, 1
      %p320 = por %p318, %p319
      %p321 = scmp.ne.s32.totalorder %s312, %s313
      %p322 = scmp.eq.s32.totalorder %s124, 0
      %p323 = por %p321, %p322
      %p324 = scmp.ne.s32.totalorder %s312, %s313
      %p325 = scmp.eq.s32.totalorder %s125, 1
      %p326 = por %p324, %p325
      %p328 = scmp.ne.s32.totalorder %s313, %s327
      %p329 = scmp.eq.s32.totalorder %s125, 0
      %p330 = por %p328, %p329
      %s332 = sadd.s32 %s331, 1
      %p335 = scmp.eq.s32.totalorder %s119, 1
      %p336 = scmp.ne.s32.totalorder %s331, %s333
      %p337 = scmp.eq.s32.totalorder %s119, 0
      %p338 = por %p336, %p337
      %p339 = scmp.ne.s32.totalorder %s331, %s333
      %p340 = scmp.eq.s32.totalorder %s124, 1
      %p341 = por %p339, %p340
      %p342 = scmp.ne.s32.totalorder %s333, %s334
      %p343 = scmp.eq.s32.totalorder %s124, 0
      %p344 = por %p342, %p343
      %p345 = scmp.ne.s32.totalorder %s333, %s334
      %p346 = scmp.eq.s32.totalorder %s125, 1
      %p347 = por %p345, %p346
      %p349 = scmp.ne.s32.totalorder %s334, %s348
      %p350 = scmp.eq.s32.totalorder %s125, 0
      %p351 = por %p349, %p350
      %s353 = sadd.s32 %s352, 1
      %p356 = scmp.eq.s32.totalorder %s119, 1
      %p357 = scmp.ne.s32.totalorder %s352, %s354
      %p358 = scmp.eq.s32.totalorder %s119, 0
      %p359 = por %p357, %p358
      %p360 = scmp.ne.s32.totalorder %s352, %s354
      %p361 = scmp.eq.s32.totalorder %s124, 1
      %p362 = por %p360, %p361
      %p363 = scmp.ne.s32.totalorder %s354, %s355
      %p364 = scmp.eq.s32.totalorder %s124, 0
      %p365 = por %p363, %p364
      %p366 = scmp.ne.s32.totalorder %s354, %s355
      %p367 = scmp.eq.s32.totalorder %s125, 1
      %p368 = por %p366, %p367
      %p370 = scmp.ne.s32.totalorder %s355, %s369
      %p371 = scmp.eq.s32.totalorder %s125, 0
      %p372 = por %p370, %p371
      %s374 = sadd.s32 %s373, 1
      %p377 = scmp.eq.s32.totalorder %s119, 1
      %p378 = scmp.ne.s32.totalorder %s373, %s375
      %p379 = scmp.eq.s32.totalorder %s119, 0
      %p380 = por %p378, %p379
      %p381 = scmp.ne.s32.totalorder %s373, %s375
      %p382 = scmp.eq.s32.totalorder %s124, 1
      %p383 = por %p381, %p382
      %p384 = scmp.ne.s32.totalorder %s375, %s376
      %p385 = scmp.eq.s32.totalorder %s124, 0
      %p386 = por %p384, %p385
      %p387 = scmp.ne.s32.totalorder %s375, %s376
      %p388 = scmp.eq.s32.totalorder %s125, 1
      %p389 = por %p387, %p388
      %p391 = scmp.ne.s32.totalorder %s376, %s390
      %p392 = scmp.eq.s32.totalorder %s125, 0
      %p393 = por %p391, %p392
      %s395 = sadd.s32 %s394, 1
      %p398 = scmp.eq.s32.totalorder %s119, 1
      %p399 = scmp.ne.s32.totalorder %s394, %s396
      %p400 = scmp.eq.s32.totalorder %s119, 0
      %p401 = por %p399, %p400
      %p402 = scmp.ne.s32.totalorder %s394, %s396
      %p403 = scmp.eq.s32.totalorder %s124, 1
      %p404 = por %p402, %p403
      %p405 = scmp.ne.s32.totalorder %s396, %s397
      %p406 = scmp.eq.s32.totalorder %s124, 0
      %p407 = por %p405, %p406
      %p408 = scmp.ne.s32.totalorder %s396, %s397
      %p409 = scmp.eq.s32.totalorder %s125, 1
      %p410 = por %p408, %p409
      %p412 = scmp.ne.s32.totalorder %s397, %s411
      %p413 = scmp.eq.s32.totalorder %s125, 0
      %p414 = por %p412, %p413
      %s416 = sadd.s32 %s415, 1
      %p419 = scmp.eq.s32.totalorder %s119, 1
      %p420 = scmp.ne.s32.totalorder %s415, %s417
      %p421 = scmp.eq.s32.totalorder %s119, 0
      %p422 = por %p420, %p421
      %p423 = scmp.ne.s32.totalorder %s415, %s417
      %p424 = scmp.eq.s32.totalorder %s124, 1
      %p425 = por %p423, %p424
      %p426 = scmp.ne.s32.totalorder %s417, %s418
      %p427 = scmp.eq.s32.totalorder %s124, 0
      %p428 = por %p426, %p427
      %p429 = scmp.ne.s32.totalorder %s417, %s418
      %p430 = scmp.eq.s32.totalorder %s125, 1
      %p431 = por %p429, %p430
      %p433 = scmp.ne.s32.totalorder %s418, %s432
      %p434 = scmp.eq.s32.totalorder %s125, 0
      %p435 = por %p433, %p434
      %s437 = sadd.s32 %s436, 1
      %p440 = scmp.eq.s32.totalorder %s119, 1
      %p441 = scmp.ne.s32.totalorder %s436, %s438
      %p442 = scmp.eq.s32.totalorder %s119, 0
      %p443 = por %p441, %p442
      %p444 = scmp.ne.s32.totalorder %s436, %s438
      %p445 = scmp.eq.s32.totalorder %s124, 1
      %p446 = por %p444, %p445
      %p447 = scmp.ne.s32.totalorder %s438, %s439
      %p448 = scmp.eq.s32.totalorder %s124, 0
      %p449 = por %p447, %p448
      %p450 = scmp.ne.s32.totalorder %s438, %s439
      %p451 = scmp.eq.s32.totalorder %s125, 1
      %p452 = por %p450, %p451
      %p454 = scmp.ne.s32.totalorder %s439, %s453
      %p455 = scmp.eq.s32.totalorder %s125, 0
      %p456 = por %p454, %p455
      %s458 = sadd.s32 %s457, 1
      %p461 = scmp.eq.s32.totalorder %s119, 1
      %p462 = scmp.ne.s32.totalorder %s457, %s459
      %p463 = scmp.eq.s32.totalorder %s119, 0
      %p464 = por %p462, %p463
      %p465 = scmp.ne.s32.totalorder %s457, %s459
      %p466 = scmp.eq.s32.totalorder %s124, 1
      %p467 = por %p465, %p466
      %p468 = scmp.ne.s32.totalorder %s459, %s460
      %p469 = scmp.eq.s32.totalorder %s124, 0
      %p470 = por %p468, %p469
      %p471 = scmp.ne.s32.totalorder %s459, %s460
      %p472 = scmp.eq.s32.totalorder %s125, 1
      %p473 = por %p471, %p472
      %p475 = scmp.ne.s32.totalorder %s460, %s474
      %p476 = scmp.eq.s32.totalorder %s125, 0
      %p477 = por %p475, %p476
      %s479 = sadd.s32 %s478, 1
      %p482 = scmp.eq.s32.totalorder %s119, 1
      %p483 = scmp.ne.s32.totalorder %s478, %s480
      %p484 = scmp.eq.s32.totalorder %s119, 0
      %p485 = por %p483, %p484
      %p486 = scmp.ne.s32.totalorder %s478, %s480
      %p487 = scmp.eq.s32.totalorder %s124, 1
      %p488 = por %p486, %p487
      %p489 = scmp.ne.s32.totalorder %s480, %s481
      %p490 = scmp.eq.s32.totalorder %s124, 0
      %p491 = por %p489, %p490
      %p492 = scmp.ne.s32.totalorder %s480, %s481
      %p493 = scmp.eq.s32.totalorder %s125, 1
      %p494 = por %p492, %p493
      %p496 = scmp.ne.s32.totalorder %s481, %s495
      %p497 = scmp.eq.s32.totalorder %s125, 0
      %p498 = por %p496, %p497
      %s500 = sadd.s32 %s499, 1
      %p503 = scmp.eq.s32.totalorder %s119, 1
      %p504 = scmp.ne.s32.totalorder %s499, %s501
      %p505 = scmp.eq.s32.totalorder %s119, 0
      %p506 = por %p504, %p505
      %p507 = scmp.ne.s32.totalorder %s499, %s501
      %p508 = scmp.eq.s32.totalorder %s124, 1
      %p509 = por %p507, %p508
      %p510 = scmp.ne.s32.totalorder %s501, %s502
      %p511 = scmp.eq.s32.totalorder %s124, 0
      %p512 = por %p510, %p511
      %p513 = scmp.ne.s32.totalorder %s501, %s502
      %p514 = scmp.eq.s32.totalorder %s125, 1
      %p515 = por %p513, %p514
      %p517 = scmp.ne.s32.totalorder %s502, %s516
      %p518 = scmp.eq.s32.totalorder %s125, 0
      %p519 = por %p517, %p518
      %s521 = sadd.s32 %s520, 1
      %p524 = scmp.eq.s32.totalorder %s119, 1
      %p525 = scmp.ne.s32.totalorder %s520, %s522
      %p526 = scmp.eq.s32.totalorder %s119, 0
      %p527 = por %p525, %p526
      %p528 = scmp.ne.s32.totalorder %s520, %s522
      %p529 = scmp.eq.s32.totalorder %s124, 1
      %p530 = por %p528, %p529
      %p531 = scmp.ne.s32.totalorder %s522, %s523
      %p532 = scmp.eq.s32.totalorder %s124, 0
      %p533 = por %p531, %p532
      %p534 = scmp.ne.s32.totalorder %s522, %s523
      %p535 = scmp.eq.s32.totalorder %s125, 1
      %p536 = por %p534, %p535
      %p538 = scmp.ne.s32.totalorder %s523, %s537
      %p539 = scmp.eq.s32.totalorder %s125, 0
      %p540 = por %p538, %p539
      %s542 = sadd.s32 %s541, 1
      %p545 = scmp.eq.s32.totalorder %s119, 1
      %p546 = scmp.ne.s32.totalorder %s541, %s543
      %p547 = scmp.eq.s32.totalorder %s119, 0
      %p548 = por %p546, %p547
      %p549 = scmp.ne.s32.totalorder %s541, %s543
      %p550 = scmp.eq.s32.totalorder %s124, 1
      %p551 = por %p549, %p550
      %p552 = scmp.ne.s32.totalorder %s543, %s544
      %p553 = scmp.eq.s32.totalorder %s124, 0
      %p554 = por %p552, %p553
      %p555 = scmp.ne.s32.totalorder %s543, %s544
      %p556 = scmp.eq.s32.totalorder %s125, 1
      %p557 = por %p555, %p556
      %p559 = scmp.ne.s32.totalorder %s544, %s558
      %p560 = scmp.eq.s32.totalorder %s125, 0
      %p561 = por %p559, %p560
      %s563 = sadd.s32 %s562, 1
      %p566 = scmp.eq.s32.totalorder %s119, 1
      %p567 = scmp.ne.s32.totalorder %s562, %s564
      %p568 = scmp.eq.s32.totalorder %s119, 0
      %p569 = por %p567, %p568
      %p570 = scmp.ne.s32.totalorder %s562, %s564
      %p571 = scmp.eq.s32.totalorder %s124, 1
      %p572 = por %p570, %p571
      %p573 = scmp.ne.s32.totalorder %s564, %s565
      %p574 = scmp.eq.s32.totalorder %s124, 0
      %p575 = por %p573, %p574
      %p576 = scmp.ne.s32.totalorder %s564, %s565
      %p577 = scmp.eq.s32.totalorder %s125, 1
      %p578 = por %p576, %p577
      %p580 = scmp.ne.s32.totalorder %s565, %s579
      %p581 = scmp.eq.s32.totalorder %s125, 0
      %p582 = por %p580, %p581
      %s584 = sadd.s32 %s583, 1
      %p587 = scmp.eq.s32.totalorder %s119, 1
      %p588 = scmp.ne.s32.totalorder %s583, %s585
      %p589 = scmp.eq.s32.totalorder %s119, 0
      %p590 = por %p588, %p589
      %p591 = scmp.ne.s32.totalorder %s583, %s585
      %p592 = scmp.eq.s32.totalorder %s124, 1
      %p593 = por %p591, %p592
      %p594 = scmp.ne.s32.totalorder %s585, %s586
      %p595 = scmp.eq.s32.totalorder %s124, 0
      %p596 = por %p594, %p595
      %p597 = scmp.ne.s32.totalorder %s585, %s586
      %p598 = scmp.eq.s32.totalorder %s125, 1
      %p599 = por %p597, %p598
      %p601 = scmp.ne.s32.totalorder %s586, %s600
      %p602 = scmp.eq.s32.totalorder %s125, 0
      %p603 = por %p601, %p602
      %s605 = sadd.s32 %s604, 1
      %p608 = scmp.eq.s32.totalorder %s119, 1
      %p609 = scmp.ne.s32.totalorder %s604, %s606
      %p610 = scmp.eq.s32.totalorder %s119, 0
      %p611 = por %p609, %p610
      %p612 = scmp.ne.s32.totalorder %s604, %s606
      %p613 = scmp.eq.s32.totalorder %s124, 1
      %p614 = por %p612, %p613
      %p615 = scmp.ne.s32.totalorder %s606, %s607
      %p616 = scmp.eq.s32.totalorder %s124, 0
      %p617 = por %p615, %p616
      %p618 = scmp.ne.s32.totalorder %s606, %s607
      %p619 = scmp.eq.s32.totalorder %s125, 1
      %p620 = por %p618, %p619
      %p622 = scmp.ne.s32.totalorder %s607, %s621
      %p623 = scmp.eq.s32.totalorder %s125, 0
      %p624 = por %p622, %p623
      %s626 = sadd.s32 %s625, 1
      %p629 = scmp.eq.s32.totalorder %s119, 1
      %p630 = scmp.ne.s32.totalorder %s625, %s627
      %p631 = scmp.eq.s32.totalorder %s119, 0
      %p632 = por %p630, %p631
      %p633 = scmp.ne.s32.totalorder %s625, %s627
      %p634 = scmp.eq.s32.totalorder %s124, 1
      %p635 = por %p633, %p634
      %p636 = scmp.ne.s32.totalorder %s627, %s628
      %p637 = scmp.eq.s32.totalorder %s124, 0
      %p638 = por %p636, %p637
      %p639 = scmp.ne.s32.totalorder %s627, %s628
      %p640 = scmp.eq.s32.totalorder %s125, 1
      %p641 = por %p639, %p640
      %p643 = scmp.ne.s32.totalorder %s628, %s642
      %p644 = scmp.eq.s32.totalorder %s125, 0
      %p645 = por %p643, %p644
      %s647 = sadd.s32 %s646, 1
      %p650 = scmp.eq.s32.totalorder %s119, 1
      %p651 = scmp.ne.s32.totalorder %s646, %s648
      %p652 = scmp.eq.s32.totalorder %s119, 0
      %p653 = por %p651, %p652
      %p654 = scmp.ne.s32.totalorder %s646, %s648
      %p655 = scmp.eq.s32.totalorder %s124, 1
      %p656 = por %p654, %p655
      %p657 = scmp.ne.s32.totalorder %s648, %s649
      %p658 = scmp.eq.s32.totalorder %s124, 0
      %p659 = por %p657, %p658
      %p660 = scmp.ne.s32.totalorder %s648, %s649
      %p661 = scmp.eq.s32.totalorder %s125, 1
      %p662 = por %p660, %p661
      %p664 = scmp.ne.s32.totalorder %s649, %s663
      %p665 = scmp.eq.s32.totalorder %s125, 0
      %p666 = por %p664, %p665
      %s668 = sadd.s32 %s667, 1
      %p671 = scmp.eq.s32.totalorder %s119, 1
      %p672 = scmp.ne.s32.totalorder %s667, %s669
      %p673 = scmp.eq.s32.totalorder %s119, 0
      %p674 = por %p672, %p673
      %p675 = scmp.ne.s32.totalorder %s667, %s669
      %p676 = scmp.eq.s32.totalorder %s124, 1
      %p677 = por %p675, %p676
      %p678 = scmp.ne.s32.totalorder %s669, %s670
      %p679 = scmp.eq.s32.totalorder %s124, 0
      %p680 = por %p678, %p679
      %p681 = scmp.ne.s32.totalorder %s669, %s670
      %p682 = scmp.eq.s32.totalorder %s125, 1
      %p683 = por %p681, %p682
      %p685 = scmp.ne.s32.totalorder %s670, %s684
      %p686 = scmp.eq.s32.totalorder %s125, 0
      %p687 = por %p685, %p686
      %s689 = sadd.s32 %s688, 1
      %p692 = scmp.eq.s32.totalorder %s119, 1
      %p693 = scmp.ne.s32.totalorder %s688, %s690
      %p694 = scmp.eq.s32.totalorder %s119, 0
      %p695 = por %p693, %p694
      %p696 = scmp.ne.s32.totalorder %s688, %s690
      %p697 = scmp.eq.s32.totalorder %s124, 1
      %p698 = por %p696, %p697
      %p699 = scmp.ne.s32.totalorder %s690, %s691
      %p700 = scmp.eq.s32.totalorder %s124, 0
      %p701 = por %p699, %p700
      %p702 = scmp.ne.s32.totalorder %s690, %s691
      %p703 = scmp.eq.s32.totalorder %s125, 1
      %p704 = por %p702, %p703
      %p706 = scmp.ne.s32.totalorder %s691, %s705
      %p707 = scmp.eq.s32.totalorder %s125, 0
      %p708 = por %p706, %p707
      %s710 = sadd.s32 %s709, 1
      %p713 = scmp.eq.s32.totalorder %s119, 1
      %p714 = scmp.ne.s32.totalorder %s709, %s711
      %p715 = scmp.eq.s32.totalorder %s119, 0
      %p716 = por %p714, %p715
      %p717 = scmp.ne.s32.totalorder %s709, %s711
      %p718 = scmp.eq.s32.totalorder %s124, 1
      %p719 = por %p717, %p718
      %p720 = scmp.ne.s32.totalorder %s711, %s712
      %p721 = scmp.eq.s32.totalorder %s124, 0
      %p722 = por %p720, %p721
      %p723 = scmp.ne.s32.totalorder %s711, %s712
      %p724 = scmp.eq.s32.totalorder %s125, 1
      %p725 = por %p723, %p724
      %p727 = scmp.ne.s32.totalorder %s712, %s726
      %p728 = scmp.eq.s32.totalorder %s125, 0
      %p729 = por %p727, %p728
      %s731 = sadd.s32 %s730, 1
      %p734 = scmp.eq.s32.totalorder %s119, 1
      %p735 = scmp.ne.s32.totalorder %s730, %s732
      %p736 = scmp.eq.s32.totalorder %s119, 0
      %p737 = por %p735, %p736
      %p738 = scmp.ne.s32.totalorder %s730, %s732
      %p739 = scmp.eq.s32.totalorder %s124, 1
      %p740 = por %p738, %p739
      %p741 = scmp.ne.s32.totalorder %s732, %s733
      %p742 = scmp.eq.s32.totalorder %s124, 0
      %p743 = por %p741, %p742
      %p744 = scmp.ne.s32.totalorder %s732, %s733
      %p745 = scmp.eq.s32.totalorder %s125, 1
      %p746 = por %p744, %p745
      %p748 = scmp.ne.s32.totalorder %s733, %s747
      %p749 = scmp.eq.s32.totalorder %s125, 0
      %p750 = por %p748, %p749
      %s752 = sadd.s32 %s751, 1
      %p755 = scmp.eq.s32.totalorder %s119, 1
      %p756 = scmp.ne.s32.totalorder %s751, %s753
      %p757 = scmp.eq.s32.totalorder %s119, 0
      %p758 = por %p756, %p757
      %p759 = scmp.ne.s32.totalorder %s751, %s753
      %p760 = scmp.eq.s32.totalorder %s124, 1
      %p761 = por %p759, %p760
      %p762 = scmp.ne.s32.totalorder %s753, %s754
      %p763 = scmp.eq.s32.totalorder %s124, 0
      %p764 = por %p762, %p763
      %p765 = scmp.ne.s32.totalorder %s753, %s754
      %p766 = scmp.eq.s32.totalorder %s125, 1
      %p767 = por %p765, %p766
      %p769 = scmp.ne.s32.totalorder %s754, %s768
      %p770 = scmp.eq.s32.totalorder %s125, 0
      %p771 = por %p769, %p770
      %s773 = sadd.s32 %s772, 1
      %p776 = scmp.eq.s32.totalorder %s119, 1
      %p777 = scmp.ne.s32.totalorder %s772, %s774
      %p778 = scmp.eq.s32.totalorder %s119, 0
      %p779 = por %p777, %p778
      %p780 = scmp.ne.s32.totalorder %s772, %s774
      %p781 = scmp.eq.s32.totalorder %s124, 1
      %p782 = por %p780, %p781
      %p783 = scmp.ne.s32.totalorder %s774, %s775
      %p784 = scmp.eq.s32.totalorder %s124, 0
      %p785 = por %p783, %p784
      %p786 = scmp.ne.s32.totalorder %s774, %s775
      %p787 = scmp.eq.s32.totalorder %s125, 1
      %p788 = por %p786, %p787
      %p790 = scmp.ne.s32.totalorder %s775, %s789
      %p791 = scmp.eq.s32.totalorder %s125, 0
      %p792 = por %p790, %p791
      %s794 = sadd.s32 %s793, 1
      %p797 = scmp.eq.s32.totalorder %s119, 1
      %p798 = scmp.ne.s32.totalorder %s793, %s795
      %p799 = scmp.eq.s32.totalorder %s119, 0
      %p800 = por %p798, %p799
      %p801 = scmp.ne.s32.totalorder %s793, %s795
      %p802 = scmp.eq.s32.totalorder %s124, 1
      %p803 = por %p801, %p802
      %p804 = scmp.ne.s32.totalorder %s795, %s796
      %p805 = scmp.eq.s32.totalorder %s124, 0
      %p806 = por %p804, %p805
      %p807 = scmp.ne.s32.totalorder %s795, %s796
      %p808 = scmp.eq.s32.totalorder %s125, 1
      %p809 = por %p807, %p808
      %p811 = scmp.ne.s32.totalorder %s796, %s810
      %p812 = scmp.eq.s32.totalorder %s125, 0
      %p813 = por %p811, %p812
      %s815 = sadd.s32 %s814, 1
      %p818 = scmp.eq.s32.totalorder %s119, 1
      %p819 = scmp.ne.s32.totalorder %s814, %s816
      %p820 = scmp.eq.s32.totalorder %s119, 0
      %p821 = por %p819, %p820
      %p822 = scmp.ne.s32.totalorder %s814, %s816
      %p823 = scmp.eq.s32.totalorder %s124, 1
      %p824 = por %p822, %p823
      %p825 = scmp.ne.s32.totalorder %s816, %s817
      %p826 = scmp.eq.s32.totalorder %s124, 0
      %p827 = por %p825, %p826
      %p828 = scmp.ne.s32.totalorder %s816, %s817
      %p829 = scmp.eq.s32.totalorder %s125, 1
      %p830 = por %p828, %p829
      %p832 = scmp.ne.s32.totalorder %s817, %s831
      %p833 = scmp.eq.s32.totalorder %s125, 0
      %p834 = por %p832, %p833
      %s836 = sadd.s32 %s835, 1
      %p839 = scmp.eq.s32.totalorder %s119, 1
      %p840 = scmp.ne.s32.totalorder %s835, %s837
      %p841 = scmp.eq.s32.totalorder %s119, 0
      %p842 = por %p840, %p841
      %p843 = scmp.ne.s32.totalorder %s835, %s837
      %p844 = scmp.eq.s32.totalorder %s124, 1
      %p845 = por %p843, %p844
      %p846 = scmp.ne.s32.totalorder %s837, %s838
      %p847 = scmp.eq.s32.totalorder %s124, 0
      %p848 = por %p846, %p847
      %p849 = scmp.ne.s32.totalorder %s837, %s838
      %p850 = scmp.eq.s32.totalorder %s125, 1
      %p851 = por %p849, %p850
      %p853 = scmp.ne.s32.totalorder %s838, %s852
      %p854 = scmp.eq.s32.totalorder %s125, 0
      %p855 = por %p853, %p854
      %s857 = sadd.s32 %s856, 1
      %p860 = scmp.eq.s32.totalorder %s119, 1
      %p861 = scmp.ne.s32.totalorder %s856, %s858
      %p862 = scmp.eq.s32.totalorder %s119, 0
      %p863 = por %p861, %p862
      %p864 = scmp.ne.s32.totalorder %s856, %s858
      %p865 = scmp.eq.s32.totalorder %s124, 1
      %p866 = por %p864, %p865
      %p867 = scmp.ne.s32.totalorder %s858, %s859
      %p868 = scmp.eq.s32.totalorder %s124, 0
      %p869 = por %p867, %p868
      %p870 = scmp.ne.s32.totalorder %s858, %s859
      %p871 = scmp.eq.s32.totalorder %s125, 1
      %p872 = por %p870, %p871
      %p874 = scmp.ne.s32.totalorder %s859, %s873
      %p875 = scmp.eq.s32.totalorder %s125, 0
      %p876 = por %p874, %p875
      %s878 = sadd.s32 %s877, 1
      %p881 = scmp.eq.s32.totalorder %s119, 1
      %p882 = scmp.ne.s32.totalorder %s877, %s879
      %p883 = scmp.eq.s32.totalorder %s119, 0
      %p884 = por %p882, %p883
      %p885 = scmp.ne.s32.totalorder %s877, %s879
      %p886 = scmp.eq.s32.totalorder %s124, 1
      %p887 = por %p885, %p886
      %p888 = scmp.ne.s32.totalorder %s879, %s880
      %p889 = scmp.eq.s32.totalorder %s124, 0
      %p890 = por %p888, %p889
      %p891 = scmp.ne.s32.totalorder %s879, %s880
      %p892 = scmp.eq.s32.totalorder %s125, 1
      %p893 = por %p891, %p892
      %p895 = scmp.ne.s32.totalorder %s880, %s894
      %p896 = scmp.eq.s32.totalorder %s125, 0
      %p897 = por %p895, %p896
      %s899 = sadd.s32 %s898, 1
      %p902 = scmp.eq.s32.totalorder %s119, 1
      %p903 = scmp.ne.s32.totalorder %s898, %s900
      %p904 = scmp.eq.s32.totalorder %s119, 0
      %p905 = por %p903, %p904
      %p906 = scmp.ne.s32.totalorder %s898, %s900
      %p907 = scmp.eq.s32.totalorder %s124, 1
      %p908 = por %p906, %p907
      %p909 = scmp.ne.s32.totalorder %s900, %s901
      %p910 = scmp.eq.s32.totalorder %s124, 0
      %p911 = por %p909, %p910
      %p912 = scmp.ne.s32.totalorder %s900, %s901
      %p913 = scmp.eq.s32.totalorder %s125, 1
      %p914 = por %p912, %p913
      %p916 = scmp.ne.s32.totalorder %s901, %s915
      %p917 = scmp.eq.s32.totalorder %s125, 0
      %p918 = por %p916, %p917
      %s920 = sadd.s32 %s919, 1
      %p923 = scmp.eq.s32.totalorder %s119, 1
      %p924 = scmp.ne.s32.totalorder %s919, %s921
      %p925 = scmp.eq.s32.totalorder %s119, 0
      %p926 = por %p924, %p925
      %p927 = scmp.ne.s32.totalorder %s919, %s921
      %p928 = scmp.eq.s32.totalorder %s124, 1
      %p929 = por %p927, %p928
      %p930 = scmp.ne.s32.totalorder %s921, %s922
      %p931 = scmp.eq.s32.totalorder %s124, 0
      %p932 = por %p930, %p931
      %p933 = scmp.ne.s32.totalorder %s921, %s922
      %p934 = scmp.eq.s32.totalorder %s125, 1
      %p935 = por %p933, %p934
      %p937 = scmp.ne.s32.totalorder %s922, %s936
      %p938 = scmp.eq.s32.totalorder %s125, 0
      %p939 = por %p937, %p938
      %s941 = sadd.s32 %s940, 1
      %p944 = scmp.eq.s32.totalorder %s119, 1
      %p945 = scmp.ne.s32.totalorder %s940, %s942
      %p946 = scmp.eq.s32.totalorder %s119, 0
      %p947 = por %p945, %p946
      %p948 = scmp.ne.s32.totalorder %s940, %s942
      %p949 = scmp.eq.s32.totalorder %s124, 1
      %p950 = por %p948, %p949
      %p951 = scmp.ne.s32.totalorder %s942, %s943
      %p952 = scmp.eq.s32.totalorder %s124, 0
      %p953 = por %p951, %p952
      %p954 = scmp.ne.s32.totalorder %s942, %s943
      %p955 = scmp.eq.s32.totalorder %s125, 1
      %p956 = por %p954, %p955
      %p958 = scmp.ne.s32.totalorder %s943, %s957
      %p959 = scmp.eq.s32.totalorder %s125, 0
      %p960 = por %p958, %p959
      %s962 = sadd.s32 %s961, 1
      %p965 = scmp.eq.s32.totalorder %s119, 1
      %p966 = scmp.ne.s32.totalorder %s961, %s963
      %p967 = scmp.eq.s32.totalorder %s119, 0
      %p968 = por %p966, %p967
      %p969 = scmp.ne.s32.totalorder %s961, %s963
      %p970 = scmp.eq.s32.totalorder %s124, 1
      %p971 = por %p969, %p970
      %p972 = scmp.ne.s32.totalorder %s963, %s964
      %p973 = scmp.eq.s32.totalorder %s124, 0
      %p974 = por %p972, %p973
      %p975 = scmp.ne.s32.totalorder %s963, %s964
      %p976 = scmp.eq.s32.totalorder %s125, 1
      %p977 = por %p975, %p976
      %p979 = scmp.ne.s32.totalorder %s964, %s978
      %p980 = scmp.eq.s32.totalorder %s125, 0
      %p981 = por %p979, %p980
      %s983 = sadd.s32 %s982, 1
      %p986 = scmp.eq.s32.totalorder %s119, 1
      %p987 = scmp.ne.s32.totalorder %s982, %s984
      %p988 = scmp.eq.s32.totalorder %s119, 0
      %p989 = por %p987, %p988
      %p990 = scmp.ne.s32.totalorder %s982, %s984
      %p991 = scmp.eq.s32.totalorder %s124, 1
      %p992 = por %p990, %p991
      %p993 = scmp.ne.s32.totalorder %s984, %s985
      %p994 = scmp.eq.s32.totalorder %s124, 0
      %p995 = por %p993, %p994
      %p996 = scmp.ne.s32.totalorder %s984, %s985
      %p997 = scmp.eq.s32.totalorder %s125, 1
      %p998 = por %p996, %p997
      %p1000 = scmp.ne.s32.totalorder %s985, %s999
      %p1001 = scmp.eq.s32.totalorder %s125, 0
      %p1002 = por %p1000, %p1001
      %s1004 = sadd.s32 %s1003, 1
      %p1007 = scmp.eq.s32.totalorder %s119, 1
      %p1008 = scmp.ne.s32.totalorder %s1003, %s1005
      %p1009 = scmp.eq.s32.totalorder %s119, 0
      %p1010 = por %p1008, %p1009
      %p1011 = scmp.ne.s32.totalorder %s1003, %s1005
      %p1012 = scmp.eq.s32.totalorder %s124, 1
      %p1013 = por %p1011, %p1012
      %p1014 = scmp.ne.s32.totalorder %s1005, %s1006
      %p1015 = scmp.eq.s32.totalorder %s124, 0
      %p1016 = por %p1014, %p1015
      %p1017 = scmp.ne.s32.totalorder %s1005, %s1006
      %p1018 = scmp.eq.s32.totalorder %s125, 1
      %p1019 = por %p1017, %p1018
      %p1021 = scmp.ne.s32.totalorder %s1006, %s1020
      %p1022 = scmp.eq.s32.totalorder %s125, 0
      %p1023 = por %p1021, %p1022
      %s1025 = sadd.s32 %s1024, 1
      %p1028 = scmp.eq.s32.totalorder %s119, 1
      %p1029 = scmp.ne.s32.totalorder %s1024, %s1026
      %p1030 = scmp.eq.s32.totalorder %s119, 0
      %p1031 = por %p1029, %p1030
      %p1032 = scmp.ne.s32.totalorder %s1024, %s1026
      %p1033 = scmp.eq.s32.totalorder %s124, 1
      %p1034 = por %p1032, %p1033
      %p1035 = scmp.ne.s32.totalorder %s1026, %s1027
      %p1036 = scmp.eq.s32.totalorder %s124, 0
      %p1037 = por %p1035, %p1036
      %p1038 = scmp.ne.s32.totalorder %s1026, %s1027
      %p1039 = scmp.eq.s32.totalorder %s125, 1
      %p1040 = por %p1038, %p1039
      %p1042 = scmp.ne.s32.totalorder %s1027, %s1041
      %p1043 = scmp.eq.s32.totalorder %s125, 0
      %p1044 = por %p1042, %p1043
      %s1046 = sadd.s32 %s1045, 1
      %p1049 = scmp.eq.s32.totalorder %s119, 1
      %p1050 = scmp.ne.s32.totalorder %s1045, %s1047
      %p1051 = scmp.eq.s32.totalorder %s119, 0
      %p1052 = por %p1050, %p1051
      %p1053 = scmp.ne.s32.totalorder %s1045, %s1047
      %p1054 = scmp.eq.s32.totalorder %s124, 1
      %p1055 = por %p1053, %p1054
      %p1056 = scmp.ne.s32.totalorder %s1047, %s1048
      %p1057 = scmp.eq.s32.totalorder %s124, 0
      %p1058 = por %p1056, %p1057
      %p1059 = scmp.ne.s32.totalorder %s1047, %s1048
      %p1060 = scmp.eq.s32.totalorder %s125, 1
      %p1061 = por %p1059, %p1060
      %p1063 = scmp.ne.s32.totalorder %s1048, %s1062
      %p1064 = scmp.eq.s32.totalorder %s125, 0
      %p1065 = por %p1063, %p1064
      %s1067 = sadd.s32 %s1066, 1
      %p1070 = scmp.eq.s32.totalorder %s119, 1
      %p1071 = scmp.ne.s32.totalorder %s1066, %s1068
      %p1072 = scmp.eq.s32.totalorder %s119, 0
      %p1073 = por %p1071, %p1072
      %p1074 = scmp.ne.s32.totalorder %s1066, %s1068
      %p1075 = scmp.eq.s32.totalorder %s124, 1
      %p1076 = por %p1074, %p1075
      %p1077 = scmp.ne.s32.totalorder %s1068, %s1069
      %p1078 = scmp.eq.s32.totalorder %s124, 0
      %p1079 = por %p1077, %p1078
      %p1080 = scmp.ne.s32.totalorder %s1068, %s1069
      %p1081 = scmp.eq.s32.totalorder %s125, 1
      %p1082 = por %p1080, %p1081
      %p1084 = scmp.ne.s32.totalorder %s1069, %s1083
      %p1085 = scmp.eq.s32.totalorder %s125, 0
      %p1086 = por %p1084, %p1085
      %s1088 = sadd.s32 %s1087, 1
      %p1091 = scmp.eq.s32.totalorder %s119, 1
      %p1092 = scmp.ne.s32.totalorder %s1087, %s1089
      %p1093 = scmp.eq.s32.totalorder %s119, 0
      %p1094 = por %p1092, %p1093
      %p1095 = scmp.ne.s32.totalorder %s1087, %s1089
      %p1096 = scmp.eq.s32.totalorder %s124, 1
      %p1097 = por %p1095, %p1096
      %p1098 = scmp.ne.s32.totalorder %s1089, %s1090
      %p1099 = scmp.eq.s32.totalorder %s124, 0
      %p1100 = por %p1098, %p1099
      %p1101 = scmp.ne.s32.totalorder %s1089, %s1090
      %p1102 = scmp.eq.s32.totalorder %s125, 1
      %p1103 = por %p1101, %p1102
      %p1105 = scmp.ne.s32.totalorder %s1090, %s1104
      %p1106 = scmp.eq.s32.totalorder %s125, 0
      %p1107 = por %p1105, %p1106
      %s1109 = sadd.s32 %s1108, 1
      %p1112 = scmp.eq.s32.totalorder %s119, 1
      %p1113 = scmp.ne.s32.totalorder %s1108, %s1110
      %p1114 = scmp.eq.s32.totalorder %s119, 0
      %p1115 = por %p1113, %p1114
      %p1116 = scmp.ne.s32.totalorder %s1108, %s1110
      %p1117 = scmp.eq.s32.totalorder %s124, 1
      %p1118 = por %p1116, %p1117
      %p1119 = scmp.ne.s32.totalorder %s1110, %s1111
      %p1120 = scmp.eq.s32.totalorder %s124, 0
      %p1121 = por %p1119, %p1120
      %p1122 = scmp.ne.s32.totalorder %s1110, %s1111
      %p1123 = scmp.eq.s32.totalorder %s125, 1
      %p1124 = por %p1122, %p1123
      %p1126 = scmp.ne.s32.totalorder %s1111, %s1125
      %p1127 = scmp.eq.s32.totalorder %s125, 0
      %p1128 = por %p1126, %p1127
      %s1130 = sadd.s32 %s1129, 1
      %p1133 = scmp.eq.s32.totalorder %s119, 1
      %p1134 = scmp.ne.s32.totalorder %s1129, %s1131
      %p1135 = scmp.eq.s32.totalorder %s119, 0
      %p1136 = por %p1134, %p1135
      %p1137 = scmp.ne.s32.totalorder %s1129, %s1131
      %p1138 = scmp.eq.s32.totalorder %s124, 1
      %p1139 = por %p1137, %p1138
      %p1140 = scmp.ne.s32.totalorder %s1131, %s1132
      %p1141 = scmp.eq.s32.totalorder %s124, 0
      %p1142 = por %p1140, %p1141
      %p1143 = scmp.ne.s32.totalorder %s1131, %s1132
      %p1144 = scmp.eq.s32.totalorder %s125, 1
      %p1145 = por %p1143, %p1144
      %p1147 = scmp.ne.s32.totalorder %s1132, %s1146
      %p1148 = scmp.eq.s32.totalorder %s125, 0
      %p1149 = por %p1147, %p1148
      %s1151 = sadd.s32 %s1150, 1
      %p1154 = scmp.eq.s32.totalorder %s119, 1
      %p1155 = scmp.ne.s32.totalorder %s1150, %s1152
      %p1156 = scmp.eq.s32.totalorder %s119, 0
      %p1157 = por %p1155, %p1156
      %p1158 = scmp.ne.s32.totalorder %s1150, %s1152
      %p1159 = scmp.eq.s32.totalorder %s124, 1
      %p1160 = por %p1158, %p1159
      %p1161 = scmp.ne.s32.totalorder %s1152, %s1153
      %p1162 = scmp.eq.s32.totalorder %s124, 0
      %p1163 = por %p1161, %p1162
      %p1164 = scmp.ne.s32.totalorder %s1152, %s1153
      %p1165 = scmp.eq.s32.totalorder %s125, 1
      %p1166 = por %p1164, %p1165
      %p1168 = scmp.ne.s32.totalorder %s1153, %s1167
      %p1169 = scmp.eq.s32.totalorder %s125, 0
      %p1170 = por %p1168, %p1169
      %s1172 = sadd.s32 %s1171, 1
      %p1175 = scmp.eq.s32.totalorder %s119, 1
      %p1176 = scmp.ne.s32.totalorder %s1171, %s1173
      %p1177 = scmp.eq.s32.totalorder %s119, 0
      %p1178 = por %p1176, %p1177
      %p1179 = scmp.ne.s32.totalorder %s1171, %s1173
      %p1180 = scmp.eq.s32.totalorder %s124, 1
      %p1181 = por %p1179, %p1180
      %p1182 = scmp.ne.s32.totalorder %s1173, %s1174
      %p1183 = scmp.eq.s32.totalorder %s124, 0
      %p1184 = por %p1182, %p1183
      %p1185 = scmp.ne.s32.totalorder %s1173, %s1174
      %p1186 = scmp.eq.s32.totalorder %s125, 1
      %p1187 = por %p1185, %p1186
      %p1189 = scmp.ne.s32.totalorder %s1174, %s1188
      %p1190 = scmp.eq.s32.totalorder %s125, 0
      %p1191 = por %p1189, %p1190
      %s1193 = sadd.s32 %s1192, 1
      %p1196 = scmp.eq.s32.totalorder %s119, 1
      %p1197 = scmp.ne.s32.totalorder %s1192, %s1194
      %p1198 = scmp.eq.s32.totalorder %s119, 0
      %p1199 = por %p1197, %p1198
      %p1200 = scmp.ne.s32.totalorder %s1192, %s1194
      %p1201 = scmp.eq.s32.totalorder %s124, 1
      %p1202 = por %p1200, %p1201
      %p1203 = scmp.ne.s32.totalorder %s1194, %s1195
      %p1204 = scmp.eq.s32.totalorder %s124, 0
      %p1205 = por %p1203, %p1204
      %p1206 = scmp.ne.s32.totalorder %s1194, %s1195
      %p1207 = scmp.eq.s32.totalorder %s125, 1
      %p1208 = por %p1206, %p1207
      %p1210 = scmp.ne.s32.totalorder %s1195, %s1209
      %p1211 = scmp.eq.s32.totalorder %s125, 0
      %p1212 = por %p1210, %p1211
      %s1214 = sadd.s32 %s1213, 1
      %p1217 = scmp.eq.s32.totalorder %s119, 1
      %p1218 = scmp.ne.s32.totalorder %s1213, %s1215
      %p1219 = scmp.eq.s32.totalorder %s119, 0
      %p1220 = por %p1218, %p1219
      %p1221 = scmp.ne.s32.totalorder %s1213, %s1215
      %p1222 = scmp.eq.s32.totalorder %s124, 1
      %p1223 = por %p1221, %p1222
      %p1224 = scmp.ne.s32.totalorder %s1215, %s1216
      %p1225 = scmp.eq.s32.totalorder %s124, 0
      %p1226 = por %p1224, %p1225
      %p1227 = scmp.ne.s32.totalorder %s1215, %s1216
      %p1228 = scmp.eq.s32.totalorder %s125, 1
      %p1229 = por %p1227, %p1228
      %p1231 = scmp.ne.s32.totalorder %s1216, %s1230
      %p1232 = scmp.eq.s32.totalorder %s125, 0
      %p1233 = por %p1231, %p1232
      %s1235 = sadd.s32 %s1234, 1
      %p1238 = scmp.eq.s32.totalorder %s119, 1
      %p1239 = scmp.ne.s32.totalorder %s1234, %s1236
      %p1240 = scmp.eq.s32.totalorder %s119, 0
      %p1241 = por %p1239, %p1240
      %p1242 = scmp.ne.s32.totalorder %s1234, %s1236
      %p1243 = scmp.eq.s32.totalorder %s124, 1
      %p1244 = por %p1242, %p1243
      %p1245 = scmp.ne.s32.totalorder %s1236, %s1237
      %p1246 = scmp.eq.s32.totalorder %s124, 0
      %p1247 = por %p1245, %p1246
      %p1248 = scmp.ne.s32.totalorder %s1236, %s1237
      %p1249 = scmp.eq.s32.totalorder %s125, 1
      %p1250 = por %p1248, %p1249
      %p1252 = scmp.ne.s32.totalorder %s1237, %s1251
      %p1253 = scmp.eq.s32.totalorder %s125, 0
      %p1254 = por %p1252, %p1253
      %s1255 = ssub.s32 %s119, %s126
      %p1256 = scmp.eq.s32.totalorder %s1255, 0
      %s1258 = sadd.s32 %s1257, 1
      %s1259 = scalar_select %p1256, %s1257, %s1258
      %p1262 = pneg %p1256
      %p1263 = scmp.eq.s32.totalorder %s119, 1
      %p1264 = por %p1262, %p1263
      %p1265 = scmp.ne.s32.totalorder %s1257, %s1260
      %p1266 = scmp.eq.s32.totalorder %s119, 0
      %p1267 = por %p1265, %p1266
      %p1268 = scmp.ne.s32.totalorder %s1257, %s1260
      %p1269 = scmp.eq.s32.totalorder %s124, 1
      %p1270 = por %p1268, %p1269
      %p1271 = scmp.ne.s32.totalorder %s1260, %s1261
      %p1272 = scmp.eq.s32.totalorder %s124, 0
      %p1273 = por %p1271, %p1272
      %p1274 = scmp.ne.s32.totalorder %s1260, %s1261
      %p1275 = scmp.eq.s32.totalorder %s125, 1
      %p1276 = por %p1274, %p1275
      %p1278 = scmp.ne.s32.totalorder %s1261, %s1277
      %p1279 = scmp.eq.s32.totalorder %s125, 0
      %p1280 = por %p1278, %p1279
      %p1281 = scmp.le.s32.totalorder 1, %s119
      %p1282 = scmp.lt.s32.totalorder %s119, 3
      %p1283 = pnand %p1281, %p1282
      %p1284 = pneg %p1283
      // Predicated region
      $region9: #{npc_cls_forward.1} parent=5 // pred_check
        _
      $region10: #{npc_cls_forward.1} parent=5 // pred_check_branch
        %1286 = sbr.rel (%p1283) target = $region12
      $region11: #{npc_cls_forward.1} parent=5 // pred_region
        %s1287 = ssub.s32 %s119, 1
        // Predicated region
        $region13: #{npc_cls_forward.1} parent=11 // pred_check
          %p1288 = pneg %p218
        $region14: #{npc_cls_forward.1} parent=11 // pred_check_branch
          %1290 = sbr.rel (%p1288) target = $region16
        $region15: #{npc_cls_forward.1} parent=11 // pred_region
          _
        $region16: #{npc_cls_forward.1} parent=11 // pred_fallthru
          _
        // Predicated region
        $region17: #{npc_cls_forward.1} parent=11 // pred_check
          %p1291 = pneg %p239
        $region18: #{npc_cls_forward.1} parent=11 // pred_check_branch
          %1293 = sbr.rel (%p1291) target = $region20
        $region19: #{npc_cls_forward.1} parent=11 // pred_region
          _
        $region20: #{npc_cls_forward.1} parent=11 // pred_fallthru
          _
        // Predicated region
        $region21: #{npc_cls_forward.1} parent=11 // pred_check
          %p1294 = pneg %p260
        $region22: #{npc_cls_forward.1} parent=11 // pred_check_branch
          %1296 = sbr.rel (%p1294) target = $region24
        $region23: #{npc_cls_forward.1} parent=11 // pred_region
          _
        $region24: #{npc_cls_forward.1} parent=11 // pred_fallthru
          _
        // Predicated region
        $region25: #{npc_cls_forward.1} parent=11 // pred_check
          %p1297 = pneg %p281
        $region26: #{npc_cls_forward.1} parent=11 // pred_check_branch
          %1299 = sbr.rel (%p1297) target = $region28
        $region27: #{npc_cls_forward.1} parent=11 // pred_region
          _
        $region28: #{npc_cls_forward.1} parent=11 // pred_fallthru
          _
        // Predicated region
        $region29: #{npc_cls_forward.1} parent=11 // pred_check
          %p1300 = pneg %p302
        $region30: #{npc_cls_forward.1} parent=11 // pred_check_branch
          %1302 = sbr.rel (%p1300) target = $region32
        $region31: #{npc_cls_forward.1} parent=11 // pred_region
          _
        $region32: #{npc_cls_forward.1} parent=11 // pred_fallthru
          _
        // Predicated region
        $region33: #{npc_cls_forward.1} parent=11 // pred_check
          %p1303 = pneg %p323
        $region34: #{npc_cls_forward.1} parent=11 // pred_check_branch
          %1305 = sbr.rel (%p1303) target = $region36
        $region35: #{npc_cls_forward.1} parent=11 // pred_region
          _
        $region36: #{npc_cls_forward.1} parent=11 // pred_fallthru
          _
        // Predicated region
        $region37: #{npc_cls_forward.1} parent=11 // pred_check
          %p1306 = pneg %p344
        $region38: #{npc_cls_forward.1} parent=11 // pred_check_branch
          %1308 = sbr.rel (%p1306) target = $region40
        $region39: #{npc_cls_forward.1} parent=11 // pred_region
          _
        $region40: #{npc_cls_forward.1} parent=11 // pred_fallthru
          _
        // Predicated region
        $region41: #{npc_cls_forward.1} parent=11 // pred_check
          %p1309 = pneg %p365
        $region42: #{npc_cls_forward.1} parent=11 // pred_check_branch
          %1311 = sbr.rel (%p1309) target = $region44
        $region43: #{npc_cls_forward.1} parent=11 // pred_region
          _
        $region44: #{npc_cls_forward.1} parent=11 // pred_fallthru
          _
        // Predicated region
        $region45: #{npc_cls_forward.1} parent=11 // pred_check
          %p1312 = pneg %p386
        $region46: #{npc_cls_forward.1} parent=11 // pred_check_branch
          %1314 = sbr.rel (%p1312) target = $region48
        $region47: #{npc_cls_forward.1} parent=11 // pred_region
          _
        $region48: #{npc_cls_forward.1} parent=11 // pred_fallthru
          _
        // Predicated region
        $region49: #{npc_cls_forward.1} parent=11 // pred_check
          %p1315 = pneg %p407
        $region50: #{npc_cls_forward.1} parent=11 // pred_check_branch
          %1317 = sbr.rel (%p1315) target = $region52
        $region51: #{npc_cls_forward.1} parent=11 // pred_region
          _
        $region52: #{npc_cls_forward.1} parent=11 // pred_fallthru
          _
        // Predicated region
        $region53: #{npc_cls_forward.1} parent=11 // pred_check
          %p1318 = pneg %p428
        $region54: #{npc_cls_forward.1} parent=11 // pred_check_branch
          %1320 = sbr.rel (%p1318) target = $region56
        $region55: #{npc_cls_forward.1} parent=11 // pred_region
          _
        $region56: #{npc_cls_forward.1} parent=11 // pred_fallthru
          _
        // Predicated region
        $region57: #{npc_cls_forward.1} parent=11 // pred_check
          %p1321 = pneg %p449
        $region58: #{npc_cls_forward.1} parent=11 // pred_check_branch
          %1323 = sbr.rel (%p1321) target = $region60
        $region59: #{npc_cls_forward.1} parent=11 // pred_region
          _
        $region60: #{npc_cls_forward.1} parent=11 // pred_fallthru
          _
        // Predicated region
        $region61: #{npc_cls_forward.1} parent=11 // pred_check
          %p1324 = pneg %p470
        $region62: #{npc_cls_forward.1} parent=11 // pred_check_branch
          %1326 = sbr.rel (%p1324) target = $region64
        $region63: #{npc_cls_forward.1} parent=11 // pred_region
          _
        $region64: #{npc_cls_forward.1} parent=11 // pred_fallthru
          _
        // Predicated region
        $region65: #{npc_cls_forward.1} parent=11 // pred_check
          %p1327 = pneg %p491
        $region66: #{npc_cls_forward.1} parent=11 // pred_check_branch
          %1329 = sbr.rel (%p1327) target = $region68
        $region67: #{npc_cls_forward.1} parent=11 // pred_region
          _
        $region68: #{npc_cls_forward.1} parent=11 // pred_fallthru
          _
        // Predicated region
        $region69: #{npc_cls_forward.1} parent=11 // pred_check
          %p1330 = pneg %p512
        $region70: #{npc_cls_forward.1} parent=11 // pred_check_branch
          %1332 = sbr.rel (%p1330) target = $region72
        $region71: #{npc_cls_forward.1} parent=11 // pred_region
          _
        $region72: #{npc_cls_forward.1} parent=11 // pred_fallthru
          _
        // Predicated region
        $region73: #{npc_cls_forward.1} parent=11 // pred_check
          %p1333 = pneg %p533
        $region74: #{npc_cls_forward.1} parent=11 // pred_check_branch
          %1335 = sbr.rel (%p1333) target = $region76
        $region75: #{npc_cls_forward.1} parent=11 // pred_region
          _
        $region76: #{npc_cls_forward.1} parent=11 // pred_fallthru
          _
        // Predicated region
        $region77: #{npc_cls_forward.1} parent=11 // pred_check
          %p1336 = pneg %p554
        $region78: #{npc_cls_forward.1} parent=11 // pred_check_branch
          %1338 = sbr.rel (%p1336) target = $region80
        $region79: #{npc_cls_forward.1} parent=11 // pred_region
          _
        $region80: #{npc_cls_forward.1} parent=11 // pred_fallthru
          _
        // Predicated region
        $region81: #{npc_cls_forward.1} parent=11 // pred_check
          %p1339 = pneg %p575
        $region82: #{npc_cls_forward.1} parent=11 // pred_check_branch
          %1341 = sbr.rel (%p1339) target = $region84
        $region83: #{npc_cls_forward.1} parent=11 // pred_region
          _
        $region84: #{npc_cls_forward.1} parent=11 // pred_fallthru
          _
        // Predicated region
        $region85: #{npc_cls_forward.1} parent=11 // pred_check
          %p1342 = pneg %p596
        $region86: #{npc_cls_forward.1} parent=11 // pred_check_branch
          %1344 = sbr.rel (%p1342) target = $region88
        $region87: #{npc_cls_forward.1} parent=11 // pred_region
          _
        $region88: #{npc_cls_forward.1} parent=11 // pred_fallthru
          _
        // Predicated region
        $region89: #{npc_cls_forward.1} parent=11 // pred_check
          %p1345 = pneg %p617
        $region90: #{npc_cls_forward.1} parent=11 // pred_check_branch
          %1347 = sbr.rel (%p1345) target = $region92
        $region91: #{npc_cls_forward.1} parent=11 // pred_region
          _
        $region92: #{npc_cls_forward.1} parent=11 // pred_fallthru
          _
        // Predicated region
        $region93: #{npc_cls_forward.1} parent=11 // pred_check
          %p1348 = pneg %p638
        $region94: #{npc_cls_forward.1} parent=11 // pred_check_branch
          %1350 = sbr.rel (%p1348) target = $region96
        $region95: #{npc_cls_forward.1} parent=11 // pred_region
          _
        $region96: #{npc_cls_forward.1} parent=11 // pred_fallthru
          _
        // Predicated region
        $region97: #{npc_cls_forward.1} parent=11 // pred_check
          %p1351 = pneg %p659
        $region98: #{npc_cls_forward.1} parent=11 // pred_check_branch
          %1353 = sbr.rel (%p1351) target = $region100
        $region99: #{npc_cls_forward.1} parent=11 // pred_region
          _
        $region100: #{npc_cls_forward.1} parent=11 // pred_fallthru
          _
        // Predicated region
        $region101: #{npc_cls_forward.1} parent=11 // pred_check
          %p1354 = pneg %p680
        $region102: #{npc_cls_forward.1} parent=11 // pred_check_branch
          %1356 = sbr.rel (%p1354) target = $region104
        $region103: #{npc_cls_forward.1} parent=11 // pred_region
          _
        $region104: #{npc_cls_forward.1} parent=11 // pred_fallthru
          _
        // Predicated region
        $region105: #{npc_cls_forward.1} parent=11 // pred_check
          %p1357 = pneg %p701
        $region106: #{npc_cls_forward.1} parent=11 // pred_check_branch
          %1359 = sbr.rel (%p1357) target = $region108
        $region107: #{npc_cls_forward.1} parent=11 // pred_region
          _
        $region108: #{npc_cls_forward.1} parent=11 // pred_fallthru
          _
        // Predicated region
        $region109: #{npc_cls_forward.1} parent=11 // pred_check
          %p1360 = pneg %p722
        $region110: #{npc_cls_forward.1} parent=11 // pred_check_branch
          %1362 = sbr.rel (%p1360) target = $region112
        $region111: #{npc_cls_forward.1} parent=11 // pred_region
          _
        $region112: #{npc_cls_forward.1} parent=11 // pred_fallthru
          _
        // Predicated region
        $region113: #{npc_cls_forward.1} parent=11 // pred_check
          %p1363 = pneg %p743
        $region114: #{npc_cls_forward.1} parent=11 // pred_check_branch
          %1365 = sbr.rel (%p1363) target = $region116
        $region115: #{npc_cls_forward.1} parent=11 // pred_region
          _
        $region116: #{npc_cls_forward.1} parent=11 // pred_fallthru
          _
        // Predicated region
        $region117: #{npc_cls_forward.1} parent=11 // pred_check
          %p1366 = pneg %p764
        $region118: #{npc_cls_forward.1} parent=11 // pred_check_branch
          %1368 = sbr.rel (%p1366) target = $region120
        $region119: #{npc_cls_forward.1} parent=11 // pred_region
          _
        $region120: #{npc_cls_forward.1} parent=11 // pred_fallthru
          _
        // Predicated region
        $region121: #{npc_cls_forward.1} parent=11 // pred_check
          %p1369 = pneg %p785
        $region122: #{npc_cls_forward.1} parent=11 // pred_check_branch
          %1371 = sbr.rel (%p1369) target = $region124
        $region123: #{npc_cls_forward.1} parent=11 // pred_region
          _
        $region124: #{npc_cls_forward.1} parent=11 // pred_fallthru
          _
        // Predicated region
        $region125: #{npc_cls_forward.1} parent=11 // pred_check
          %p1372 = pneg %p806
        $region126: #{npc_cls_forward.1} parent=11 // pred_check_branch
          %1374 = sbr.rel (%p1372) target = $region128
        $region127: #{npc_cls_forward.1} parent=11 // pred_region
          _
        $region128: #{npc_cls_forward.1} parent=11 // pred_fallthru
          _
        // Predicated region
        $region129: #{npc_cls_forward.1} parent=11 // pred_check
          %p1375 = pneg %p827
        $region130: #{npc_cls_forward.1} parent=11 // pred_check_branch
          %1377 = sbr.rel (%p1375) target = $region132
        $region131: #{npc_cls_forward.1} parent=11 // pred_region
          _
        $region132: #{npc_cls_forward.1} parent=11 // pred_fallthru
          _
        // Predicated region
        $region133: #{npc_cls_forward.1} parent=11 // pred_check
          %p1378 = pneg %p848
        $region134: #{npc_cls_forward.1} parent=11 // pred_check_branch
          %1380 = sbr.rel (%p1378) target = $region136
        $region135: #{npc_cls_forward.1} parent=11 // pred_region
          _
        $region136: #{npc_cls_forward.1} parent=11 // pred_fallthru
          _
        // Predicated region
        $region137: #{npc_cls_forward.1} parent=11 // pred_check
          %p1381 = pneg %p869
        $region138: #{npc_cls_forward.1} parent=11 // pred_check_branch
          %1383 = sbr.rel (%p1381) target = $region140
        $region139: #{npc_cls_forward.1} parent=11 // pred_region
          _
        $region140: #{npc_cls_forward.1} parent=11 // pred_fallthru
          _
        // Predicated region
        $region141: #{npc_cls_forward.1} parent=11 // pred_check
          %p1384 = pneg %p890
        $region142: #{npc_cls_forward.1} parent=11 // pred_check_branch
          %1386 = sbr.rel (%p1384) target = $region144
        $region143: #{npc_cls_forward.1} parent=11 // pred_region
          %1388 = vsyncadd [#allocation3], 0
          %s1390 = sshll.u32 %s71, 4
          %s1391 = int_to_ptr.hbm [resolvable:$true] %s1390
          %s1392 = sshll.u32 [#allocation2], 4
          %s1393 = int_to_ptr.vmem [resolvable:$true] %s1392
          %1395 = dma.hbm_to_vmem [thread:$0]  %s1391, 16, %s1393, [#allocation3]
        $region144: #{npc_cls_forward.1} parent=11 // pred_fallthru
          _
        // Predicated region
        $region145: #{npc_cls_forward.1} parent=11 // pred_check
          %p1396 = pneg %p911
        $region146: #{npc_cls_forward.1} parent=11 // pred_check_branch
          %1398 = sbr.rel (%p1396) target = $region148
        $region147: #{npc_cls_forward.1} parent=11 // pred_region
          %1400 = vsyncadd [#allocation5], 0
          %s1402 = sshll.u32 %s73, 4
          %s1403 = int_to_ptr.hbm [resolvable:$true] %s1402
          %s1404 = sshll.u32 [#allocation4], 4
          %s1405 = int_to_ptr.vmem [resolvable:$true] %s1404
          %1407 = dma.hbm_to_vmem [thread:$0]  %s1403, 16, %s1405, [#allocation5]
        $region148: #{npc_cls_forward.1} parent=11 // pred_fallthru
          _
        // Predicated region
        $region149: #{npc_cls_forward.1} parent=11 // pred_check
          %p1408 = pneg %p932
        $region150: #{npc_cls_forward.1} parent=11 // pred_check_branch
          %1410 = sbr.rel (%p1408) target = $region152
        $region151: #{npc_cls_forward.1} parent=11 // pred_region
          _
        $region152: #{npc_cls_forward.1} parent=11 // pred_fallthru
          _
        // Predicated region
        $region153: #{npc_cls_forward.1} parent=11 // pred_check
          %p1411 = pneg %p953
        $region154: #{npc_cls_forward.1} parent=11 // pred_check_branch
          %1413 = sbr.rel (%p1411) target = $region156
        $region155: #{npc_cls_forward.1} parent=11 // pred_region
          _
        $region156: #{npc_cls_forward.1} parent=11 // pred_fallthru
          _
        // Predicated region
        $region157: #{npc_cls_forward.1} parent=11 // pred_check
          %p1414 = pneg %p974
        $region158: #{npc_cls_forward.1} parent=11 // pred_check_branch
          %1416 = sbr.rel (%p1414) target = $region160
        $region159: #{npc_cls_forward.1} parent=11 // pred_region
          %1418 = vsyncadd [#allocation5], 0
          %s1420 = sshll.u32 %s79, 4
          %s1421 = int_to_ptr.hbm [resolvable:$true] %s1420
          %s1422 = sshll.u32 [#allocation6], 4
          %s1423 = int_to_ptr.vmem [resolvable:$true] %s1422
          %1425 = dma.hbm_to_vmem [thread:$0]  %s1421, 16, %s1423, [#allocation5]
        $region160: #{npc_cls_forward.1} parent=11 // pred_fallthru
          _
        // Predicated region
        $region161: #{npc_cls_forward.1} parent=11 // pred_check
          %p1426 = pneg %p995
        $region162: #{npc_cls_forward.1} parent=11 // pred_check_branch
          %1428 = sbr.rel (%p1426) target = $region164
        $region163: #{npc_cls_forward.1} parent=11 // pred_region
          %1430 = vsyncadd [#allocation8], 0
          %s1432 = sshll.u32 %s81, 4
          %s1433 = int_to_ptr.hbm [resolvable:$true] %s1432
          %s1434 = sshll.u32 [#allocation7], 4
          %s1435 = int_to_ptr.vmem [resolvable:$true] %s1434
          %1437 = dma.hbm_to_vmem [thread:$0]  %s1433, 16, %s1435, [#allocation8]
        $region164: #{npc_cls_forward.1} parent=11 // pred_fallthru
          _
        // Predicated region
        $region165: #{npc_cls_forward.1} parent=11 // pred_check
          %p1438 = pneg %p1016
        $region166: #{npc_cls_forward.1} parent=11 // pred_check_branch
          %1440 = sbr.rel (%p1438) target = $region168
        $region167: #{npc_cls_forward.1} parent=11 // pred_region
          %1442 = vsyncadd [#allocation8], 0
          %s1444 = sshll.u32 %s83, 4
          %s1445 = int_to_ptr.hbm [resolvable:$true] %s1444
          %s1446 = sshll.u32 [#allocation9], 4
          %s1447 = int_to_ptr.vmem [resolvable:$true] %s1446
          %1449 = dma.hbm_to_vmem [thread:$0]  %s1445, 16, %s1447, [#allocation8]
        $region168: #{npc_cls_forward.1} parent=11 // pred_fallthru
          _
        // Predicated region
        $region169: #{npc_cls_forward.1} parent=11 // pred_check
          %p1450 = pneg %p1037
        $region170: #{npc_cls_forward.1} parent=11 // pred_check_branch
          %1452 = sbr.rel (%p1450) target = $region172
        $region171: #{npc_cls_forward.1} parent=11 // pred_region
          %1454 = vsyncadd [#allocation11], 0
          %s1456 = sshll.u32 %s85, 4
          %s1457 = int_to_ptr.hbm [resolvable:$true] %s1456
          %s1458 = sshll.u32 [#allocation10], 4
          %s1459 = int_to_ptr.vmem [resolvable:$true] %s1458
          %1461 = dma.hbm_to_vmem [thread:$0]  %s1457, 16, %s1459, [#allocation11]
        $region172: #{npc_cls_forward.1} parent=11 // pred_fallthru
          _
        // Predicated region
        $region173: #{npc_cls_forward.1} parent=11 // pred_check
          %p1462 = pneg %p1058
        $region174: #{npc_cls_forward.1} parent=11 // pred_check_branch
          %1464 = sbr.rel (%p1462) target = $region176
        $region175: #{npc_cls_forward.1} parent=11 // pred_region
          _
        $region176: #{npc_cls_forward.1} parent=11 // pred_fallthru
          _
        // Predicated region
        $region177: #{npc_cls_forward.1} parent=11 // pred_check
          %p1465 = pneg %p1079
        $region178: #{npc_cls_forward.1} parent=11 // pred_check_branch
          %1467 = sbr.rel (%p1465) target = $region180
        $region179: #{npc_cls_forward.1} parent=11 // pred_region
          _
        $region180: #{npc_cls_forward.1} parent=11 // pred_fallthru
          _
        // Predicated region
        $region181: #{npc_cls_forward.1} parent=11 // pred_check
          %p1468 = pneg %p1100
        $region182: #{npc_cls_forward.1} parent=11 // pred_check_branch
          %1470 = sbr.rel (%p1468) target = $region184
        $region183: #{npc_cls_forward.1} parent=11 // pred_region
          %1472 = vsyncadd [#allocation11], 0
          %s1474 = sshll.u32 %s91, 4
          %s1475 = int_to_ptr.hbm [resolvable:$true] %s1474
          %s1476 = sshll.u32 [#allocation12], 4
          %s1477 = int_to_ptr.vmem [resolvable:$true] %s1476
          %1479 = dma.hbm_to_vmem [thread:$0]  %s1475, 16, %s1477, [#allocation11]
        $region184: #{npc_cls_forward.1} parent=11 // pred_fallthru
          _
        // Predicated region
        $region185: #{npc_cls_forward.1} parent=11 // pred_check
          %p1480 = pneg %p1121
        $region186: #{npc_cls_forward.1} parent=11 // pred_check_branch
          %1482 = sbr.rel (%p1480) target = $region188
        $region187: #{npc_cls_forward.1} parent=11 // pred_region
          _
        $region188: #{npc_cls_forward.1} parent=11 // pred_fallthru
          _
        // Predicated region
        $region189: #{npc_cls_forward.1} parent=11 // pred_check
          %p1483 = pneg %p1142
        $region190: #{npc_cls_forward.1} parent=11 // pred_check_branch
          %1485 = sbr.rel (%p1483) target = $region192
        $region191: #{npc_cls_forward.1} parent=11 // pred_region
          %1487 = vsyncadd [#allocation14], 0
          %s1489 = sshll.u32 %s95, 4
          %s1490 = int_to_ptr.hbm [resolvable:$true] %s1489
          %s1491 = sshll.u32 [#allocation13], 4
          %s1492 = int_to_ptr.vmem [resolvable:$true] %s1491
          %1494 = dma.hbm_to_vmem [thread:$0]  %s1490, 16, %s1492, [#allocation14]
        $region192: #{npc_cls_forward.1} parent=11 // pred_fallthru
          _
        // Predicated region
        $region193: #{npc_cls_forward.1} parent=11 // pred_check
          %p1495 = pneg %p1163
        $region194: #{npc_cls_forward.1} parent=11 // pred_check_branch
          %1497 = sbr.rel (%p1495) target = $region196
        $region195: #{npc_cls_forward.1} parent=11 // pred_region
          %1499 = vsyncadd [#allocation14], 0
          %s1501 = sshll.u32 %s97, 4
          %s1502 = int_to_ptr.hbm [resolvable:$true] %s1501
          %s1503 = sshll.u32 [#allocation15], 4
          %s1504 = int_to_ptr.vmem [resolvable:$true] %s1503
          %1506 = dma.hbm_to_vmem [thread:$0]  %s1502, 16, %s1504, [#allocation14]
        $region196: #{npc_cls_forward.1} parent=11 // pred_fallthru
          _
        // Predicated region
        $region197: #{npc_cls_forward.1} parent=11 // pred_check
          %p1507 = pneg %p1184
        $region198: #{npc_cls_forward.1} parent=11 // pred_check_branch
          %1509 = sbr.rel (%p1507) target = $region200
        $region199: #{npc_cls_forward.1} parent=11 // pred_region
          _
        $region200: #{npc_cls_forward.1} parent=11 // pred_fallthru
          _
        // Predicated region
        $region201: #{npc_cls_forward.1} parent=11 // pred_check
          %p1510 = pneg %p1205
        $region202: #{npc_cls_forward.1} parent=11 // pred_check_branch
          %1512 = sbr.rel (%p1510) target = $region204
        $region203: #{npc_cls_forward.1} parent=11 // pred_region
          _
        $region204: #{npc_cls_forward.1} parent=11 // pred_fallthru
          _
        // Predicated region
        $region205: #{npc_cls_forward.1} parent=11 // pred_check
          %p1513 = pneg %p1226
        $region206: #{npc_cls_forward.1} parent=11 // pred_check_branch
          %1515 = sbr.rel (%p1513) target = $region208
        $region207: #{npc_cls_forward.1} parent=11 // pred_region
          %1517 = vsyncadd [#allocation17], 0
          %s1519 = sshll.u32 %s103, 4
          %s1520 = int_to_ptr.hbm [resolvable:$true] %s1519
          %s1521 = sshll.u32 [#allocation16], 4
          %s1522 = int_to_ptr.vmem [resolvable:$true] %s1521
          %1524 = dma.hbm_to_vmem [thread:$0]  %s1520, 16, %s1522, [#allocation17]
        $region208: #{npc_cls_forward.1} parent=11 // pred_fallthru
          _
        // Predicated region
        $region209: #{npc_cls_forward.1} parent=11 // pred_check
          %p1525 = pneg %p1247
        $region210: #{npc_cls_forward.1} parent=11 // pred_check_branch
          %1527 = sbr.rel (%p1525) target = $region212
        $region211: #{npc_cls_forward.1} parent=11 // pred_region
          %1529 = vsyncadd [#allocation17], 0
          %s1531 = sshll.u32 %s105, 4
          %s1532 = int_to_ptr.hbm [resolvable:$true] %s1531
          %s1533 = sshll.u32 [#allocation18], 4
          %s1534 = int_to_ptr.vmem [resolvable:$true] %s1533
          %1536 = dma.hbm_to_vmem [thread:$0]  %s1532, 16, %s1534, [#allocation17]
        $region212: #{npc_cls_forward.1} parent=11 // pred_fallthru
          _
      $region12: #{npc_cls_forward.1} parent=5 // pred_fallthru
        _
      %p1537 = scmp.lt.s32.totalorder %s119, 2
      // Predicated region
      $region213: #{npc_cls_forward.1} parent=5 // pred_check
        %p1538 = pneg %p1537
      $region214: #{npc_cls_forward.1} parent=5 // pred_check_branch
        %1540 = sbr.rel (%p1538) target = $region216
      $region215: #{npc_cls_forward.1} parent=5 // pred_region
        // Predicated region
        $region217: #{npc_cls_forward.1} parent=215 // pred_check
          %p1541 = pneg %p139
        $region218: #{npc_cls_forward.1} parent=215 // pred_check_branch
          %1543 = sbr.rel (%p1541) target = $region220
        $region219: #{npc_cls_forward.1} parent=215 // pred_region
          %p1544 = scmp.lt.s32.totalorder %s119, 1
          %s1545 = scalar_select %p1544, %s119, 1
          %s1546 = smul.addr %s1545, 2
          %s1547 = smul.addr %s1546, 8
          %s1548 = scalar_lea.vmem %s1, %s1547
        $region220: #{npc_cls_forward.1} parent=215 // pred_fallthru
          _
        // Predicated region
        $region221: #{npc_cls_forward.1} parent=215 // pred_check
          %p1549 = pneg %p165
        $region222: #{npc_cls_forward.1} parent=215 // pred_check_branch
          %1551 = sbr.rel (%p1549) target = $region224
        $region223: #{npc_cls_forward.1} parent=215 // pred_region
          %p1552 = scmp.lt.s32.totalorder %s119, 1
          %s1553 = scalar_select %p1552, %s119, 1
          %s1554 = smul.addr %s1553, 2
          %s1555 = smul.addr %s1554, 8
          %s1556 = scalar_lea.vmem %s3, %s1555
        $region224: #{npc_cls_forward.1} parent=215 // pred_fallthru
          _
        // Predicated region
        $region225: #{npc_cls_forward.1} parent=215 // pred_check
          %p1557 = pneg %p191
        $region226: #{npc_cls_forward.1} parent=215 // pred_check_branch
          %1559 = sbr.rel (%p1557) target = $region228
        $region227: #{npc_cls_forward.1} parent=215 // pred_region
          %p1560 = scmp.lt.s32.totalorder %s119, 1
          %s1561 = scalar_select %p1560, %s119, 1
          %s1562 = scalar_lea.vmem %s5, %s1561
        $region228: #{npc_cls_forward.1} parent=215 // pred_fallthru
          _
      $region216: #{npc_cls_forward.1} parent=5 // pred_fallthru
        _
      %p1563 = scmp.le.s32.totalorder 1, %s119
      %p1564 = scmp.lt.s32.totalorder %s119, 3
      %p1565 = pnand %p1563, %p1564
      %p1566 = pneg %p1565
      // Predicated region
      $region229: #{npc_cls_forward.1} parent=5 // pred_check
        _
      $region230: #{npc_cls_forward.1} parent=5 // pred_check_branch
        %1568 = sbr.rel (%p1565) target = $region232
      $region231: #{npc_cls_forward.1} parent=5 // pred_region
        %s1569 = ssub.s32 %s119, 1
        // Predicated region
        $region233: #{npc_cls_forward.1} parent=231 // pred_check
          %p1570 = pneg %p890
        $region234: #{npc_cls_forward.1} parent=231 // pred_check_branch
          %1572 = sbr.rel (%p1570) target = $region236
        $region235: #{npc_cls_forward.1} parent=231 // pred_region
          %1574 = dma.done [#allocation3], 16
        $region236: #{npc_cls_forward.1} parent=231 // pred_fallthru
          _
        // Predicated region
        $region237: #{npc_cls_forward.1} parent=231 // pred_check
          %p1575 = pneg %p911
        $region238: #{npc_cls_forward.1} parent=231 // pred_check_branch
          %1577 = sbr.rel (%p1575) target = $region240
        $region239: #{npc_cls_forward.1} parent=231 // pred_region
          %1579 = dma.done [#allocation5], 16
        $region240: #{npc_cls_forward.1} parent=231 // pred_fallthru
          _
        // Predicated region
        $region241: #{npc_cls_forward.1} parent=231 // pred_check
          %p1580 = pneg %p974
        $region242: #{npc_cls_forward.1} parent=231 // pred_check_branch
          %1582 = sbr.rel (%p1580) target = $region244
        $region243: #{npc_cls_forward.1} parent=231 // pred_region
          %1584 = dma.done [#allocation5], 16
        $region244: #{npc_cls_forward.1} parent=231 // pred_fallthru
          _
        // Predicated region
        $region245: #{npc_cls_forward.1} parent=231 // pred_check
          %p1585 = pneg %p995
        $region246: #{npc_cls_forward.1} parent=231 // pred_check_branch
          %1587 = sbr.rel (%p1585) target = $region248
        $region247: #{npc_cls_forward.1} parent=231 // pred_region
          %1589 = dma.done [#allocation8], 16
        $region248: #{npc_cls_forward.1} parent=231 // pred_fallthru
          _
        // Predicated region
        $region249: #{npc_cls_forward.1} parent=231 // pred_check
          %p1590 = pneg %p1016
        $region250: #{npc_cls_forward.1} parent=231 // pred_check_branch
          %1592 = sbr.rel (%p1590) target = $region252
        $region251: #{npc_cls_forward.1} parent=231 // pred_region
          %1594 = dma.done [#allocation8], 16
        $region252: #{npc_cls_forward.1} parent=231 // pred_fallthru
          _
        // Predicated region
        $region253: #{npc_cls_forward.1} parent=231 // pred_check
          %p1595 = pneg %p1037
        $region254: #{npc_cls_forward.1} parent=231 // pred_check_branch
          %1597 = sbr.rel (%p1595) target = $region256
        $region255: #{npc_cls_forward.1} parent=231 // pred_region
          %1599 = dma.done [#allocation11], 16
        $region256: #{npc_cls_forward.1} parent=231 // pred_fallthru
          _
        // Predicated region
        $region257: #{npc_cls_forward.1} parent=231 // pred_check
          %p1600 = pneg %p1100
        $region258: #{npc_cls_forward.1} parent=231 // pred_check_branch
          %1602 = sbr.rel (%p1600) target = $region260
        $region259: #{npc_cls_forward.1} parent=231 // pred_region
          %1604 = dma.done [#allocation11], 16
        $region260: #{npc_cls_forward.1} parent=231 // pred_fallthru
          _
        // Predicated region
        $region261: #{npc_cls_forward.1} parent=231 // pred_check
          %p1605 = pneg %p1142
        $region262: #{npc_cls_forward.1} parent=231 // pred_check_branch
          %1607 = sbr.rel (%p1605) target = $region264
        $region263: #{npc_cls_forward.1} parent=231 // pred_region
          %1609 = dma.done [#allocation14], 16
        $region264: #{npc_cls_forward.1} parent=231 // pred_fallthru
          _
        // Predicated region
        $region265: #{npc_cls_forward.1} parent=231 // pred_check
          %p1610 = pneg %p1163
        $region266: #{npc_cls_forward.1} parent=231 // pred_check_branch
          %1612 = sbr.rel (%p1610) target = $region268
        $region267: #{npc_cls_forward.1} parent=231 // pred_region
          %1614 = dma.done [#allocation14], 16
        $region268: #{npc_cls_forward.1} parent=231 // pred_fallthru
          _
        // Predicated region
        $region269: #{npc_cls_forward.1} parent=231 // pred_check
          %p1615 = pneg %p1226
        $region270: #{npc_cls_forward.1} parent=231 // pred_check_branch
          %1617 = sbr.rel (%p1615) target = $region272
        $region271: #{npc_cls_forward.1} parent=231 // pred_region
          %1619 = dma.done [#allocation17], 16
        $region272: #{npc_cls_forward.1} parent=231 // pred_fallthru
          _
        // Predicated region
        $region273: #{npc_cls_forward.1} parent=231 // pred_check
          %p1620 = pneg %p1247
        $region274: #{npc_cls_forward.1} parent=231 // pred_check_branch
          %1622 = sbr.rel (%p1620) target = $region276
        $region275: #{npc_cls_forward.1} parent=231 // pred_region
          %1624 = dma.done [#allocation17], 16
        $region276: #{npc_cls_forward.1} parent=231 // pred_fallthru
          _
        %p1625 = scmp.lt.s32.totalorder %s124, 1
        %s1626 = scalar_select %p1625, %s124, 1
        %s1627 = smul.addr %s1626, 2
        %s1628 = smul.addr %s1627, 8
        %s1629 = scalar_lea.vmem %s1, %s1628
        %p1630 = pneg %p145
        %p1631 = pneg %p142
        %p1632 = scmp.lt.s32.totalorder %s124, 1
        %s1633 = scalar_select %p1632, %s124, 1
        %s1634 = smul.addr %s1633, 2
        %s1635 = smul.addr %s1634, 8
        %s1636 = scalar_lea.vmem %s3, %s1635
        %p1637 = pneg %p171
        %p1638 = pneg %p168
        %p1639 = scmp.lt.s32.totalorder %s124, 1
        %s1640 = scalar_select %p1639, %s124, 1
        %s1641 = scalar_lea.vmem %s5, %s1640
        %p1642 = pneg %p197
        %p1643 = pneg %p194
        %p1644 = pneg %p218
        %p1645 = pneg %p215
        %p1646 = pneg %p239
        %p1647 = pneg %p236
        %p1648 = pneg %p260
        %p1649 = pneg %p257
        %p1650 = pneg %p281
        %p1651 = pneg %p278
        %p1652 = pneg %p302
        %p1653 = pneg %p299
        %p1654 = pneg %p323
        %p1655 = pneg %p320
        %p1656 = pneg %p344
        %p1657 = pneg %p341
        %p1658 = pneg %p365
        %p1659 = pneg %p362
        %p1660 = pneg %p386
        %p1661 = pneg %p383
        %p1662 = pneg %p407
        %p1663 = pneg %p404
        %p1664 = pneg %p428
        %p1665 = pneg %p425
        %p1666 = pneg %p449
        %p1667 = pneg %p446
        %p1668 = pneg %p470
        %p1669 = pneg %p467
        %p1670 = pneg %p491
        %p1671 = pneg %p488
        %p1672 = pneg %p512
        %p1673 = pneg %p509
        %p1674 = pneg %p533
        %p1675 = pneg %p530
        %p1676 = pneg %p554
        %p1677 = pneg %p551
        %p1678 = pneg %p575
        %p1679 = pneg %p572
        %p1680 = pneg %p596
        %p1681 = pneg %p593
        %p1682 = pneg %p617
        %p1683 = pneg %p614
        %p1684 = pneg %p638
        %p1685 = pneg %p635
        %p1686 = pneg %p659
        %p1687 = pneg %p656
        %p1688 = pneg %p680
        %p1689 = pneg %p677
        %p1690 = pneg %p701
        %p1691 = pneg %p698
        %p1692 = pneg %p722
        %p1693 = pneg %p719
        %p1694 = pneg %p743
        %p1695 = pneg %p740
        %p1696 = pneg %p764
        %p1697 = pneg %p761
        %p1698 = pneg %p785
        %p1699 = pneg %p782
        %p1700 = pneg %p806
        %p1701 = pneg %p803
        %p1702 = pneg %p827
        %p1703 = pneg %p824
        %p1704 = pneg %p848
        %p1705 = pneg %p845
        %p1706 = pneg %p869
        %p1707 = pneg %p866
        %p1708 = pneg %p890
        %p1709 = pneg %p887
        %p1710 = pneg %p911
        %p1711 = pneg %p908
        %p1712 = pneg %p932
        %p1713 = pneg %p929
        %p1714 = pneg %p953
        %p1715 = pneg %p950
        %p1716 = pneg %p974
        %p1717 = pneg %p971
        %p1718 = pneg %p995
        %p1719 = pneg %p992
        %p1720 = pneg %p1016
        %p1721 = pneg %p1013
        %p1722 = pneg %p1037
        %p1723 = pneg %p1034
        %p1724 = pneg %p1058
        %p1725 = pneg %p1055
        %p1726 = pneg %p1079
        %p1727 = pneg %p1076
        %p1728 = pneg %p1100
        %p1729 = pneg %p1097
        %p1730 = pneg %p1121
        %p1731 = pneg %p1118
        %p1732 = pneg %p1142
        %p1733 = pneg %p1139
        %p1734 = pneg %p1163
        %p1735 = pneg %p1160
        %p1736 = pneg %p1184
        %p1737 = pneg %p1181
        %p1738 = pneg %p1205
        %p1739 = pneg %p1202
        %p1740 = pneg %p1226
        %p1741 = pneg %p1223
        %p1742 = pneg %p1247
        %p1743 = pneg %p1244
        %p1744 = pneg %p1273
        %p1745 = pneg %p1270
        %p1746 = scmp.lt.s32.totalorder %s124, 1
        %s1747 = scalar_select %p1746, %s124, 1
        %s1748 = scalar_lea.vmem %s107, %s1747
        %p1749 = scmp.lt.s32.totalorder %s124, 1
        %s1750 = scalar_select %p1749, %s124, 1
        %s1751 = smul.addr %s1750, 2
        %s1752 = smul.addr %s1751, 8
        %s1753 = scalar_lea.vmem %s1, %s1752
        %p1754 = scmp.lt.s32.totalorder %s124, 1
        %s1755 = scalar_select %p1754, %s124, 1
        %s1756 = smul.addr %s1755, 2
        %s1757 = smul.addr %s1756, 8
        %s1758 = scalar_lea.vmem %s3, %s1757
        %p1759 = scmp.lt.s32.totalorder %s124, 1
        %s1760 = scalar_select %p1759, %s124, 1
        %s1761 = scalar_lea.vmem %s5, %s1760
        %p1762 = scmp.lt.s32.totalorder %s124, 1
        %s1763 = scalar_select %p1762, %s124, 1
        %s1764 = scalar_lea.vmem %s107, %s1763
        %v1765 = vld [vmem:[%s1753] sm:$0xff]
        %v1766 = vld [vmem:[%s1753 + $0x8] sm:$0xff]
        %vm1767 = vcmask 523264
        %v1768 = vsel %vm1767, %v1765, 0.0
        %1769 = vadd.xlane.f32.xlu0 %v1768
        %v1770 = vpop.xlane.xlu0 %1769
        %v1771 = vsel %vm1767, %v1766, 0.0
        %1772 = vadd.xlane.f32.xlu0 %v1771
        %v1773 = vpop.xlane.xlu0 %1772
        %v1774 = vrcp.pop 64.0
        %v1775 = vmul.f32 64.0, %v1774
        %v1776 = vsub.f32 1.0, %v1775
        %v1777 = vmul.f32 %v1774, %v1776
        %v1778 = vadd.f32 %v1774, %v1777
        %vm1779 = vweird.f32 %v1774
        %v1780 = vsel %vm1779, %v1774, %v1778
        %v1781 = vmul.f32 %v1770, %v1780
        %v1782 = vmul.f32 %v1773, %v1780
        %v1783 = vsub.f32 %v1765, %v1781
        %v1784 = vsub.f32 %v1766, %v1782
        %v1785 = vmul.f32 %v1783, %v1783
        %v1786 = vmul.f32 %v1784, %v1784
        %v1787 = vsel %vm1767, %v1785, 0.0
        %1788 = vadd.xlane.f32.xlu0 %v1787
        %v1789 = vpop.xlane.xlu0 %1788
        %v1790 = vsel %vm1767, %v1786, 0.0
        %1791 = vadd.xlane.f32.xlu0 %v1790
        %v1792 = vpop.xlane.xlu0 %1791
        %v1793 = vmul.f32 %v1789, %v1780
        %v1794 = vmul.f32 %v1792, %v1780
        %v1795 = vadd.f32 %v1793, 1e-12
        %v1796 = vadd.f32 %v1794, 1e-12
        %v1797 = vrsqrt.pop %v1795
        %v1798 = vmul.f32 %v1797, %v1795
        %v1799 = vmul.f32 %v1798, %v1797
        %v1800 = vmul.f32 0.5, %v1799
        %v1801 = vsub.f32 1.5, %v1800
        %v1802 = vmul.f32 %v1797, %v1801
        %vm1803 = vweird.f32 %v1795
        %vm1804 = vweird.f32 %v1797
        %vm1805 = vmor %vm1803, %vm1804
        %v1806 = vsel %vm1805, %v1797, %v1802
        %v1807 = vrsqrt.pop %v1796
        %v1808 = vmul.f32 %v1807, %v1796
        %v1809 = vmul.f32 %v1808, %v1807
        %v1810 = vmul.f32 0.5, %v1809
        %v1811 = vsub.f32 1.5, %v1810
        %v1812 = vmul.f32 %v1807, %v1811
        %vm1813 = vweird.f32 %v1796
        %vm1814 = vweird.f32 %v1807
        %vm1815 = vmor %vm1813, %vm1814
        %v1816 = vsel %vm1815, %v1807, %v1812
        %v1817 = vmul.f32 %v1783, %v1806
        %v1818 = vmul.f32 %v1784, %v1816
        %v1819 = vld [vmem:[#allocation16] sm:$0x1]
        %v1821 = vperm.slane %v1819, 0
        %v1823 = vmul.f32 %v1817, %v1821
        %v1824 = vmul.f32 %v1818, %v1821
        %v1825 = vld [vmem:[#allocation18] sm:$0x1]
        %v1827 = vperm.slane %v1825, 0
        %v1829 = vadd.f32 %v1823, %v1827
        %v1830 = vadd.f32 %v1824, %v1827
        %v1831 = vld [vmem:[%s1758] sm:$0xff]
        %v1832 = vld [vmem:[%s1758 + $0x8] sm:$0xff]
        %v1833 = vsel %vm1767, %v1831, 0.0
        %1834 = vadd.xlane.f32.xlu0 %v1833
        %v1835 = vpop.xlane.xlu0 %1834
        %v1836 = vsel %vm1767, %v1832, 0.0
        %1837 = vadd.xlane.f32.xlu0 %v1836
        %v1838 = vpop.xlane.xlu0 %1837
        %v1839 = vmul.f32 %v1835, %v1780
        %v1840 = vmul.f32 %v1838, %v1780
        %v1841 = vsub.f32 %v1831, %v1839
        %v1842 = vsub.f32 %v1832, %v1840
        %v1843 = vmul.f32 %v1841, %v1841
        %v1844 = vmul.f32 %v1842, %v1842
        %v1845 = vsel %vm1767, %v1843, 0.0
        %1846 = vadd.xlane.f32.xlu0 %v1845
        %v1847 = vpop.xlane.xlu0 %1846
        %v1848 = vsel %vm1767, %v1844, 0.0
        %1849 = vadd.xlane.f32.xlu0 %v1848
        %v1850 = vpop.xlane.xlu0 %1849
        %v1851 = vmul.f32 %v1847, %v1780
        %v1852 = vmul.f32 %v1850, %v1780
        %v1853 = vadd.f32 %v1851, 1e-12
        %v1854 = vadd.f32 %v1852, 1e-12
        %v1855 = vrsqrt.pop %v1853
        %v1856 = vmul.f32 %v1855, %v1853
        %v1857 = vmul.f32 %v1856, %v1855
        %v1858 = vmul.f32 0.5, %v1857
        %v1859 = vsub.f32 1.5, %v1858
        %v1860 = vmul.f32 %v1855, %v1859
        %vm1861 = vweird.f32 %v1853
        %vm1862 = vweird.f32 %v1855
        %vm1863 = vmor %vm1861, %vm1862
        %v1864 = vsel %vm1863, %v1855, %v1860
        %v1865 = vrsqrt.pop %v1854
        %v1866 = vmul.f32 %v1865, %v1854
        %v1867 = vmul.f32 %v1866, %v1865
        %v1868 = vmul.f32 0.5, %v1867
        %v1869 = vsub.f32 1.5, %v1868
        %v1870 = vmul.f32 %v1865, %v1869
        %vm1871 = vweird.f32 %v1854
        %vm1872 = vweird.f32 %v1865
        %vm1873 = vmor %vm1871, %vm1872
        %v1874 = vsel %vm1873, %v1865, %v1870
        %v1875 = vmul.f32 %v1841, %v1864
        %v1876 = vmul.f32 %v1842, %v1874
        %v1877 = vld [vmem:[%s7] sm:$0x1]
        %v1879 = vperm.slane %v1877, 0
        %v1881 = vmul.f32 %v1875, %v1879
        %v1882 = vmul.f32 %v1876, %v1879
        %v1883 = vld [vmem:[%s9] sm:$0x1]
        %v1885 = vperm.slane %v1883, 0
        %v1887 = vadd.f32 %v1881, %v1885
        %v1888 = vadd.f32 %v1882, %v1885
        %v1889 = vld [vmem:[%s1761] sm:$0x1]
        %v1890 = vld [vmem:[%s65] sm:$0xff]
        %v1891 = vld [vmem:[%s65 + $0x8] sm:$0xff]
        %v1892 = vld [vmem:[%s65 + $0x10] sm:$0xff]
        %v1893 = vld [vmem:[%s65 + $0x18] sm:$0xff]
        %v1894 = vld [vmem:[%s65 + $0x20] sm:$0xff]
        %v1895 = vld [vmem:[%s65 + $0x28] sm:$0xff]
        %v1896 = vld [vmem:[%s65 + $0x30] sm:$0xff]
        %v1897 = vld [vmem:[%s65 + $0x38] sm:$0xff]
        %v1898 = vld [vmem:[%s65 + $0x40] sm:$0xff]
        %v1899 = vld [vmem:[%s65 + $0x48] sm:$0xff]
        %v1900 = vld [vmem:[%s65 + $0x50] sm:$0xff]
        %v1901 = vld [vmem:[%s65 + $0x58] sm:$0xff]
        %v1902 = vld [vmem:[%s65 + $0x60] sm:$0xff]
        %v1903 = vld [vmem:[%s65 + $0x68] sm:$0xff]
        %v1904 = vld [vmem:[%s65 + $0x70] sm:$0xff]
        %v1905 = vld [vmem:[%s65 + $0x78] sm:$0xff]
        %v1906 = vld [vmem:[%s57] sm:$0x3]
        %v1908 = vperm.slane %v1906, 0
        %v1909 = vperm.slane %v1906, 1
        %v1913 = vsel %vm1767, %v1887, 0
        %v1916 = vsel %vm1767, %v1888, 0
        %1918 = vmatpush.msra.mxu0 0.0
        %1919 = vmatpush.msra.mxu0 0.0
        %1920 = vmatpush.msra.mxu0 0.0
        %1921 = vmatpush.msra.mxu0 0.0
        %1922 = vmatpush.msra.mxu0 0.0
        %1923 = vmatpush.msra.mxu0 0.0
        %1924 = vmatpush.msra.mxu0 0.0
        %1925 = vmatpush.msra.mxu0 0.0
        %1926 = vmatpush.msra.mxu0 %v1904
        %1927 = vmatpush.msra.mxu0 %v1902
        %1928 = vmatpush.msra.mxu0 %v1900
        %1929 = vmatpush.msra.mxu0 %v1898
        %1930 = vmatpush.msra.mxu0 %v1896
        %1931 = vmatpush.msra.mxu0 %v1894
        %1932 = vmatpush.msra.mxu0 %v1892
        %1933 = vmatpush.msra.mxu0 %v1890
        %1934 = vmatmul.f32.gmra.mxu0 %v1913
        %v1935 = vpop.f32.mrf.mxu0
        %v1936 = vadd.f32 %v1908, %v1935
        %1937 = vmatmul.f32.gmra.mxu0 %v1916
        %v1938 = vpop.f32.mrf.mxu0
        %v1939 = vadd.f32 %v1908, %v1938
        %1940 = vdwg.mxu0
        %1941 = vmatpush.msra.mxu0 0.0
        %1942 = vmatpush.msra.mxu0 0.0
        %1943 = vmatpush.msra.mxu0 0.0
        %1944 = vmatpush.msra.mxu0 0.0
        %1945 = vmatpush.msra.mxu0 0.0
        %1946 = vmatpush.msra.mxu0 0.0
        %1947 = vmatpush.msra.mxu0 0.0
        %1948 = vmatpush.msra.mxu0 0.0
        %1949 = vmatpush.msra.mxu0 %v1905
        %1950 = vmatpush.msra.mxu0 %v1903
        %1951 = vmatpush.msra.mxu0 %v1901
        %1952 = vmatpush.msra.mxu0 %v1899
        %1953 = vmatpush.msra.mxu0 %v1897
        %1954 = vmatpush.msra.mxu0 %v1895
        %1955 = vmatpush.msra.mxu0 %v1893
        %1956 = vmatpush.msra.mxu0 %v1891
        %1957 = vmatmul.f32.gmra.mxu0 %v1913
        %v1958 = vpop.f32.mrf.mxu0
        %v1959 = vadd.f32 %v1909, %v1958
        %1960 = vmatmul.f32.gmra.mxu0 %v1916
        %v1961 = vpop.f32.mrf.mxu0
        %v1962 = vadd.f32 %v1909, %v1961
        %1963 = vdwg.mxu0
        %1966 = vrot.lane.b32.xlu0 %v1936, 64
        %v1967 = vpop.permute.xlu0 %1966
        %1968 = vrot.lane.b32.xlu0 %v1939, 64
        %v1969 = vpop.permute.xlu0 %1968
        %vm1970 = vcmask 130048
        %v1971 = vsel %vm1970, %v1936, 0
        %v1973 = vsel %vm1970, %v1939, 0
        %v1975 = vsel %vm1970, %v1967, 0
        %v1977 = vsel %vm1970, %v1969, 0
        %1979 = vmatpush.xpose.msra.mxu0 0.0
        %1980 = vmatpush.xpose.msra.mxu0 0.0
        %1981 = vmatpush.xpose.msra.mxu0 0.0
        %1982 = vmatpush.xpose.msra.mxu0 0.0
        %1983 = vmatpush.xpose.msra.mxu0 0.0
        %1984 = vmatpush.xpose.msra.mxu0 0.0
        %1985 = vmatpush.xpose.msra.mxu0 0.0
        %1986 = vmatpush.xpose.msra.mxu0 0.0
        %1987 = vmatpush.xpose.msra.mxu0 0.0
        %1988 = vmatpush.xpose.msra.mxu0 0.0
        %1989 = vmatpush.xpose.msra.mxu0 0.0
        %1990 = vmatpush.xpose.msra.mxu0 0.0
        %1991 = vmatpush.xpose.msra.mxu0 0.0
        %1992 = vmatpush.xpose.msra.mxu0 0.0
        %1993 = vmatpush.xpose.msra.mxu0 %v1977
        %1994 = vmatpush.xpose.msra.mxu0 %v1975
        %1995 = vmatmul.f32.gmra.mxu0 %v1971
        %v1996 = vpop.f32.mrf.mxu0
        %v1997 = vadd.f32 0.0, %v1996
        %1998 = vmatmul.f32.gmra.mxu0 %v1973
        %v1999 = vpop.f32.mrf.mxu0
        %v2000 = vadd.f32 0.0, %v1999
        %2001 = vdwg.mxu0
        %v2002 = vmul.f32 %v1997, 0.25
        %v2003 = vmul.f32 %v2000, 0.25
        %v2005 = vperm.slane %v1889, 0
        %v2007 = vadd.f32 %v2002, %v2005
        %v2008 = vadd.f32 %v2003, %v2005
        %v2009 = vsel %vm1970, %v2007, -inf
        %2010 = vmax.xlane.f32.xlu0 %v2009
        %v2011 = vpop.xlane.xlu0 %2010
        %v2012 = vsel %vm1970, %v2008, -inf
        %2013 = vmax.xlane.f32.xlu0 %v2012
        %v2014 = vpop.xlane.xlu0 %2013
        %v2015 = vsub.f32 %v2007, %v2011
        %v2016 = vsub.f32 %v2008, %v2014
        %v2017 = vmul.f32 %v2015, 1.442695
        %v2018 = vpow.pop %v2017
        %v2019 = vmul.f32 %v2016, 1.442695
        %v2020 = vpow.pop %v2019
        %v2021 = vsel %vm1970, %v2018, 0.0
        %2022 = vadd.xlane.f32.xlu0 %v2021
        %v2023 = vpop.xlane.xlu0 %2022
        %v2024 = vsel %vm1970, %v2020, 0.0
        %2025 = vadd.xlane.f32.xlu0 %v2024
        %v2026 = vpop.xlane.xlu0 %2025
        %v2027 = vrcp.pop %v2023
        %v2028 = vrcp.pop %v2026
        %v2029 = vmul.f32 %v2018, %v2027
        %v2030 = vmul.f32 %v2020, %v2028
        %v2032 = vsel %vm1970, %v2029, 0
        %v2035 = vsel %vm1970, %v2030, 0
        %2037 = vmatpush.msra.mxu0 0.0
        %2038 = vmatpush.msra.mxu0 0.0
        %2039 = vmatpush.msra.mxu0 0.0
        %2040 = vmatpush.msra.mxu0 0.0
        %2041 = vmatpush.msra.mxu0 0.0
        %2042 = vmatpush.msra.mxu0 0.0
        %2043 = vmatpush.msra.mxu0 0.0
        %2044 = vmatpush.msra.mxu0 0.0
        %2045 = vmatpush.msra.mxu0 0.0
        %2046 = vmatpush.msra.mxu0 0.0
        %2047 = vmatpush.msra.mxu0 0.0
        %2048 = vmatpush.msra.mxu0 0.0
        %2049 = vmatpush.msra.mxu0 0.0
        %2050 = vmatpush.msra.mxu0 0.0
        %2051 = vmatpush.msra.mxu0 %v1962
        %2052 = vmatpush.msra.mxu0 %v1959
        %2053 = vmatmul.f32.gmra.mxu0 %v2032
        %v2054 = vpop.f32.mrf.mxu0
        %v2055 = vadd.f32 0.0, %v2054
        %2056 = vmatmul.f32.gmra.mxu0 %v2035
        %v2057 = vpop.f32.mrf.mxu0
        %v2058 = vadd.f32 0.0, %v2057
        %2059 = vdwg.mxu0
        %2060 = vrot.lane.b32.xlu0 %v1936, 112
        %v2061 = vpop.permute.xlu0 %2060
        %2062 = vrot.lane.b32.xlu0 %v1939, 112
        %v2063 = vpop.permute.xlu0 %2062
        %2064 = vrot.lane.b32.xlu0 %v1936, 48
        %v2065 = vpop.permute.xlu0 %2064
        %2066 = vrot.lane.b32.xlu0 %v1939, 48
        %v2067 = vpop.permute.xlu0 %2066
        %v2068 = vsel %vm1970, %v2061, 0
        %v2070 = vsel %vm1970, %v2063, 0
        %v2072 = vsel %vm1970, %v2065, 0
        %v2074 = vsel %vm1970, %v2067, 0
        %2076 = vmatpush.xpose.msra.mxu0 0.0
        %2077 = vmatpush.xpose.msra.mxu0 0.0
        %2078 = vmatpush.xpose.msra.mxu0 0.0
        %2079 = vmatpush.xpose.msra.mxu0 0.0
        %2080 = vmatpush.xpose.msra.mxu0 0.0
        %2081 = vmatpush.xpose.msra.mxu0 0.0
        %2082 = vmatpush.xpose.msra.mxu0 0.0
        %2083 = vmatpush.xpose.msra.mxu0 0.0
        %2084 = vmatpush.xpose.msra.mxu0 0.0
        %2085 = vmatpush.xpose.msra.mxu0 0.0
        %2086 = vmatpush.xpose.msra.mxu0 0.0
        %2087 = vmatpush.xpose.msra.mxu0 0.0
        %2088 = vmatpush.xpose.msra.mxu0 0.0
        %2089 = vmatpush.xpose.msra.mxu0 0.0
        %2090 = vmatpush.xpose.msra.mxu0 %v2074
        %2091 = vmatpush.xpose.msra.mxu0 %v2072
        %2092 = vmatmul.f32.gmra.mxu0 %v2068
        %v2093 = vpop.f32.mrf.mxu0
        %v2094 = vadd.f32 0.0, %v2093
        %2095 = vmatmul.f32.gmra.mxu0 %v2070
        %v2096 = vpop.f32.mrf.mxu0
        %v2097 = vadd.f32 0.0, %v2096
        %2098 = vdwg.mxu0
        %v2099 = vmul.f32 %v2094, 0.25
        %v2100 = vmul.f32 %v2097, 0.25
        %v2101 = vadd.f32 %v2099, %v2005
        %v2102 = vadd.f32 %v2100, %v2005
        %v2103 = vsel %vm1970, %v2101, -inf
        %2104 = vmax.xlane.f32.xlu0 %v2103
        %v2105 = vpop.xlane.xlu0 %2104
        %v2106 = vsel %vm1970, %v2102, -inf
        %2107 = vmax.xlane.f32.xlu0 %v2106
        %v2108 = vpop.xlane.xlu0 %2107
        %v2109 = vsub.f32 %v2101, %v2105
        %v2110 = vsub.f32 %v2102, %v2108
        %v2111 = vmul.f32 %v2109, 1.442695
        %v2112 = vpow.pop %v2111
        %v2113 = vmul.f32 %v2110, 1.442695
        %v2114 = vpow.pop %v2113
        %v2115 = vsel %vm1970, %v2112, 0.0
        %2116 = vadd.xlane.f32.xlu0 %v2115
        %v2117 = vpop.xlane.xlu0 %2116
        %v2118 = vsel %vm1970, %v2114, 0.0
        %2119 = vadd.xlane.f32.xlu0 %v2118
        %v2120 = vpop.xlane.xlu0 %2119
        %v2121 = vrcp.pop %v2117
        %v2122 = vrcp.pop %v2120
        %v2123 = vmul.f32 %v2112, %v2121
        %v2124 = vmul.f32 %v2114, %v2122
        %2127 = vrot.lane.b32.xlu0 %v1959, 112
        %v2128 = vpop.permute.xlu0 %2127
        %2129 = vrot.lane.b32.xlu0 %v1962, 112
        %v2130 = vpop.permute.xlu0 %2129
        %v2134 = vsel %vm1970, %v2123, 0
        %v2137 = vsel %vm1970, %v2124, 0
        %2139 = vmatpush.msra.mxu0 0.0
        %2140 = vmatpush.msra.mxu0 0.0
        %2141 = vmatpush.msra.mxu0 0.0
        %2142 = vmatpush.msra.mxu0 0.0
        %2143 = vmatpush.msra.mxu0 0.0
        %2144 = vmatpush.msra.mxu0 0.0
        %2145 = vmatpush.msra.mxu0 0.0
        %2146 = vmatpush.msra.mxu0 0.0
        %2147 = vmatpush.msra.mxu0 0.0
        %2148 = vmatpush.msra.mxu0 0.0
        %2149 = vmatpush.msra.mxu0 0.0
        %2150 = vmatpush.msra.mxu0 0.0
        %2151 = vmatpush.msra.mxu0 0.0
        %2152 = vmatpush.msra.mxu0 0.0
        %2153 = vmatpush.msra.mxu0 %v2130
        %2154 = vmatpush.msra.mxu0 %v2128
        %2155 = vmatmul.f32.gmra.mxu0 %v2134
        %v2156 = vpop.f32.mrf.mxu0
        %v2157 = vadd.f32 0.0, %v2156
        %2158 = vmatmul.f32.gmra.mxu0 %v2137
        %v2159 = vpop.f32.mrf.mxu0
        %v2160 = vadd.f32 0.0, %v2159
        %2161 = vdwg.mxu0
        %2162 = vrot.lane.b32.xlu0 %v1936, 96
        %v2163 = vpop.permute.xlu0 %2162
        %2164 = vrot.lane.b32.xlu0 %v1939, 96
        %v2165 = vpop.permute.xlu0 %2164
        %2166 = vrot.lane.b32.xlu0 %v1936, 32
        %v2167 = vpop.permute.xlu0 %2166
        %2168 = vrot.lane.b32.xlu0 %v1939, 32
        %v2169 = vpop.permute.xlu0 %2168
        %v2170 = vsel %vm1970, %v2163, 0
        %v2172 = vsel %vm1970, %v2165, 0
        %v2174 = vsel %vm1970, %v2167, 0
        %v2176 = vsel %vm1970, %v2169, 0
        %2178 = vmatpush.xpose.msra.mxu0 0.0
        %2179 = vmatpush.xpose.msra.mxu0 0.0
        %2180 = vmatpush.xpose.msra.mxu0 0.0
        %2181 = vmatpush.xpose.msra.mxu0 0.0
        %2182 = vmatpush.xpose.msra.mxu0 0.0
        %2183 = vmatpush.xpose.msra.mxu0 0.0
        %2184 = vmatpush.xpose.msra.mxu0 0.0
        %2185 = vmatpush.xpose.msra.mxu0 0.0
        %2186 = vmatpush.xpose.msra.mxu0 0.0
        %2187 = vmatpush.xpose.msra.mxu0 0.0
        %2188 = vmatpush.xpose.msra.mxu0 0.0
        %2189 = vmatpush.xpose.msra.mxu0 0.0
        %2190 = vmatpush.xpose.msra.mxu0 0.0
        %2191 = vmatpush.xpose.msra.mxu0 0.0
        %2192 = vmatpush.xpose.msra.mxu0 %v2176
        %2193 = vmatpush.xpose.msra.mxu0 %v2174
        %2194 = vmatmul.f32.gmra.mxu0 %v2170
        %v2195 = vpop.f32.mrf.mxu0
        %v2196 = vadd.f32 0.0, %v2195
        %2197 = vmatmul.f32.gmra.mxu0 %v2172
        %v2198 = vpop.f32.mrf.mxu0
        %v2199 = vadd.f32 0.0, %v2198
        %2200 = vdwg.mxu0
        %v2201 = vmul.f32 %v2196, 0.25
        %v2202 = vmul.f32 %v2199, 0.25
        %v2203 = vadd.f32 %v2201, %v2005
        %v2204 = vadd.f32 %v2202, %v2005
        %v2205 = vsel %vm1970, %v2203, -inf
        %2206 = vmax.xlane.f32.xlu0 %v2205
        %v2207 = vpop.xlane.xlu0 %2206
        %v2208 = vsel %vm1970, %v2204, -inf
        %2209 = vmax.xlane.f32.xlu0 %v2208
        %v2210 = vpop.xlane.xlu0 %2209
        %v2211 = vsub.f32 %v2203, %v2207
        %v2212 = vsub.f32 %v2204, %v2210
        %v2213 = vmul.f32 %v2211, 1.442695
        %v2214 = vpow.pop %v2213
        %v2215 = vmul.f32 %v2212, 1.442695
        %v2216 = vpow.pop %v2215
        %v2217 = vsel %vm1970, %v2214, 0.0
        %2218 = vadd.xlane.f32.xlu0 %v2217
        %v2219 = vpop.xlane.xlu0 %2218
        %v2220 = vsel %vm1970, %v2216, 0.0
        %2221 = vadd.xlane.f32.xlu0 %v2220
        %v2222 = vpop.xlane.xlu0 %2221
        %v2223 = vrcp.pop %v2219
        %v2224 = vrcp.pop %v2222
        %v2225 = vmul.f32 %v2214, %v2223
        %v2226 = vmul.f32 %v2216, %v2224
        %2227 = vrot.lane.b32.xlu0 %v1959, 96
        %v2228 = vpop.permute.xlu0 %2227
        %2229 = vrot.lane.b32.xlu0 %v1962, 96
        %v2230 = vpop.permute.xlu0 %2229
        %v2234 = vsel %vm1970, %v2225, 0
        %v2237 = vsel %vm1970, %v2226, 0
        %2239 = vmatpush.msra.mxu0 0.0
        %2240 = vmatpush.msra.mxu0 0.0
        %2241 = vmatpush.msra.mxu0 0.0
        %2242 = vmatpush.msra.mxu0 0.0
        %2243 = vmatpush.msra.mxu0 0.0
        %2244 = vmatpush.msra.mxu0 0.0
        %2245 = vmatpush.msra.mxu0 0.0
        %2246 = vmatpush.msra.mxu0 0.0
        %2247 = vmatpush.msra.mxu0 0.0
        %2248 = vmatpush.msra.mxu0 0.0
        %2249 = vmatpush.msra.mxu0 0.0
        %2250 = vmatpush.msra.mxu0 0.0
        %2251 = vmatpush.msra.mxu0 0.0
        %2252 = vmatpush.msra.mxu0 0.0
        %2253 = vmatpush.msra.mxu0 %v2230
        %2254 = vmatpush.msra.mxu0 %v2228
        %2255 = vmatmul.f32.gmra.mxu0 %v2234
        %v2256 = vpop.f32.mrf.mxu0
        %v2257 = vadd.f32 0.0, %v2256
        %2258 = vmatmul.f32.gmra.mxu0 %v2237
        %v2259 = vpop.f32.mrf.mxu0
        %v2260 = vadd.f32 0.0, %v2259
        %2261 = vdwg.mxu0
        %2262 = vrot.lane.b32.xlu0 %v1936, 80
        %v2263 = vpop.permute.xlu0 %2262
        %2264 = vrot.lane.b32.xlu0 %v1939, 80
        %v2265 = vpop.permute.xlu0 %2264
        %2266 = vrot.lane.b32.xlu0 %v1936, 16
        %v2267 = vpop.permute.xlu0 %2266
        %2268 = vrot.lane.b32.xlu0 %v1939, 16
        %v2269 = vpop.permute.xlu0 %2268
        %v2270 = vsel %vm1970, %v2263, 0
        %v2272 = vsel %vm1970, %v2265, 0
        %v2274 = vsel %vm1970, %v2267, 0
        %v2276 = vsel %vm1970, %v2269, 0
        %2278 = vmatpush.xpose.msra.mxu0 0.0
        %2279 = vmatpush.xpose.msra.mxu0 0.0
        %2280 = vmatpush.xpose.msra.mxu0 0.0
        %2281 = vmatpush.xpose.msra.mxu0 0.0
        %2282 = vmatpush.xpose.msra.mxu0 0.0
        %2283 = vmatpush.xpose.msra.mxu0 0.0
        %2284 = vmatpush.xpose.msra.mxu0 0.0
        %2285 = vmatpush.xpose.msra.mxu0 0.0
        %2286 = vmatpush.xpose.msra.mxu0 0.0
        %2287 = vmatpush.xpose.msra.mxu0 0.0
        %2288 = vmatpush.xpose.msra.mxu0 0.0
        %2289 = vmatpush.xpose.msra.mxu0 0.0
        %2290 = vmatpush.xpose.msra.mxu0 0.0
        %2291 = vmatpush.xpose.msra.mxu0 0.0
        %2292 = vmatpush.xpose.msra.mxu0 %v2276
        %2293 = vmatpush.xpose.msra.mxu0 %v2274
        %2294 = vmatmul.f32.gmra.mxu0 %v2270
        %v2295 = vpop.f32.mrf.mxu0
        %v2296 = vadd.f32 0.0, %v2295
        %2297 = vmatmul.f32.gmra.mxu0 %v2272
        %v2298 = vpop.f32.mrf.mxu0
        %v2299 = vadd.f32 0.0, %v2298
        %2300 = vdwg.mxu0
        %v2301 = vmul.f32 %v2296, 0.25
        %v2302 = vmul.f32 %v2299, 0.25
        %v2303 = vadd.f32 %v2301, %v2005
        %v2304 = vadd.f32 %v2302, %v2005
        %v2305 = vsel %vm1970, %v2303, -inf
        %2306 = vmax.xlane.f32.xlu0 %v2305
        %v2307 = vpop.xlane.xlu0 %2306
        %v2308 = vsel %vm1970, %v2304, -inf
        %2309 = vmax.xlane.f32.xlu0 %v2308
        %v2310 = vpop.xlane.xlu0 %2309
        %v2311 = vsub.f32 %v2303, %v2307
        %v2312 = vsub.f32 %v2304, %v2310
        %v2313 = vmul.f32 %v2311, 1.442695
        %v2314 = vpow.pop %v2313
        %v2315 = vmul.f32 %v2312, 1.442695
        %v2316 = vpow.pop %v2315
        %v2317 = vsel %vm1970, %v2314, 0.0
        %2318 = vadd.xlane.f32.xlu0 %v2317
        %v2319 = vpop.xlane.xlu0 %2318
        %v2320 = vsel %vm1970, %v2316, 0.0
        %2321 = vadd.xlane.f32.xlu0 %v2320
        %v2322 = vpop.xlane.xlu0 %2321
        %v2323 = vrcp.pop %v2319
        %v2324 = vrcp.pop %v2322
        %v2325 = vmul.f32 %v2314, %v2323
        %v2326 = vmul.f32 %v2316, %v2324
        %2327 = vrot.lane.b32.xlu0 %v1959, 80
        %v2328 = vpop.permute.xlu0 %2327
        %2329 = vrot.lane.b32.xlu0 %v1962, 80
        %v2330 = vpop.permute.xlu0 %2329
        %v2334 = vsel %vm1970, %v2325, 0
        %v2337 = vsel %vm1970, %v2326, 0
        %2339 = vmatpush.msra.mxu0 0.0
        %2340 = vmatpush.msra.mxu0 0.0
        %2341 = vmatpush.msra.mxu0 0.0
        %2342 = vmatpush.msra.mxu0 0.0
        %2343 = vmatpush.msra.mxu0 0.0
        %2344 = vmatpush.msra.mxu0 0.0
        %2345 = vmatpush.msra.mxu0 0.0
        %2346 = vmatpush.msra.mxu0 0.0
        %2347 = vmatpush.msra.mxu0 0.0
        %2348 = vmatpush.msra.mxu0 0.0
        %2349 = vmatpush.msra.mxu0 0.0
        %2350 = vmatpush.msra.mxu0 0.0
        %2351 = vmatpush.msra.mxu0 0.0
        %2352 = vmatpush.msra.mxu0 0.0
        %2353 = vmatpush.msra.mxu0 %v2330
        %2354 = vmatpush.msra.mxu0 %v2328
        %2355 = vmatmul.f32.gmra.mxu0 %v2334
        %v2356 = vpop.f32.mrf.mxu0
        %v2357 = vadd.f32 0.0, %v2356
        %2358 = vmatmul.f32.gmra.mxu0 %v2337
        %v2359 = vpop.f32.mrf.mxu0
        %v2360 = vadd.f32 0.0, %v2359
        %2361 = vdwg.mxu0
        %2364 = vrot.lane.b32.xlu0 %v2157, 16
        %v2365 = vpop.permute.xlu0 %2364
        %2366 = vrot.lane.b32.xlu0 %v2160, 16
        %v2367 = vpop.permute.xlu0 %2366
        %2372 = vrot.lane.b32.xlu0 %v2257, 32
        %v2373 = vpop.permute.xlu0 %2372
        %2374 = vrot.lane.b32.xlu0 %v2260, 32
        %v2375 = vpop.permute.xlu0 %2374
        %2380 = vrot.lane.b32.xlu0 %v2357, 48
        %v2381 = vpop.permute.xlu0 %2380
        %2382 = vrot.lane.b32.xlu0 %v2360, 48
        %v2383 = vpop.permute.xlu0 %2382
        %v2386 = vsel %vm1970, %v2055, %v2365
        %v2387 = vsel %vm1970, %v2058, %v2367
        %vm2388 = vcmask 261120
        %v2389 = vsel %vm2388, %v2386, %v2373
        %v2390 = vsel %vm2388, %v2387, %v2375
        %vm2391 = vcmask 392192
        %v2392 = vsel %vm2391, %v2389, %v2381
        %v2393 = vsel %vm2391, %v2390, %v2383
        %v2394 = vld [vmem:[%s63] sm:$0xff]
        %v2395 = vld [vmem:[%s63 + $0x8] sm:$0xff]
        %v2396 = vld [vmem:[%s63 + $0x10] sm:$0xff]
        %v2397 = vld [vmem:[%s63 + $0x18] sm:$0xff]
        %v2398 = vld [vmem:[%s63 + $0x20] sm:$0xff]
        %v2399 = vld [vmem:[%s63 + $0x28] sm:$0xff]
        %v2400 = vld [vmem:[%s63 + $0x30] sm:$0xff]
        %v2401 = vld [vmem:[%s63 + $0x38] sm:$0xff]
        %v2402 = vld [vmem:[%s55] sm:$0x1]
        %v2404 = vperm.slane %v2402, 0
        %v2407 = vsel %vm1767, %v2392, 0
        %v2410 = vsel %vm1767, %v2393, 0
        %2412 = vmatpush.msra.mxu0 0.0
        %2413 = vmatpush.msra.mxu0 0.0
        %2414 = vmatpush.msra.mxu0 0.0
        %2415 = vmatpush.msra.mxu0 0.0
        %2416 = vmatpush.msra.mxu0 0.0
        %2417 = vmatpush.msra.mxu0 0.0
        %2418 = vmatpush.msra.mxu0 0.0
        %2419 = vmatpush.msra.mxu0 0.0
        %2420 = vmatpush.msra.mxu0 %v2401
        %2421 = vmatpush.msra.mxu0 %v2400
        %2422 = vmatpush.msra.mxu0 %v2399
        %2423 = vmatpush.msra.mxu0 %v2398
        %2424 = vmatpush.msra.mxu0 %v2397
        %2425 = vmatpush.msra.mxu0 %v2396
        %2426 = vmatpush.msra.mxu0 %v2395
        %2427 = vmatpush.msra.mxu0 %v2394
        %2428 = vmatmul.f32.gmra.mxu0 %v2407
        %v2429 = vpop.f32.mrf.mxu0
        %v2430 = vadd.f32 %v2404, %v2429
        %2431 = vmatmul.f32.gmra.mxu0 %v2410
        %v2432 = vpop.f32.mrf.mxu0
        %v2433 = vadd.f32 %v2404, %v2432
        %2434 = vdwg.mxu0
        %v2435 = vadd.f32 %v2430, %v1887
        %v2436 = vadd.f32 %v2433, %v1888
        %v2437 = vsel %vm1767, %v2435, 0.0
        %2438 = vadd.xlane.f32.xlu0 %v2437
        %v2439 = vpop.xlane.xlu0 %2438
        %v2440 = vsel %vm1767, %v2436, 0.0
        %2441 = vadd.xlane.f32.xlu0 %v2440
        %v2442 = vpop.xlane.xlu0 %2441
        %v2443 = vmul.f32 %v2439, %v1780
        %v2444 = vmul.f32 %v2442, %v1780
        %v2445 = vsub.f32 %v2435, %v2443
        %v2446 = vsub.f32 %v2436, %v2444
        %v2447 = vmul.f32 %v2445, %v2445
        %v2448 = vmul.f32 %v2446, %v2446
        %v2449 = vsel %vm1767, %v2447, 0.0
        %2450 = vadd.xlane.f32.xlu0 %v2449
        %v2451 = vpop.xlane.xlu0 %2450
        %v2452 = vsel %vm1767, %v2448, 0.0
        %2453 = vadd.xlane.f32.xlu0 %v2452
        %v2454 = vpop.xlane.xlu0 %2453
        %v2455 = vmul.f32 %v2451, %v1780
        %v2456 = vmul.f32 %v2454, %v1780
        %v2457 = vadd.f32 %v2455, 1e-12
        %v2458 = vadd.f32 %v2456, 1e-12
        %v2459 = vrsqrt.pop %v2457
        %v2460 = vmul.f32 %v2459, %v2457
        %v2461 = vmul.f32 %v2460, %v2459
        %v2462 = vmul.f32 0.5, %v2461
        %v2463 = vsub.f32 1.5, %v2462
        %v2464 = vmul.f32 %v2459, %v2463
        %vm2465 = vweird.f32 %v2457
        %vm2466 = vweird.f32 %v2459
        %vm2467 = vmor %vm2465, %vm2466
        %v2468 = vsel %vm2467, %v2459, %v2464
        %v2469 = vrsqrt.pop %v2458
        %v2470 = vmul.f32 %v2469, %v2458
        %v2471 = vmul.f32 %v2470, %v2469
        %v2472 = vmul.f32 0.5, %v2471
        %v2473 = vsub.f32 1.5, %v2472
        %v2474 = vmul.f32 %v2469, %v2473
        %vm2475 = vweird.f32 %v2458
        %vm2476 = vweird.f32 %v2469
        %vm2477 = vmor %vm2475, %vm2476
        %v2478 = vsel %vm2477, %v2469, %v2474
        %v2479 = vmul.f32 %v2445, %v2468
        %v2480 = vmul.f32 %v2446, %v2478
        %v2481 = vld [vmem:[%s61] sm:$0x1]
        %v2483 = vperm.slane %v2481, 0
        %v2485 = vmul.f32 %v2479, %v2483
        %v2486 = vmul.f32 %v2480, %v2483
        %v2487 = vld [vmem:[%s59] sm:$0x1]
        %v2489 = vperm.slane %v2487, 0
        %v2491 = vadd.f32 %v2485, %v2489
        %v2492 = vadd.f32 %v2486, %v2489
        %v2493 = vld [vmem:[%s29] sm:$0xff]
        %v2494 = vld [vmem:[%s29 + $0x8] sm:$0xff]
        %v2495 = vld [vmem:[%s29 + $0x10] sm:$0xff]
        %v2496 = vld [vmem:[%s29 + $0x18] sm:$0xff]
        %v2497 = vld [vmem:[%s29 + $0x20] sm:$0xff]
        %v2498 = vld [vmem:[%s29 + $0x28] sm:$0xff]
        %v2499 = vld [vmem:[%s29 + $0x30] sm:$0xff]
        %v2500 = vld [vmem:[%s29 + $0x38] sm:$0xff]
        %v2501 = vld [vmem:[%s19] sm:$0x1]
        %v2503 = vperm.slane %v2501, 0
        %v2506 = vsel %vm1767, %v2491, 0
        %2508 = vmatpush.msra.mxu0 0.0
        %2509 = vmatpush.msra.mxu0 0.0
        %2510 = vmatpush.msra.mxu0 0.0
        %2511 = vmatpush.msra.mxu0 0.0
        %2512 = vmatpush.msra.mxu0 0.0
        %2513 = vmatpush.msra.mxu0 0.0
        %2514 = vmatpush.msra.mxu0 0.0
        %2515 = vmatpush.msra.mxu0 0.0
        %2516 = vmatpush.msra.mxu0 %v2500
        %2517 = vmatpush.msra.mxu0 %v2499
        %2518 = vmatpush.msra.mxu0 %v2498
        %2519 = vmatpush.msra.mxu0 %v2497
        %2520 = vmatpush.msra.mxu0 %v2496
        %2521 = vmatpush.msra.mxu0 %v2495
        %2522 = vmatpush.msra.mxu0 %v2494
        %2523 = vmatpush.msra.mxu0 %v2493
        %2524 = vmatmul.f32.gmra.mxu0 %v2506
        %v2525 = vpop.f32.mrf.mxu0
        %v2526 = vadd.f32 %v2503, %v2525
        %2527 = vdwg.mxu0
        %v2528 = vld [vmem:[%s25] sm:$0xff]
        %v2529 = vld [vmem:[%s25 + $0x8] sm:$0xff]
        %v2530 = vld [vmem:[%s25 + $0x10] sm:$0xff]
        %v2531 = vld [vmem:[%s25 + $0x18] sm:$0xff]
        %v2532 = vld [vmem:[%s25 + $0x20] sm:$0xff]
        %v2533 = vld [vmem:[%s25 + $0x28] sm:$0xff]
        %v2534 = vld [vmem:[%s25 + $0x30] sm:$0xff]
        %v2535 = vld [vmem:[%s25 + $0x38] sm:$0xff]
        %v2536 = vld [vmem:[%s15] sm:$0x1]
        %v2538 = vperm.slane %v2536, 0
        %v2541 = vsel %vm1767, %v1829, 0
        %v2544 = vsel %vm1767, %v1830, 0
        %2546 = vmatpush.msra.mxu0 0.0
        %2547 = vmatpush.msra.mxu0 0.0
        %2548 = vmatpush.msra.mxu0 0.0
        %2549 = vmatpush.msra.mxu0 0.0
        %2550 = vmatpush.msra.mxu0 0.0
        %2551 = vmatpush.msra.mxu0 0.0
        %2552 = vmatpush.msra.mxu0 0.0
        %2553 = vmatpush.msra.mxu0 0.0
        %2554 = vmatpush.msra.mxu0 %v2535
        %2555 = vmatpush.msra.mxu0 %v2534
        %2556 = vmatpush.msra.mxu0 %v2533
        %2557 = vmatpush.msra.mxu0 %v2532
        %2558 = vmatpush.msra.mxu0 %v2531
        %2559 = vmatpush.msra.mxu0 %v2530
        %2560 = vmatpush.msra.mxu0 %v2529
        %2561 = vmatpush.msra.mxu0 %v2528
        %2562 = vmatmul.f32.gmra.mxu0 %v2541
        %v2563 = vpop.f32.mrf.mxu0
        %v2564 = vadd.f32 %v2538, %v2563
        %2565 = vmatmul.f32.gmra.mxu0 %v2544
        %v2566 = vpop.f32.mrf.mxu0
        %v2567 = vadd.f32 %v2538, %v2566
        %2568 = vdwg.mxu0
        %v2570 = vsel %vm1970, %v2526, 0
        %v2573 = vsel %vm1970, %v2564, 0
        %v2576 = vsel %vm1970, %v2567, 0
        %2578 = vmatpush.xpose.msra.mxu0 0.0
        %2579 = vmatpush.xpose.msra.mxu0 0.0
        %2580 = vmatpush.xpose.msra.mxu0 0.0
        %2581 = vmatpush.xpose.msra.mxu0 0.0
        %2582 = vmatpush.xpose.msra.mxu0 0.0
        %2583 = vmatpush.xpose.msra.mxu0 0.0
        %2584 = vmatpush.xpose.msra.mxu0 0.0
        %2585 = vmatpush.xpose.msra.mxu0 0.0
        %2586 = vmatpush.xpose.msra.mxu0 0.0
        %2587 = vmatpush.xpose.msra.mxu0 0.0
        %2588 = vmatpush.xpose.msra.mxu0 0.0
        %2589 = vmatpush.xpose.msra.mxu0 0.0
        %2590 = vmatpush.xpose.msra.mxu0 0.0
        %2591 = vmatpush.xpose.msra.mxu0 0.0
        %2592 = vmatpush.xpose.msra.mxu0 %v2576
        %2593 = vmatpush.xpose.msra.mxu0 %v2573
        %2594 = vmatmul.f32.gmra.mxu0 %v2570
        %v2595 = vpop.f32.mrf.mxu0
        %v2596 = vadd.f32 0.0, %v2595
        %2597 = vdwg.mxu0
        %v2598 = vmul.f32 %v2596, 0.25
        %v2599 = vsel %vm1970, %v2598, -inf
        %2600 = vmax.xlane.f32.xlu0 %v2599
        %v2601 = vpop.xlane.xlu0 %2600
        %v2602 = vsub.f32 %v2598, %v2601
        %v2603 = vmul.f32 %v2602, 1.442695
        %v2604 = vpow.pop %v2603
        %v2605 = vsel %vm1970, %v2604, 0.0
        %2606 = vadd.xlane.f32.xlu0 %v2605
        %v2607 = vpop.xlane.xlu0 %2606
        %v2608 = vrcp.pop %v2607
        %v2609 = vmul.f32 %v2604, %v2608
        %2610 = vrot.lane.b32.xlu0 %v2564, 64
        %v2611 = vpop.permute.xlu0 %2610
        %2612 = vrot.lane.b32.xlu0 %v2567, 64
        %v2613 = vpop.permute.xlu0 %2612
        %v2617 = vsel %vm1970, %v2609, 0
        %2619 = vmatpush.msra.mxu0 0.0
        %2620 = vmatpush.msra.mxu0 0.0
        %2621 = vmatpush.msra.mxu0 0.0
        %2622 = vmatpush.msra.mxu0 0.0
        %2623 = vmatpush.msra.mxu0 0.0
        %2624 = vmatpush.msra.mxu0 0.0
        %2625 = vmatpush.msra.mxu0 0.0
        %2626 = vmatpush.msra.mxu0 0.0
        %2627 = vmatpush.msra.mxu0 0.0
        %2628 = vmatpush.msra.mxu0 0.0
        %2629 = vmatpush.msra.mxu0 0.0
        %2630 = vmatpush.msra.mxu0 0.0
        %2631 = vmatpush.msra.mxu0 0.0
        %2632 = vmatpush.msra.mxu0 0.0
        %2633 = vmatpush.msra.mxu0 %v2613
        %2634 = vmatpush.msra.mxu0 %v2611
        %2635 = vmatmul.f32.gmra.mxu0 %v2617
        %v2636 = vpop.f32.mrf.mxu0
        %v2637 = vadd.f32 0.0, %v2636
        %2638 = vdwg.mxu0
        %2639 = vrot.lane.b32.xlu0 %v2526, 112
        %v2640 = vpop.permute.xlu0 %2639
        %2641 = vrot.lane.b32.xlu0 %v2564, 112
        %v2642 = vpop.permute.xlu0 %2641
        %2643 = vrot.lane.b32.xlu0 %v2567, 112
        %v2644 = vpop.permute.xlu0 %2643
        %v2645 = vsel %vm1970, %v2640, 0
        %v2647 = vsel %vm1970, %v2642, 0
        %v2649 = vsel %vm1970, %v2644, 0
        %2651 = vmatpush.xpose.msra.mxu0 0.0
        %2652 = vmatpush.xpose.msra.mxu0 0.0
        %2653 = vmatpush.xpose.msra.mxu0 0.0
        %2654 = vmatpush.xpose.msra.mxu0 0.0
        %2655 = vmatpush.xpose.msra.mxu0 0.0
        %2656 = vmatpush.xpose.msra.mxu0 0.0
        %2657 = vmatpush.xpose.msra.mxu0 0.0
        %2658 = vmatpush.xpose.msra.mxu0 0.0
        %2659 = vmatpush.xpose.msra.mxu0 0.0
        %2660 = vmatpush.xpose.msra.mxu0 0.0
        %2661 = vmatpush.xpose.msra.mxu0 0.0
        %2662 = vmatpush.xpose.msra.mxu0 0.0
        %2663 = vmatpush.xpose.msra.mxu0 0.0
        %2664 = vmatpush.xpose.msra.mxu0 0.0
        %2665 = vmatpush.xpose.msra.mxu0 %v2649
        %2666 = vmatpush.xpose.msra.mxu0 %v2647
        %2667 = vmatmul.f32.gmra.mxu0 %v2645
        %v2668 = vpop.f32.mrf.mxu0
        %v2669 = vadd.f32 0.0, %v2668
        %2670 = vdwg.mxu0
        %v2671 = vmul.f32 %v2669, 0.25
        %v2672 = vsel %vm1970, %v2671, -inf
        %2673 = vmax.xlane.f32.xlu0 %v2672
        %v2674 = vpop.xlane.xlu0 %2673
        %v2675 = vsub.f32 %v2671, %v2674
        %v2676 = vmul.f32 %v2675, 1.442695
        %v2677 = vpow.pop %v2676
        %v2678 = vsel %vm1970, %v2677, 0.0
        %2679 = vadd.xlane.f32.xlu0 %v2678
        %v2680 = vpop.xlane.xlu0 %2679
        %v2681 = vrcp.pop %v2680
        %v2682 = vmul.f32 %v2677, %v2681
        %2683 = vrot.lane.b32.xlu0 %v2564, 48
        %v2684 = vpop.permute.xlu0 %2683
        %2685 = vrot.lane.b32.xlu0 %v2567, 48
        %v2686 = vpop.permute.xlu0 %2685
        %v2690 = vsel %vm1970, %v2682, 0
        %2692 = vmatpush.msra.mxu0 0.0
        %2693 = vmatpush.msra.mxu0 0.0
        %2694 = vmatpush.msra.mxu0 0.0
        %2695 = vmatpush.msra.mxu0 0.0
        %2696 = vmatpush.msra.mxu0 0.0
        %2697 = vmatpush.msra.mxu0 0.0
        %2698 = vmatpush.msra.mxu0 0.0
        %2699 = vmatpush.msra.mxu0 0.0
        %2700 = vmatpush.msra.mxu0 0.0
        %2701 = vmatpush.msra.mxu0 0.0
        %2702 = vmatpush.msra.mxu0 0.0
        %2703 = vmatpush.msra.mxu0 0.0
        %2704 = vmatpush.msra.mxu0 0.0
        %2705 = vmatpush.msra.mxu0 0.0
        %2706 = vmatpush.msra.mxu0 %v2686
        %2707 = vmatpush.msra.mxu0 %v2684
        %2708 = vmatmul.f32.gmra.mxu0 %v2690
        %v2709 = vpop.f32.mrf.mxu0
        %v2710 = vadd.f32 0.0, %v2709
        %2711 = vdwg.mxu0
        %2712 = vrot.lane.b32.xlu0 %v2526, 96
        %v2713 = vpop.permute.xlu0 %2712
        %2714 = vrot.lane.b32.xlu0 %v2564, 96
        %v2715 = vpop.permute.xlu0 %2714
        %2716 = vrot.lane.b32.xlu0 %v2567, 96
        %v2717 = vpop.permute.xlu0 %2716
        %v2718 = vsel %vm1970, %v2713, 0
        %v2720 = vsel %vm1970, %v2715, 0
        %v2722 = vsel %vm1970, %v2717, 0
        %2724 = vmatpush.xpose.msra.mxu0 0.0
        %2725 = vmatpush.xpose.msra.mxu0 0.0
        %2726 = vmatpush.xpose.msra.mxu0 0.0
        %2727 = vmatpush.xpose.msra.mxu0 0.0
        %2728 = vmatpush.xpose.msra.mxu0 0.0
        %2729 = vmatpush.xpose.msra.mxu0 0.0
        %2730 = vmatpush.xpose.msra.mxu0 0.0
        %2731 = vmatpush.xpose.msra.mxu0 0.0
        %2732 = vmatpush.xpose.msra.mxu0 0.0
        %2733 = vmatpush.xpose.msra.mxu0 0.0
        %2734 = vmatpush.xpose.msra.mxu0 0.0
        %2735 = vmatpush.xpose.msra.mxu0 0.0
        %2736 = vmatpush.xpose.msra.mxu0 0.0
        %2737 = vmatpush.xpose.msra.mxu0 0.0
        %2738 = vmatpush.xpose.msra.mxu0 %v2722
        %2739 = vmatpush.xpose.msra.mxu0 %v2720
        %2740 = vmatmul.f32.gmra.mxu0 %v2718
        %v2741 = vpop.f32.mrf.mxu0
        %v2742 = vadd.f32 0.0, %v2741
        %2743 = vdwg.mxu0
        %v2744 = vmul.f32 %v2742, 0.25
        %v2745 = vsel %vm1970, %v2744, -inf
        %2746 = vmax.xlane.f32.xlu0 %v2745
        %v2747 = vpop.xlane.xlu0 %2746
        %v2748 = vsub.f32 %v2744, %v2747
        %v2749 = vmul.f32 %v2748, 1.442695
        %v2750 = vpow.pop %v2749
        %v2751 = vsel %vm1970, %v2750, 0.0
        %2752 = vadd.xlane.f32.xlu0 %v2751
        %v2753 = vpop.xlane.xlu0 %2752
        %v2754 = vrcp.pop %v2753
        %v2755 = vmul.f32 %v2750, %v2754
        %2756 = vrot.lane.b32.xlu0 %v2564, 32
        %v2757 = vpop.permute.xlu0 %2756
        %2758 = vrot.lane.b32.xlu0 %v2567, 32
        %v2759 = vpop.permute.xlu0 %2758
        %v2763 = vsel %vm1970, %v2755, 0
        %2765 = vmatpush.msra.mxu0 0.0
        %2766 = vmatpush.msra.mxu0 0.0
        %2767 = vmatpush.msra.mxu0 0.0
        %2768 = vmatpush.msra.mxu0 0.0
        %2769 = vmatpush.msra.mxu0 0.0
        %2770 = vmatpush.msra.mxu0 0.0
        %2771 = vmatpush.msra.mxu0 0.0
        %2772 = vmatpush.msra.mxu0 0.0
        %2773 = vmatpush.msra.mxu0 0.0
        %2774 = vmatpush.msra.mxu0 0.0
        %2775 = vmatpush.msra.mxu0 0.0
        %2776 = vmatpush.msra.mxu0 0.0
        %2777 = vmatpush.msra.mxu0 0.0
        %2778 = vmatpush.msra.mxu0 0.0
        %2779 = vmatpush.msra.mxu0 %v2759
        %2780 = vmatpush.msra.mxu0 %v2757
        %2781 = vmatmul.f32.gmra.mxu0 %v2763
        %v2782 = vpop.f32.mrf.mxu0
        %v2783 = vadd.f32 0.0, %v2782
        %2784 = vdwg.mxu0
        %2785 = vrot.lane.b32.xlu0 %v2526, 80
        %v2786 = vpop.permute.xlu0 %2785
        %2787 = vrot.lane.b32.xlu0 %v2564, 80
        %v2788 = vpop.permute.xlu0 %2787
        %2789 = vrot.lane.b32.xlu0 %v2567, 80
        %v2790 = vpop.permute.xlu0 %2789
        %v2791 = vsel %vm1970, %v2786, 0
        %v2793 = vsel %vm1970, %v2788, 0
        %v2795 = vsel %vm1970, %v2790, 0
        %2797 = vmatpush.xpose.msra.mxu0 0.0
        %2798 = vmatpush.xpose.msra.mxu0 0.0
        %2799 = vmatpush.xpose.msra.mxu0 0.0
        %2800 = vmatpush.xpose.msra.mxu0 0.0
        %2801 = vmatpush.xpose.msra.mxu0 0.0
        %2802 = vmatpush.xpose.msra.mxu0 0.0
        %2803 = vmatpush.xpose.msra.mxu0 0.0
        %2804 = vmatpush.xpose.msra.mxu0 0.0
        %2805 = vmatpush.xpose.msra.mxu0 0.0
        %2806 = vmatpush.xpose.msra.mxu0 0.0
        %2807 = vmatpush.xpose.msra.mxu0 0.0
        %2808 = vmatpush.xpose.msra.mxu0 0.0
        %2809 = vmatpush.xpose.msra.mxu0 0.0
        %2810 = vmatpush.xpose.msra.mxu0 0.0
        %2811 = vmatpush.xpose.msra.mxu0 %v2795
        %2812 = vmatpush.xpose.msra.mxu0 %v2793
        %2813 = vmatmul.f32.gmra.mxu0 %v2791
        %v2814 = vpop.f32.mrf.mxu0
        %v2815 = vadd.f32 0.0, %v2814
        %2816 = vdwg.mxu0
        %v2817 = vmul.f32 %v2815, 0.25
        %v2818 = vsel %vm1970, %v2817, -inf
        %2819 = vmax.xlane.f32.xlu0 %v2818
        %v2820 = vpop.xlane.xlu0 %2819
        %v2821 = vsub.f32 %v2817, %v2820
        %v2822 = vmul.f32 %v2821, 1.442695
        %v2823 = vpow.pop %v2822
        %v2824 = vsel %vm1970, %v2823, 0.0
        %2825 = vadd.xlane.f32.xlu0 %v2824
        %v2826 = vpop.xlane.xlu0 %2825
        %v2827 = vrcp.pop %v2826
        %v2828 = vmul.f32 %v2823, %v2827
        %2829 = vrot.lane.b32.xlu0 %v2564, 16
        %v2830 = vpop.permute.xlu0 %2829
        %2831 = vrot.lane.b32.xlu0 %v2567, 16
        %v2832 = vpop.permute.xlu0 %2831
        %v2836 = vsel %vm1970, %v2828, 0
        %2838 = vmatpush.msra.mxu0 0.0
        %2839 = vmatpush.msra.mxu0 0.0
        %2840 = vmatpush.msra.mxu0 0.0
        %2841 = vmatpush.msra.mxu0 0.0
        %2842 = vmatpush.msra.mxu0 0.0
        %2843 = vmatpush.msra.mxu0 0.0
        %2844 = vmatpush.msra.mxu0 0.0
        %2845 = vmatpush.msra.mxu0 0.0
        %2846 = vmatpush.msra.mxu0 0.0
        %2847 = vmatpush.msra.mxu0 0.0
        %2848 = vmatpush.msra.mxu0 0.0
        %2849 = vmatpush.msra.mxu0 0.0
        %2850 = vmatpush.msra.mxu0 0.0
        %2851 = vmatpush.msra.mxu0 0.0
        %2852 = vmatpush.msra.mxu0 %v2832
        %2853 = vmatpush.msra.mxu0 %v2830
        %2854 = vmatmul.f32.gmra.mxu0 %v2836
        %v2855 = vpop.f32.mrf.mxu0
        %v2856 = vadd.f32 0.0, %v2855
        %2857 = vdwg.mxu0
        %2859 = vrot.lane.b32.xlu0 %v2710, 16
        %v2860 = vpop.permute.xlu0 %2859
        %2863 = vrot.lane.b32.xlu0 %v2783, 32
        %v2864 = vpop.permute.xlu0 %2863
        %2867 = vrot.lane.b32.xlu0 %v2856, 48
        %v2868 = vpop.permute.xlu0 %2867
        %v2870 = vsel %vm1970, %v2637, %v2860
        %v2871 = vsel %vm2388, %v2870, %v2864
        %v2872 = vsel %vm2391, %v2871, %v2868
        %v2873 = vld [vmem:[%s27] sm:$0xff]
        %v2874 = vld [vmem:[%s27 + $0x8] sm:$0xff]
        %v2875 = vld [vmem:[%s27 + $0x10] sm:$0xff]
        %v2876 = vld [vmem:[%s27 + $0x18] sm:$0xff]
        %v2877 = vld [vmem:[%s27 + $0x20] sm:$0xff]
        %v2878 = vld [vmem:[%s27 + $0x28] sm:$0xff]
        %v2879 = vld [vmem:[%s27 + $0x30] sm:$0xff]
        %v2880 = vld [vmem:[%s27 + $0x38] sm:$0xff]
        %v2881 = vld [vmem:[%s17] sm:$0x1]
        %v2883 = vperm.slane %v2881, 0
        %v2886 = vsel %vm1767, %v2872, 0
        %2888 = vmatpush.msra.mxu0 0.0
        %2889 = vmatpush.msra.mxu0 0.0
        %2890 = vmatpush.msra.mxu0 0.0
        %2891 = vmatpush.msra.mxu0 0.0
        %2892 = vmatpush.msra.mxu0 0.0
        %2893 = vmatpush.msra.mxu0 0.0
        %2894 = vmatpush.msra.mxu0 0.0
        %2895 = vmatpush.msra.mxu0 0.0
        %2896 = vmatpush.msra.mxu0 %v2880
        %2897 = vmatpush.msra.mxu0 %v2879
        %2898 = vmatpush.msra.mxu0 %v2878
        %2899 = vmatpush.msra.mxu0 %v2877
        %2900 = vmatpush.msra.mxu0 %v2876
        %2901 = vmatpush.msra.mxu0 %v2875
        %2902 = vmatpush.msra.mxu0 %v2874
        %2903 = vmatpush.msra.mxu0 %v2873
        %2904 = vmatmul.f32.gmra.mxu0 %v2886
        %v2905 = vpop.f32.mrf.mxu0
        %v2906 = vadd.f32 %v2883, %v2905
        %2907 = vdwg.mxu0
        %v2908 = vadd.f32 %v2906, %v2491
        %v2909 = vsel %vm1767, %v2908, 0.0
        %2910 = vadd.xlane.f32.xlu0 %v2909
        %v2911 = vpop.xlane.xlu0 %2910
        %v2912 = vmul.f32 %v2911, %v1780
        %v2913 = vsub.f32 %v2908, %v2912
        %v2914 = vmul.f32 %v2913, %v2913
        %v2915 = vsel %vm1767, %v2914, 0.0
        %2916 = vadd.xlane.f32.xlu0 %v2915
        %v2917 = vpop.xlane.xlu0 %2916
        %v2918 = vmul.f32 %v2917, %v1780
        %v2919 = vadd.f32 %v2918, 1e-12
        %v2920 = vrsqrt.pop %v2919
        %v2921 = vmul.f32 %v2920, %v2919
        %v2922 = vmul.f32 %v2921, %v2920
        %v2923 = vmul.f32 0.5, %v2922
        %v2924 = vsub.f32 1.5, %v2923
        %v2925 = vmul.f32 %v2920, %v2924
        %vm2926 = vweird.f32 %v2919
        %vm2927 = vweird.f32 %v2920
        %vm2928 = vmor %vm2926, %vm2927
        %v2929 = vsel %vm2928, %v2920, %v2925
        %v2930 = vmul.f32 %v2913, %v2929
        %v2931 = vld [vmem:[%s23] sm:$0x1]
        %v2933 = vperm.slane %v2931, 0
        %v2935 = vmul.f32 %v2930, %v2933
        %v2936 = vld [vmem:[%s21] sm:$0x1]
        %v2938 = vperm.slane %v2936, 0
        %v2940 = vadd.f32 %v2935, %v2938
        %v2941 = vld [vmem:[%s39] sm:$0xff]
        %v2942 = vld [vmem:[%s39 + $0x8] sm:$0xff]
        %v2943 = vld [vmem:[%s39 + $0x10] sm:$0xff]
        %v2944 = vld [vmem:[%s39 + $0x18] sm:$0xff]
        %v2945 = vld [vmem:[%s39 + $0x20] sm:$0xff]
        %v2946 = vld [vmem:[%s39 + $0x28] sm:$0xff]
        %v2947 = vld [vmem:[%s39 + $0x30] sm:$0xff]
        %v2948 = vld [vmem:[%s39 + $0x38] sm:$0xff]
        %v2949 = vld [vmem:[%s31] sm:$0x1]
        %v2951 = vperm.slane %v2949, 0
        %v2954 = vsel %vm1767, %v2940, 0
        %2956 = vmatpush.msra.mxu0 0.0
        %2957 = vmatpush.msra.mxu0 0.0
        %2958 = vmatpush.msra.mxu0 0.0
        %2959 = vmatpush.msra.mxu0 0.0
        %2960 = vmatpush.msra.mxu0 0.0
        %2961 = vmatpush.msra.mxu0 0.0
        %2962 = vmatpush.msra.mxu0 0.0
        %2963 = vmatpush.msra.mxu0 0.0
        %2964 = vmatpush.msra.mxu0 %v2948
        %2965 = vmatpush.msra.mxu0 %v2947
        %2966 = vmatpush.msra.mxu0 %v2946
        %2967 = vmatpush.msra.mxu0 %v2945
        %2968 = vmatpush.msra.mxu0 %v2944
        %2969 = vmatpush.msra.mxu0 %v2943
        %2970 = vmatpush.msra.mxu0 %v2942
        %2971 = vmatpush.msra.mxu0 %v2941
        %2972 = vmatmul.f32.gmra.mxu0 %v2954
        %v2973 = vpop.f32.mrf.mxu0
        %v2974 = vadd.f32 %v2951, %v2973
        %2975 = vdwg.mxu0
        %v2976 = vmul.f32 %v2974, %v2974
        %v2977 = vmul.f32 %v2974, %v2976
        %v2978 = vmul.f32 %v2977, 0.044715
        %v2979 = vadd.f32 %v2974, %v2978
        %v2980 = vmul.f32 %v2979, 0.7978846
        %v2981 = vtanh.pop %v2980
        %v2982 = vadd.f32 %v2981, 1.0
        %v2983 = vmul.f32 %v2982, 0.5
        %v2984 = vmul.f32 %v2974, %v2983
        %v2985 = vld [vmem:[%s41] sm:$0xff]
        %v2986 = vld [vmem:[%s41 + $0x8] sm:$0xff]
        %v2987 = vld [vmem:[%s41 + $0x10] sm:$0xff]
        %v2988 = vld [vmem:[%s41 + $0x18] sm:$0xff]
        %v2989 = vld [vmem:[%s41 + $0x20] sm:$0xff]
        %v2990 = vld [vmem:[%s41 + $0x28] sm:$0xff]
        %v2991 = vld [vmem:[%s41 + $0x30] sm:$0xff]
        %v2992 = vld [vmem:[%s41 + $0x38] sm:$0xff]
        %v2993 = vld [vmem:[%s41 + $0x40] sm:$0xff]
        %v2994 = vld [vmem:[%s41 + $0x48] sm:$0xff]
        %v2995 = vld [vmem:[%s41 + $0x50] sm:$0xff]
        %v2996 = vld [vmem:[%s41 + $0x58] sm:$0xff]
        %v2997 = vld [vmem:[%s41 + $0x60] sm:$0xff]
        %v2998 = vld [vmem:[%s41 + $0x68] sm:$0xff]
        %v2999 = vld [vmem:[%s41 + $0x70] sm:$0xff]
        %v3000 = vld [vmem:[%s41 + $0x78] sm:$0xff]
        %v3001 = vld [vmem:[%s33] sm:$0x1]
        %v3003 = vperm.slane %v3001, 0
        %3005 = vmatpush.msra.mxu0 %v3000
        %3006 = vmatpush.msra.mxu0 %v2999
        %3007 = vmatpush.msra.mxu0 %v2998
        %3008 = vmatpush.msra.mxu0 %v2997
        %3009 = vmatpush.msra.mxu0 %v2996
        %3010 = vmatpush.msra.mxu0 %v2995
        %3011 = vmatpush.msra.mxu0 %v2994
        %3012 = vmatpush.msra.mxu0 %v2993
        %3013 = vmatpush.msra.mxu0 %v2992
        %3014 = vmatpush.msra.mxu0 %v2991
        %3015 = vmatpush.msra.mxu0 %v2990
        %3016 = vmatpush.msra.mxu0 %v2989
        %3017 = vmatpush.msra.mxu0 %v2988
        %3018 = vmatpush.msra.mxu0 %v2987
        %3019 = vmatpush.msra.mxu0 %v2986
        %3020 = vmatpush.msra.mxu0 %v2985
        %3021 = vmatmul.f32.gmra.mxu0 %v2984
        %v3022 = vpop.f32.mrf.mxu0
        %v3023 = vadd.f32 %v3003, %v3022
        %3024 = vdwg.mxu0
        %v3025 = vadd.f32 %v3023, %v2940
        %v3026 = vsel %vm1767, %v3025, 0.0
        %3027 = vadd.xlane.f32.xlu0 %v3026
        %v3028 = vpop.xlane.xlu0 %3027
        %v3029 = vmul.f32 %v3028, %v1780
        %v3030 = vsub.f32 %v3025, %v3029
        %v3031 = vmul.f32 %v3030, %v3030
        %v3032 = vsel %vm1767, %v3031, 0.0
        %3033 = vadd.xlane.f32.xlu0 %v3032
        %v3034 = vpop.xlane.xlu0 %3033
        %v3035 = vmul.f32 %v3034, %v1780
        %v3036 = vadd.f32 %v3035, 1e-12
        %v3037 = vrsqrt.pop %v3036
        %v3038 = vmul.f32 %v3037, %v3036
        %v3039 = vmul.f32 %v3038, %v3037
        %v3040 = vmul.f32 0.5, %v3039
        %v3041 = vsub.f32 1.5, %v3040
        %v3042 = vmul.f32 %v3037, %v3041
        %vm3043 = vweird.f32 %v3036
        %vm3044 = vweird.f32 %v3037
        %vm3045 = vmor %vm3043, %vm3044
        %v3046 = vsel %vm3045, %v3037, %v3042
        %v3047 = vmul.f32 %v3030, %v3046
        %v3048 = vld [vmem:[%s37] sm:$0x1]
        %v3050 = vperm.slane %v3048, 0
        %v3052 = vmul.f32 %v3047, %v3050
        %v3053 = vld [vmem:[%s35] sm:$0x1]
        %v3055 = vperm.slane %v3053, 0
        %v3057 = vadd.f32 %v3052, %v3055
        %v3058 = vld [vmem:[%s51] sm:$0xff]
        %v3059 = vld [vmem:[%s51 + $0x8] sm:$0xff]
        %v3060 = vld [vmem:[%s51 + $0x10] sm:$0xff]
        %v3061 = vld [vmem:[%s51 + $0x18] sm:$0xff]
        %v3062 = vld [vmem:[%s51 + $0x20] sm:$0xff]
        %v3063 = vld [vmem:[%s51 + $0x28] sm:$0xff]
        %v3064 = vld [vmem:[%s51 + $0x30] sm:$0xff]
        %v3065 = vld [vmem:[%s51 + $0x38] sm:$0xff]
        %v3066 = vld [vmem:[%s43] sm:$0x1]
        %v3068 = vperm.slane %v3066, 0
        %v3071 = vsel %vm1767, %v2492, 0
        %3073 = vmatpush.msra.mxu0 0.0
        %3074 = vmatpush.msra.mxu0 0.0
        %3075 = vmatpush.msra.mxu0 0.0
        %3076 = vmatpush.msra.mxu0 0.0
        %3077 = vmatpush.msra.mxu0 0.0
        %3078 = vmatpush.msra.mxu0 0.0
        %3079 = vmatpush.msra.mxu0 0.0
        %3080 = vmatpush.msra.mxu0 0.0
        %3081 = vmatpush.msra.mxu0 %v3065
        %3082 = vmatpush.msra.mxu0 %v3064
        %3083 = vmatpush.msra.mxu0 %v3063
        %3084 = vmatpush.msra.mxu0 %v3062
        %3085 = vmatpush.msra.mxu0 %v3061
        %3086 = vmatpush.msra.mxu0 %v3060
        %3087 = vmatpush.msra.mxu0 %v3059
        %3088 = vmatpush.msra.mxu0 %v3058
        %3089 = vmatmul.f32.gmra.mxu0 %v3071
        %v3090 = vpop.f32.mrf.mxu0
        %v3091 = vadd.f32 %v3068, %v3090
        %3092 = vdwg.mxu0
        %v3093 = vmul.f32 %v3091, %v3091
        %v3094 = vmul.f32 %v3091, %v3093
        %v3095 = vmul.f32 %v3094, 0.044715
        %v3096 = vadd.f32 %v3091, %v3095
        %v3097 = vmul.f32 %v3096, 0.7978846
        %v3098 = vtanh.pop %v3097
        %v3099 = vadd.f32 %v3098, 1.0
        %v3100 = vmul.f32 %v3099, 0.5
        %v3101 = vmul.f32 %v3091, %v3100
        %v3102 = vld [vmem:[%s53] sm:$0xff]
        %v3103 = vld [vmem:[%s53 + $0x8] sm:$0xff]
        %v3104 = vld [vmem:[%s53 + $0x10] sm:$0xff]
        %v3105 = vld [vmem:[%s53 + $0x18] sm:$0xff]
        %v3106 = vld [vmem:[%s53 + $0x20] sm:$0xff]
        %v3107 = vld [vmem:[%s53 + $0x28] sm:$0xff]
        %v3108 = vld [vmem:[%s53 + $0x30] sm:$0xff]
        %v3109 = vld [vmem:[%s53 + $0x38] sm:$0xff]
        %v3110 = vld [vmem:[%s53 + $0x40] sm:$0xff]
        %v3111 = vld [vmem:[%s53 + $0x48] sm:$0xff]
        %v3112 = vld [vmem:[%s53 + $0x50] sm:$0xff]
        %v3113 = vld [vmem:[%s53 + $0x58] sm:$0xff]
        %v3114 = vld [vmem:[%s53 + $0x60] sm:$0xff]
        %v3115 = vld [vmem:[%s53 + $0x68] sm:$0xff]
        %v3116 = vld [vmem:[%s53 + $0x70] sm:$0xff]
        %v3117 = vld [vmem:[%s53 + $0x78] sm:$0xff]
        %v3118 = vld [vmem:[%s45] sm:$0x1]
        %v3120 = vperm.slane %v3118, 0
        %3122 = vmatpush.msra.mxu0 %v3117
        %3123 = vmatpush.msra.mxu0 %v3116
        %3124 = vmatpush.msra.mxu0 %v3115
        %3125 = vmatpush.msra.mxu0 %v3114
        %3126 = vmatpush.msra.mxu0 %v3113
        %3127 = vmatpush.msra.mxu0 %v3112
        %3128 = vmatpush.msra.mxu0 %v3111
        %3129 = vmatpush.msra.mxu0 %v3110
        %3130 = vmatpush.msra.mxu0 %v3109
        %3131 = vmatpush.msra.mxu0 %v3108
        %3132 = vmatpush.msra.mxu0 %v3107
        %3133 = vmatpush.msra.mxu0 %v3106
        %3134 = vmatpush.msra.mxu0 %v3105
        %3135 = vmatpush.msra.mxu0 %v3104
        %3136 = vmatpush.msra.mxu0 %v3103
        %3137 = vmatpush.msra.mxu0 %v3102
        %3138 = vmatmul.f32.gmra.mxu0 %v3101
        %v3139 = vpop.f32.mrf.mxu0
        %v3140 = vadd.f32 %v3120, %v3139
        %3141 = vdwg.mxu0
        %v3142 = vadd.f32 %v3140, %v2492
        %v3143 = vsel %vm1767, %v3142, 0.0
        %3144 = vadd.xlane.f32.xlu0 %v3143
        %v3145 = vpop.xlane.xlu0 %3144
        %v3146 = vmul.f32 %v3145, %v1780
        %v3147 = vsub.f32 %v3142, %v3146
        %v3148 = vmul.f32 %v3147, %v3147
        %v3149 = vsel %vm1767, %v3148, 0.0
        %3150 = vadd.xlane.f32.xlu0 %v3149
        %v3151 = vpop.xlane.xlu0 %3150
        %v3152 = vmul.f32 %v3151, %v1780
        %v3153 = vadd.f32 %v3152, 1e-12
        %v3154 = vrsqrt.pop %v3153
        %v3155 = vmul.f32 %v3154, %v3153
        %v3156 = vmul.f32 %v3155, %v3154
        %v3157 = vmul.f32 0.5, %v3156
        %v3158 = vsub.f32 1.5, %v3157
        %v3159 = vmul.f32 %v3154, %v3158
        %vm3160 = vweird.f32 %v3153
        %vm3161 = vweird.f32 %v3154
        %vm3162 = vmor %vm3160, %vm3161
        %v3163 = vsel %vm3162, %v3154, %v3159
        %v3164 = vmul.f32 %v3147, %v3163
        %v3165 = vld [vmem:[%s49] sm:$0x1]
        %v3167 = vperm.slane %v3165, 0
        %v3169 = vmul.f32 %v3164, %v3167
        %v3170 = vld [vmem:[%s47] sm:$0x1]
        %v3172 = vperm.slane %v3170, 0
        %v3174 = vadd.f32 %v3169, %v3172
        %v3175 = vld [vmem:[%s101] sm:$0xff]
        %v3176 = vld [vmem:[%s101 + $0x8] sm:$0xff]
        %v3177 = vld [vmem:[%s101 + $0x10] sm:$0xff]
        %v3178 = vld [vmem:[%s101 + $0x18] sm:$0xff]
        %v3179 = vld [vmem:[%s101 + $0x20] sm:$0xff]
        %v3180 = vld [vmem:[%s101 + $0x28] sm:$0xff]
        %v3181 = vld [vmem:[%s101 + $0x30] sm:$0xff]
        %v3182 = vld [vmem:[%s101 + $0x38] sm:$0xff]
        %v3183 = vld [vmem:[%s101 + $0x40] sm:$0xff]
        %v3184 = vld [vmem:[%s101 + $0x48] sm:$0xff]
        %v3185 = vld [vmem:[%s101 + $0x50] sm:$0xff]
        %v3186 = vld [vmem:[%s101 + $0x58] sm:$0xff]
        %v3187 = vld [vmem:[%s101 + $0x60] sm:$0xff]
        %v3188 = vld [vmem:[%s101 + $0x68] sm:$0xff]
        %v3189 = vld [vmem:[%s101 + $0x70] sm:$0xff]
        %v3190 = vld [vmem:[%s101 + $0x78] sm:$0xff]
        %v3191 = vld [vmem:[%s93] sm:$0x3]
        %v3193 = vperm.slane %v3191, 0
        %v3194 = vperm.slane %v3191, 1
        %v3198 = vsel %vm1767, %v3057, 0
        %v3201 = vsel %vm1767, %v3174, 0
        %3203 = vmatpush.msra.mxu0 0.0
        %3204 = vmatpush.msra.mxu0 0.0
        %3205 = vmatpush.msra.mxu0 0.0
        %3206 = vmatpush.msra.mxu0 0.0
        %3207 = vmatpush.msra.mxu0 0.0
        %3208 = vmatpush.msra.mxu0 0.0
        %3209 = vmatpush.msra.mxu0 0.0
        %3210 = vmatpush.msra.mxu0 0.0
        %3211 = vmatpush.msra.mxu0 %v3189
        %3212 = vmatpush.msra.mxu0 %v3187
        %3213 = vmatpush.msra.mxu0 %v3185
        %3214 = vmatpush.msra.mxu0 %v3183
        %3215 = vmatpush.msra.mxu0 %v3181
        %3216 = vmatpush.msra.mxu0 %v3179
        %3217 = vmatpush.msra.mxu0 %v3177
        %3218 = vmatpush.msra.mxu0 %v3175
        %3219 = vmatmul.f32.gmra.mxu0 %v3198
        %v3220 = vpop.f32.mrf.mxu0
        %v3221 = vadd.f32 %v3193, %v3220
        %3222 = vmatmul.f32.gmra.mxu0 %v3201
        %v3223 = vpop.f32.mrf.mxu0
        %v3224 = vadd.f32 %v3193, %v3223
        %3225 = vdwg.mxu0
        %3226 = vmatpush.msra.mxu0 0.0
        %3227 = vmatpush.msra.mxu0 0.0
        %3228 = vmatpush.msra.mxu0 0.0
        %3229 = vmatpush.msra.mxu0 0.0
        %3230 = vmatpush.msra.mxu0 0.0
        %3231 = vmatpush.msra.mxu0 0.0
        %3232 = vmatpush.msra.mxu0 0.0
        %3233 = vmatpush.msra.mxu0 0.0
        %3234 = vmatpush.msra.mxu0 %v3190
        %3235 = vmatpush.msra.mxu0 %v3188
        %3236 = vmatpush.msra.mxu0 %v3186
        %3237 = vmatpush.msra.mxu0 %v3184
        %3238 = vmatpush.msra.mxu0 %v3182
        %3239 = vmatpush.msra.mxu0 %v3180
        %3240 = vmatpush.msra.mxu0 %v3178
        %3241 = vmatpush.msra.mxu0 %v3176
        %3242 = vmatmul.f32.gmra.mxu0 %v3198
        %v3243 = vpop.f32.mrf.mxu0
        %v3244 = vadd.f32 %v3194, %v3243
        %3245 = vmatmul.f32.gmra.mxu0 %v3201
        %v3246 = vpop.f32.mrf.mxu0
        %v3247 = vadd.f32 %v3194, %v3246
        %3248 = vdwg.mxu0
        %3251 = vrot.lane.b32.xlu0 %v3221, 64
        %v3252 = vpop.permute.xlu0 %3251
        %3253 = vrot.lane.b32.xlu0 %v3224, 64
        %v3254 = vpop.permute.xlu0 %3253
        %v3255 = vsel %vm1970, %v3221, 0
        %v3257 = vsel %vm1970, %v3224, 0
        %v3259 = vsel %vm1970, %v3252, 0
        %v3261 = vsel %vm1970, %v3254, 0
        %3263 = vmatpush.xpose.msra.mxu0 0.0
        %3264 = vmatpush.xpose.msra.mxu0 0.0
        %3265 = vmatpush.xpose.msra.mxu0 0.0
        %3266 = vmatpush.xpose.msra.mxu0 0.0
        %3267 = vmatpush.xpose.msra.mxu0 0.0
        %3268 = vmatpush.xpose.msra.mxu0 0.0
        %3269 = vmatpush.xpose.msra.mxu0 0.0
        %3270 = vmatpush.xpose.msra.mxu0 0.0
        %3271 = vmatpush.xpose.msra.mxu0 0.0
        %3272 = vmatpush.xpose.msra.mxu0 0.0
        %3273 = vmatpush.xpose.msra.mxu0 0.0
        %3274 = vmatpush.xpose.msra.mxu0 0.0
        %3275 = vmatpush.xpose.msra.mxu0 0.0
        %3276 = vmatpush.xpose.msra.mxu0 0.0
        %3277 = vmatpush.xpose.msra.mxu0 %v3261
        %3278 = vmatpush.xpose.msra.mxu0 %v3259
        %3279 = vmatmul.f32.gmra.mxu0 %v3255
        %v3280 = vpop.f32.mrf.mxu0
        %v3281 = vadd.f32 0.0, %v3280
        %3282 = vmatmul.f32.gmra.mxu0 %v3257
        %v3283 = vpop.f32.mrf.mxu0
        %v3284 = vadd.f32 0.0, %v3283
        %3285 = vdwg.mxu0
        %v3286 = vmul.f32 %v3281, 0.25
        %v3287 = vmul.f32 %v3284, 0.25
        %v3288 = vadd.f32 %v3286, %v2005
        %v3289 = vadd.f32 %v3287, %v2005
        %v3290 = vsel %vm1970, %v3288, -inf
        %3291 = vmax.xlane.f32.xlu0 %v3290
        %v3292 = vpop.xlane.xlu0 %3291
        %v3293 = vsel %vm1970, %v3289, -inf
        %3294 = vmax.xlane.f32.xlu0 %v3293
        %v3295 = vpop.xlane.xlu0 %3294
        %v3296 = vsub.f32 %v3288, %v3292
        %v3297 = vsub.f32 %v3289, %v3295
        %v3298 = vmul.f32 %v3296, 1.442695
        %v3299 = vpow.pop %v3298
        %v3300 = vmul.f32 %v3297, 1.442695
        %v3301 = vpow.pop %v3300
        %v3302 = vsel %vm1970, %v3299, 0.0
        %3303 = vadd.xlane.f32.xlu0 %v3302
        %v3304 = vpop.xlane.xlu0 %3303
        %v3305 = vsel %vm1970, %v3301, 0.0
        %3306 = vadd.xlane.f32.xlu0 %v3305
        %v3307 = vpop.xlane.xlu0 %3306
        %v3308 = vrcp.pop %v3304
        %v3309 = vrcp.pop %v3307
        %v3310 = vmul.f32 %v3299, %v3308
        %v3311 = vmul.f32 %v3301, %v3309
        %v3313 = vsel %vm1970, %v3310, 0
        %v3316 = vsel %vm1970, %v3311, 0
        %3318 = vmatpush.msra.mxu0 0.0
        %3319 = vmatpush.msra.mxu0 0.0
        %3320 = vmatpush.msra.mxu0 0.0
        %3321 = vmatpush.msra.mxu0 0.0
        %3322 = vmatpush.msra.mxu0 0.0
        %3323 = vmatpush.msra.mxu0 0.0
        %3324 = vmatpush.msra.mxu0 0.0
        %3325 = vmatpush.msra.mxu0 0.0
        %3326 = vmatpush.msra.mxu0 0.0
        %3327 = vmatpush.msra.mxu0 0.0
        %3328 = vmatpush.msra.mxu0 0.0
        %3329 = vmatpush.msra.mxu0 0.0
        %3330 = vmatpush.msra.mxu0 0.0
        %3331 = vmatpush.msra.mxu0 0.0
        %3332 = vmatpush.msra.mxu0 %v3247
        %3333 = vmatpush.msra.mxu0 %v3244
        %3334 = vmatmul.f32.gmra.mxu0 %v3313
        %v3335 = vpop.f32.mrf.mxu0
        %v3336 = vadd.f32 0.0, %v3335
        %3337 = vmatmul.f32.gmra.mxu0 %v3316
        %v3338 = vpop.f32.mrf.mxu0
        %v3339 = vadd.f32 0.0, %v3338
        %3340 = vdwg.mxu0
        %3341 = vrot.lane.b32.xlu0 %v3221, 112
        %v3342 = vpop.permute.xlu0 %3341
        %3343 = vrot.lane.b32.xlu0 %v3224, 112
        %v3344 = vpop.permute.xlu0 %3343
        %3345 = vrot.lane.b32.xlu0 %v3221, 48
        %v3346 = vpop.permute.xlu0 %3345
        %3347 = vrot.lane.b32.xlu0 %v3224, 48
        %v3348 = vpop.permute.xlu0 %3347
        %v3349 = vsel %vm1970, %v3342, 0
        %v3351 = vsel %vm1970, %v3344, 0
        %v3353 = vsel %vm1970, %v3346, 0
        %v3355 = vsel %vm1970, %v3348, 0
        %3357 = vmatpush.xpose.msra.mxu0 0.0
        %3358 = vmatpush.xpose.msra.mxu0 0.0
        %3359 = vmatpush.xpose.msra.mxu0 0.0
        %3360 = vmatpush.xpose.msra.mxu0 0.0
        %3361 = vmatpush.xpose.msra.mxu0 0.0
        %3362 = vmatpush.xpose.msra.mxu0 0.0
        %3363 = vmatpush.xpose.msra.mxu0 0.0
        %3364 = vmatpush.xpose.msra.mxu0 0.0
        %3365 = vmatpush.xpose.msra.mxu0 0.0
        %3366 = vmatpush.xpose.msra.mxu0 0.0
        %3367 = vmatpush.xpose.msra.mxu0 0.0
        %3368 = vmatpush.xpose.msra.mxu0 0.0
        %3369 = vmatpush.xpose.msra.mxu0 0.0
        %3370 = vmatpush.xpose.msra.mxu0 0.0
        %3371 = vmatpush.xpose.msra.mxu0 %v3355
        %3372 = vmatpush.xpose.msra.mxu0 %v3353
        %3373 = vmatmul.f32.gmra.mxu0 %v3349
        %v3374 = vpop.f32.mrf.mxu0
        %v3375 = vadd.f32 0.0, %v3374
        %3376 = vmatmul.f32.gmra.mxu0 %v3351
        %v3377 = vpop.f32.mrf.mxu0
        %v3378 = vadd.f32 0.0, %v3377
        %3379 = vdwg.mxu0
        %v3380 = vmul.f32 %v3375, 0.25
        %v3381 = vmul.f32 %v3378, 0.25
        %v3382 = vadd.f32 %v3380, %v2005
        %v3383 = vadd.f32 %v3381, %v2005
        %v3384 = vsel %vm1970, %v3382, -inf
        %3385 = vmax.xlane.f32.xlu0 %v3384
        %v3386 = vpop.xlane.xlu0 %3385
        %v3387 = vsel %vm1970, %v3383, -inf
        %3388 = vmax.xlane.f32.xlu0 %v3387
        %v3389 = vpop.xlane.xlu0 %3388
        %v3390 = vsub.f32 %v3382, %v3386
        %v3391 = vsub.f32 %v3383, %v3389
        %v3392 = vmul.f32 %v3390, 1.442695
        %v3393 = vpow.pop %v3392
        %v3394 = vmul.f32 %v3391, 1.442695
        %v3395 = vpow.pop %v3394
        %v3396 = vsel %vm1970, %v3393, 0.0
        %3397 = vadd.xlane.f32.xlu0 %v3396
        %v3398 = vpop.xlane.xlu0 %3397
        %v3399 = vsel %vm1970, %v3395, 0.0
        %3400 = vadd.xlane.f32.xlu0 %v3399
        %v3401 = vpop.xlane.xlu0 %3400
        %v3402 = vrcp.pop %v3398
        %v3403 = vrcp.pop %v3401
        %v3404 = vmul.f32 %v3393, %v3402
        %v3405 = vmul.f32 %v3395, %v3403
        %3408 = vrot.lane.b32.xlu0 %v3244, 112
        %v3409 = vpop.permute.xlu0 %3408
        %3410 = vrot.lane.b32.xlu0 %v3247, 112
        %v3411 = vpop.permute.xlu0 %3410
        %v3415 = vsel %vm1970, %v3404, 0
        %v3418 = vsel %vm1970, %v3405, 0
        %3420 = vmatpush.msra.mxu0 0.0
        %3421 = vmatpush.msra.mxu0 0.0
        %3422 = vmatpush.msra.mxu0 0.0
        %3423 = vmatpush.msra.mxu0 0.0
        %3424 = vmatpush.msra.mxu0 0.0
        %3425 = vmatpush.msra.mxu0 0.0
        %3426 = vmatpush.msra.mxu0 0.0
        %3427 = vmatpush.msra.mxu0 0.0
        %3428 = vmatpush.msra.mxu0 0.0
        %3429 = vmatpush.msra.mxu0 0.0
        %3430 = vmatpush.msra.mxu0 0.0
        %3431 = vmatpush.msra.mxu0 0.0
        %3432 = vmatpush.msra.mxu0 0.0
        %3433 = vmatpush.msra.mxu0 0.0
        %3434 = vmatpush.msra.mxu0 %v3411
        %3435 = vmatpush.msra.mxu0 %v3409
        %3436 = vmatmul.f32.gmra.mxu0 %v3415
        %v3437 = vpop.f32.mrf.mxu0
        %v3438 = vadd.f32 0.0, %v3437
        %3439 = vmatmul.f32.gmra.mxu0 %v3418
        %v3440 = vpop.f32.mrf.mxu0
        %v3441 = vadd.f32 0.0, %v3440
        %3442 = vdwg.mxu0
        %3443 = vrot.lane.b32.xlu0 %v3221, 96
        %v3444 = vpop.permute.xlu0 %3443
        %3445 = vrot.lane.b32.xlu0 %v3224, 96
        %v3446 = vpop.permute.xlu0 %3445
        %3447 = vrot.lane.b32.xlu0 %v3221, 32
        %v3448 = vpop.permute.xlu0 %3447
        %3449 = vrot.lane.b32.xlu0 %v3224, 32
        %v3450 = vpop.permute.xlu0 %3449
        %v3451 = vsel %vm1970, %v3444, 0
        %v3453 = vsel %vm1970, %v3446, 0
        %v3455 = vsel %vm1970, %v3448, 0
        %v3457 = vsel %vm1970, %v3450, 0
        %3459 = vmatpush.xpose.msra.mxu0 0.0
        %3460 = vmatpush.xpose.msra.mxu0 0.0
        %3461 = vmatpush.xpose.msra.mxu0 0.0
        %3462 = vmatpush.xpose.msra.mxu0 0.0
        %3463 = vmatpush.xpose.msra.mxu0 0.0
        %3464 = vmatpush.xpose.msra.mxu0 0.0
        %3465 = vmatpush.xpose.msra.mxu0 0.0
        %3466 = vmatpush.xpose.msra.mxu0 0.0
        %3467 = vmatpush.xpose.msra.mxu0 0.0
        %3468 = vmatpush.xpose.msra.mxu0 0.0
        %3469 = vmatpush.xpose.msra.mxu0 0.0
        %3470 = vmatpush.xpose.msra.mxu0 0.0
        %3471 = vmatpush.xpose.msra.mxu0 0.0
        %3472 = vmatpush.xpose.msra.mxu0 0.0
        %3473 = vmatpush.xpose.msra.mxu0 %v3457
        %3474 = vmatpush.xpose.msra.mxu0 %v3455
        %3475 = vmatmul.f32.gmra.mxu0 %v3451
        %v3476 = vpop.f32.mrf.mxu0
        %v3477 = vadd.f32 0.0, %v3476
        %3478 = vmatmul.f32.gmra.mxu0 %v3453
        %v3479 = vpop.f32.mrf.mxu0
        %v3480 = vadd.f32 0.0, %v3479
        %3481 = vdwg.mxu0
        %v3482 = vmul.f32 %v3477, 0.25
        %v3483 = vmul.f32 %v3480, 0.25
        %v3484 = vadd.f32 %v3482, %v2005
        %v3485 = vadd.f32 %v3483, %v2005
        %v3486 = vsel %vm1970, %v3484, -inf
        %3487 = vmax.xlane.f32.xlu0 %v3486
        %v3488 = vpop.xlane.xlu0 %3487
        %v3489 = vsel %vm1970, %v3485, -inf
        %3490 = vmax.xlane.f32.xlu0 %v3489
        %v3491 = vpop.xlane.xlu0 %3490
        %v3492 = vsub.f32 %v3484, %v3488
        %v3493 = vsub.f32 %v3485, %v3491
        %v3494 = vmul.f32 %v3492, 1.442695
        %v3495 = vpow.pop %v3494
        %v3496 = vmul.f32 %v3493, 1.442695
        %v3497 = vpow.pop %v3496
        %v3498 = vsel %vm1970, %v3495, 0.0
        %3499 = vadd.xlane.f32.xlu0 %v3498
        %v3500 = vpop.xlane.xlu0 %3499
        %v3501 = vsel %vm1970, %v3497, 0.0
        %3502 = vadd.xlane.f32.xlu0 %v3501
        %v3503 = vpop.xlane.xlu0 %3502
        %v3504 = vrcp.pop %v3500
        %v3505 = vrcp.pop %v3503
        %v3506 = vmul.f32 %v3495, %v3504
        %v3507 = vmul.f32 %v3497, %v3505
        %3508 = vrot.lane.b32.xlu0 %v3244, 96
        %v3509 = vpop.permute.xlu0 %3508
        %3510 = vrot.lane.b32.xlu0 %v3247, 96
        %v3511 = vpop.permute.xlu0 %3510
        %v3515 = vsel %vm1970, %v3506, 0
        %v3518 = vsel %vm1970, %v3507, 0
        %3520 = vmatpush.msra.mxu0 0.0
        %3521 = vmatpush.msra.mxu0 0.0
        %3522 = vmatpush.msra.mxu0 0.0
        %3523 = vmatpush.msra.mxu0 0.0
        %3524 = vmatpush.msra.mxu0 0.0
        %3525 = vmatpush.msra.mxu0 0.0
        %3526 = vmatpush.msra.mxu0 0.0
        %3527 = vmatpush.msra.mxu0 0.0
        %3528 = vmatpush.msra.mxu0 0.0
        %3529 = vmatpush.msra.mxu0 0.0
        %3530 = vmatpush.msra.mxu0 0.0
        %3531 = vmatpush.msra.mxu0 0.0
        %3532 = vmatpush.msra.mxu0 0.0
        %3533 = vmatpush.msra.mxu0 0.0
        %3534 = vmatpush.msra.mxu0 %v3511
        %3535 = vmatpush.msra.mxu0 %v3509
        %3536 = vmatmul.f32.gmra.mxu0 %v3515
        %v3537 = vpop.f32.mrf.mxu0
        %v3538 = vadd.f32 0.0, %v3537
        %3539 = vmatmul.f32.gmra.mxu0 %v3518
        %v3540 = vpop.f32.mrf.mxu0
        %v3541 = vadd.f32 0.0, %v3540
        %3542 = vdwg.mxu0
        %3543 = vrot.lane.b32.xlu0 %v3221, 80
        %v3544 = vpop.permute.xlu0 %3543
        %3545 = vrot.lane.b32.xlu0 %v3224, 80
        %v3546 = vpop.permute.xlu0 %3545
        %3547 = vrot.lane.b32.xlu0 %v3221, 16
        %v3548 = vpop.permute.xlu0 %3547
        %3549 = vrot.lane.b32.xlu0 %v3224, 16
        %v3550 = vpop.permute.xlu0 %3549
        %v3551 = vsel %vm1970, %v3544, 0
        %v3553 = vsel %vm1970, %v3546, 0
        %v3555 = vsel %vm1970, %v3548, 0
        %v3557 = vsel %vm1970, %v3550, 0
        %3559 = vmatpush.xpose.msra.mxu0 0.0
        %3560 = vmatpush.xpose.msra.mxu0 0.0
        %3561 = vmatpush.xpose.msra.mxu0 0.0
        %3562 = vmatpush.xpose.msra.mxu0 0.0
        %3563 = vmatpush.xpose.msra.mxu0 0.0
        %3564 = vmatpush.xpose.msra.mxu0 0.0
        %3565 = vmatpush.xpose.msra.mxu0 0.0
        %3566 = vmatpush.xpose.msra.mxu0 0.0
        %3567 = vmatpush.xpose.msra.mxu0 0.0
        %3568 = vmatpush.xpose.msra.mxu0 0.0
        %3569 = vmatpush.xpose.msra.mxu0 0.0
        %3570 = vmatpush.xpose.msra.mxu0 0.0
        %3571 = vmatpush.xpose.msra.mxu0 0.0
        %3572 = vmatpush.xpose.msra.mxu0 0.0
        %3573 = vmatpush.xpose.msra.mxu0 %v3557
        %3574 = vmatpush.xpose.msra.mxu0 %v3555
        %3575 = vmatmul.f32.gmra.mxu0 %v3551
        %v3576 = vpop.f32.mrf.mxu0
        %v3577 = vadd.f32 0.0, %v3576
        %3578 = vmatmul.f32.gmra.mxu0 %v3553
        %v3579 = vpop.f32.mrf.mxu0
        %v3580 = vadd.f32 0.0, %v3579
        %3581 = vdwg.mxu0
        %v3582 = vmul.f32 %v3577, 0.25
        %v3583 = vmul.f32 %v3580, 0.25
        %v3584 = vadd.f32 %v3582, %v2005
        %v3585 = vadd.f32 %v3583, %v2005
        %v3586 = vsel %vm1970, %v3584, -inf
        %3587 = vmax.xlane.f32.xlu0 %v3586
        %v3588 = vpop.xlane.xlu0 %3587
        %v3589 = vsel %vm1970, %v3585, -inf
        %3590 = vmax.xlane.f32.xlu0 %v3589
        %v3591 = vpop.xlane.xlu0 %3590
        %v3592 = vsub.f32 %v3584, %v3588
        %v3593 = vsub.f32 %v3585, %v3591
        %v3594 = vmul.f32 %v3592, 1.442695
        %v3595 = vpow.pop %v3594
        %v3596 = vmul.f32 %v3593, 1.442695
        %v3597 = vpow.pop %v3596
        %v3598 = vsel %vm1970, %v3595, 0.0
        %3599 = vadd.xlane.f32.xlu0 %v3598
        %v3600 = vpop.xlane.xlu0 %3599
        %v3601 = vsel %vm1970, %v3597, 0.0
        %3602 = vadd.xlane.f32.xlu0 %v3601
        %v3603 = vpop.xlane.xlu0 %3602
        %v3604 = vrcp.pop %v3600
        %v3605 = vrcp.pop %v3603
        %v3606 = vmul.f32 %v3595, %v3604
        %v3607 = vmul.f32 %v3597, %v3605
        %3608 = vrot.lane.b32.xlu0 %v3244, 80
        %v3609 = vpop.permute.xlu0 %3608
        %3610 = vrot.lane.b32.xlu0 %v3247, 80
        %v3611 = vpop.permute.xlu0 %3610
        %v3615 = vsel %vm1970, %v3606, 0
        %v3618 = vsel %vm1970, %v3607, 0
        %3620 = vmatpush.msra.mxu0 0.0
        %3621 = vmatpush.msra.mxu0 0.0
        %3622 = vmatpush.msra.mxu0 0.0
        %3623 = vmatpush.msra.mxu0 0.0
        %3624 = vmatpush.msra.mxu0 0.0
        %3625 = vmatpush.msra.mxu0 0.0
        %3626 = vmatpush.msra.mxu0 0.0
        %3627 = vmatpush.msra.mxu0 0.0
        %3628 = vmatpush.msra.mxu0 0.0
        %3629 = vmatpush.msra.mxu0 0.0
        %3630 = vmatpush.msra.mxu0 0.0
        %3631 = vmatpush.msra.mxu0 0.0
        %3632 = vmatpush.msra.mxu0 0.0
        %3633 = vmatpush.msra.mxu0 0.0
        %3634 = vmatpush.msra.mxu0 %v3611
        %3635 = vmatpush.msra.mxu0 %v3609
        %3636 = vmatmul.f32.gmra.mxu0 %v3615
        %v3637 = vpop.f32.mrf.mxu0
        %v3638 = vadd.f32 0.0, %v3637
        %3639 = vmatmul.f32.gmra.mxu0 %v3618
        %v3640 = vpop.f32.mrf.mxu0
        %v3641 = vadd.f32 0.0, %v3640
        %3642 = vdwg.mxu0
        %3645 = vrot.lane.b32.xlu0 %v3438, 16
        %v3646 = vpop.permute.xlu0 %3645
        %3647 = vrot.lane.b32.xlu0 %v3441, 16
        %v3648 = vpop.permute.xlu0 %3647
        %3653 = vrot.lane.b32.xlu0 %v3538, 32
        %v3654 = vpop.permute.xlu0 %3653
        %3655 = vrot.lane.b32.xlu0 %v3541, 32
        %v3656 = vpop.permute.xlu0 %3655
        %3661 = vrot.lane.b32.xlu0 %v3638, 48
        %v3662 = vpop.permute.xlu0 %3661
        %3663 = vrot.lane.b32.xlu0 %v3641, 48
        %v3664 = vpop.permute.xlu0 %3663
        %v3667 = vsel %vm1970, %v3336, %v3646
        %v3668 = vsel %vm1970, %v3339, %v3648
        %v3669 = vsel %vm2388, %v3667, %v3654
        %v3670 = vsel %vm2388, %v3668, %v3656
        %v3671 = vsel %vm2391, %v3669, %v3662
        %v3672 = vsel %vm2391, %v3670, %v3664
        %v3673 = vld [vmem:[%s99] sm:$0xff]
        %v3674 = vld [vmem:[%s99 + $0x8] sm:$0xff]
        %v3675 = vld [vmem:[%s99 + $0x10] sm:$0xff]
        %v3676 = vld [vmem:[%s99 + $0x18] sm:$0xff]
        %v3677 = vld [vmem:[%s99 + $0x20] sm:$0xff]
        %v3678 = vld [vmem:[%s99 + $0x28] sm:$0xff]
        %v3679 = vld [vmem:[%s99 + $0x30] sm:$0xff]
        %v3680 = vld [vmem:[%s99 + $0x38] sm:$0xff]
        %v3681 = vld [vmem:[#allocation12] sm:$0x1]
        %v3683 = vperm.slane %v3681, 0
        %v3686 = vsel %vm1767, %v3671, 0
        %v3689 = vsel %vm1767, %v3672, 0
        %3691 = vmatpush.msra.mxu0 0.0
        %3692 = vmatpush.msra.mxu0 0.0
        %3693 = vmatpush.msra.mxu0 0.0
        %3694 = vmatpush.msra.mxu0 0.0
        %3695 = vmatpush.msra.mxu0 0.0
        %3696 = vmatpush.msra.mxu0 0.0
        %3697 = vmatpush.msra.mxu0 0.0
        %3698 = vmatpush.msra.mxu0 0.0
        %3699 = vmatpush.msra.mxu0 %v3680
        %3700 = vmatpush.msra.mxu0 %v3679
        %3701 = vmatpush.msra.mxu0 %v3678
        %3702 = vmatpush.msra.mxu0 %v3677
        %3703 = vmatpush.msra.mxu0 %v3676
        %3704 = vmatpush.msra.mxu0 %v3675
        %3705 = vmatpush.msra.mxu0 %v3674
        %3706 = vmatpush.msra.mxu0 %v3673
        %3707 = vmatmul.f32.gmra.mxu0 %v3686
        %v3708 = vpop.f32.mrf.mxu0
        %v3709 = vadd.f32 %v3683, %v3708
        %3710 = vmatmul.f32.gmra.mxu0 %v3689
        %v3711 = vpop.f32.mrf.mxu0
        %3712 = vdwg.mxu0
        %v3713 = vadd.f32 %v3709, %v3057
        %v3714 = vsel %vm1767, %v3713, 0.0
        %3715 = vadd.xlane.f32.xlu0 %v3714
        %v3716 = vpop.xlane.xlu0 %3715
        %v3717 = vmul.f32 %v3716, %v1780
        %v3718 = vsub.f32 %v3713, %v3717
        %v3719 = vmul.f32 %v3718, %v3718
        %v3720 = vsel %vm1767, %v3719, 0.0
        %3721 = vadd.xlane.f32.xlu0 %v3720
        %v3722 = vpop.xlane.xlu0 %3721
        %v3723 = vmul.f32 %v3722, %v1780
        %v3724 = vadd.f32 %v3723, 1e-12
        %v3725 = vrsqrt.pop %v3724
        %v3726 = vmul.f32 %v3725, %v3724
        %v3727 = vmul.f32 %v3726, %v3725
        %v3728 = vmul.f32 0.5, %v3727
        %v3729 = vsub.f32 1.5, %v3728
        %v3730 = vmul.f32 %v3725, %v3729
        %vm3731 = vweird.f32 %v3724
        %vm3732 = vweird.f32 %v3725
        %vm3733 = vmor %vm3731, %vm3732
        %v3734 = vsel %vm3733, %v3725, %v3730
        %v3735 = vmul.f32 %v3718, %v3734
        %v3736 = vld [vmem:[#allocation15] sm:$0x1]
        %v3738 = vperm.slane %v3736, 0
        %v3740 = vmul.f32 %v3735, %v3738
        %v3741 = vld [vmem:[#allocation13] sm:$0x1]
        %v3743 = vperm.slane %v3741, 0
        %v3745 = vadd.f32 %v3740, %v3743
        %v3746 = vld [vmem:[%s75] sm:$0xff]
        %v3747 = vld [vmem:[%s75 + $0x8] sm:$0xff]
        %v3748 = vld [vmem:[%s75 + $0x10] sm:$0xff]
        %v3749 = vld [vmem:[%s75 + $0x18] sm:$0xff]
        %v3750 = vld [vmem:[%s75 + $0x20] sm:$0xff]
        %v3751 = vld [vmem:[%s75 + $0x28] sm:$0xff]
        %v3752 = vld [vmem:[%s75 + $0x30] sm:$0xff]
        %v3753 = vld [vmem:[%s75 + $0x38] sm:$0xff]
        %v3754 = vld [vmem:[%s67] sm:$0x1]
        %v3756 = vperm.slane %v3754, 0
        %v3759 = vsel %vm1767, %v3745, 0
        %3761 = vmatpush.msra.mxu0 0.0
        %3762 = vmatpush.msra.mxu0 0.0
        %3763 = vmatpush.msra.mxu0 0.0
        %3764 = vmatpush.msra.mxu0 0.0
        %3765 = vmatpush.msra.mxu0 0.0
        %3766 = vmatpush.msra.mxu0 0.0
        %3767 = vmatpush.msra.mxu0 0.0
        %3768 = vmatpush.msra.mxu0 0.0
        %3769 = vmatpush.msra.mxu0 %v3753
        %3770 = vmatpush.msra.mxu0 %v3752
        %3771 = vmatpush.msra.mxu0 %v3751
        %3772 = vmatpush.msra.mxu0 %v3750
        %3773 = vmatpush.msra.mxu0 %v3749
        %3774 = vmatpush.msra.mxu0 %v3748
        %3775 = vmatpush.msra.mxu0 %v3747
        %3776 = vmatpush.msra.mxu0 %v3746
        %3777 = vmatmul.f32.gmra.mxu0 %v3759
        %v3778 = vpop.f32.mrf.mxu0
        %v3779 = vadd.f32 %v3756, %v3778
        %3780 = vdwg.mxu0
        %v3781 = vmul.f32 %v3779, %v3779
        %v3782 = vmul.f32 %v3779, %v3781
        %v3783 = vmul.f32 %v3782, 0.044715
        %v3784 = vadd.f32 %v3779, %v3783
        %v3785 = vmul.f32 %v3784, 0.7978846
        %v3786 = vtanh.pop %v3785
        %v3787 = vadd.f32 %v3786, 1.0
        %v3788 = vmul.f32 %v3787, 0.5
        %v3789 = vmul.f32 %v3779, %v3788
        %v3790 = vld [vmem:[%s77] sm:$0xff]
        %v3791 = vld [vmem:[%s77 + $0x8] sm:$0xff]
        %v3792 = vld [vmem:[%s77 + $0x10] sm:$0xff]
        %v3793 = vld [vmem:[%s77 + $0x18] sm:$0xff]
        %v3794 = vld [vmem:[%s77 + $0x20] sm:$0xff]
        %v3795 = vld [vmem:[%s77 + $0x28] sm:$0xff]
        %v3796 = vld [vmem:[%s77 + $0x30] sm:$0xff]
        %v3797 = vld [vmem:[%s77 + $0x38] sm:$0xff]
        %v3798 = vld [vmem:[%s77 + $0x40] sm:$0xff]
        %v3799 = vld [vmem:[%s77 + $0x48] sm:$0xff]
        %v3800 = vld [vmem:[%s77 + $0x50] sm:$0xff]
        %v3801 = vld [vmem:[%s77 + $0x58] sm:$0xff]
        %v3802 = vld [vmem:[%s77 + $0x60] sm:$0xff]
        %v3803 = vld [vmem:[%s77 + $0x68] sm:$0xff]
        %v3804 = vld [vmem:[%s77 + $0x70] sm:$0xff]
        %v3805 = vld [vmem:[%s77 + $0x78] sm:$0xff]
        %v3806 = vld [vmem:[%s69] sm:$0x1]
        %v3808 = vperm.slane %v3806, 0
        %3810 = vmatpush.msra.mxu0 %v3805
        %3811 = vmatpush.msra.mxu0 %v3804
        %3812 = vmatpush.msra.mxu0 %v3803
        %3813 = vmatpush.msra.mxu0 %v3802
        %3814 = vmatpush.msra.mxu0 %v3801
        %3815 = vmatpush.msra.mxu0 %v3800
        %3816 = vmatpush.msra.mxu0 %v3799
        %3817 = vmatpush.msra.mxu0 %v3798
        %3818 = vmatpush.msra.mxu0 %v3797
        %3819 = vmatpush.msra.mxu0 %v3796
        %3820 = vmatpush.msra.mxu0 %v3795
        %3821 = vmatpush.msra.mxu0 %v3794
        %3822 = vmatpush.msra.mxu0 %v3793
        %3823 = vmatpush.msra.mxu0 %v3792
        %3824 = vmatpush.msra.mxu0 %v3791
        %3825 = vmatpush.msra.mxu0 %v3790
        %3826 = vmatmul.f32.gmra.mxu0 %v3789
        %v3827 = vpop.f32.mrf.mxu0
        %v3828 = vadd.f32 %v3808, %v3827
        %3829 = vdwg.mxu0
        %v3830 = vadd.f32 %v3828, %v3745
        %v3831 = vsel %vm1767, %v3830, 0.0
        %3832 = vadd.xlane.f32.xlu0 %v3831
        %v3833 = vpop.xlane.xlu0 %3832
        %v3834 = vmul.f32 %v3833, %v1780
        %v3835 = vsub.f32 %v3830, %v3834
        %v3836 = vmul.f32 %v3835, %v3835
        %v3837 = vsel %vm1767, %v3836, 0.0
        %3838 = vadd.xlane.f32.xlu0 %v3837
        %v3839 = vpop.xlane.xlu0 %3838
        %v3840 = vmul.f32 %v3839, %v1780
        %v3841 = vadd.f32 %v3840, 1e-12
        %v3842 = vrsqrt.pop %v3841
        %v3843 = vmul.f32 %v3842, %v3841
        %v3844 = vmul.f32 %v3843, %v3842
        %v3845 = vmul.f32 0.5, %v3844
        %v3846 = vsub.f32 1.5, %v3845
        %v3847 = vmul.f32 %v3842, %v3846
        %vm3848 = vweird.f32 %v3841
        %vm3849 = vweird.f32 %v3842
        %vm3850 = vmor %vm3848, %vm3849
        %v3851 = vsel %vm3850, %v3842, %v3847
        %v3852 = vmul.f32 %v3835, %v3851
        %v3853 = vld [vmem:[#allocation4] sm:$0x1]
        %v3855 = vperm.slane %v3853, 0
        %v3857 = vmul.f32 %v3852, %v3855
        %v3858 = vld [vmem:[#allocation2] sm:$0x1]
        %v3860 = vperm.slane %v3858, 0
        %v3862 = vadd.f32 %v3857, %v3860
        %v3863 = vld [vmem:[%s13] sm:$0x1]
        %v3864 = vld [vmem:[%s11] sm:$0xff]
        %v3865 = vld [vmem:[%s11 + $0x8] sm:$0xff]
        %v3866 = vld [vmem:[%s11 + $0x10] sm:$0xff]
        %v3867 = vld [vmem:[%s11 + $0x18] sm:$0xff]
        %v3868 = vld [vmem:[%s11 + $0x20] sm:$0xff]
        %v3869 = vld [vmem:[%s11 + $0x28] sm:$0xff]
        %v3870 = vld [vmem:[%s11 + $0x30] sm:$0xff]
        %v3871 = vld [vmem:[%s11 + $0x38] sm:$0xff]
        %v3873 = vsel %vm1767, %v3862, 0
        %3875 = vmatpush.msra.mxu0 0.0
        %3876 = vmatpush.msra.mxu0 0.0
        %3877 = vmatpush.msra.mxu0 0.0
        %3878 = vmatpush.msra.mxu0 0.0
        %3879 = vmatpush.msra.mxu0 0.0
        %3880 = vmatpush.msra.mxu0 0.0
        %3881 = vmatpush.msra.mxu0 0.0
        %3882 = vmatpush.msra.mxu0 0.0
        %3883 = vmatpush.msra.mxu0 %v3871
        %3884 = vmatpush.msra.mxu0 %v3870
        %3885 = vmatpush.msra.mxu0 %v3869
        %3886 = vmatpush.msra.mxu0 %v3868
        %3887 = vmatpush.msra.mxu0 %v3867
        %3888 = vmatpush.msra.mxu0 %v3866
        %3889 = vmatpush.msra.mxu0 %v3865
        %3890 = vmatpush.msra.mxu0 %v3864
        %3891 = vmatmul.f32.gmra.mxu0 %v3873
        %v3892 = vpop.f32.mrf.mxu0
        %v3893 = vadd.f32 0.0, %v3892
        %3894 = vdwg.mxu0
        %v3895 = vadd.f32 %v3863, %v3893
        %v3896 = vld [vmem:[%s11 + $0x40] sm:$0xff]
        %v3897 = vld [vmem:[%s11 + $0x48] sm:$0xff]
        %v3898 = vld [vmem:[%s11 + $0x50] sm:$0xff]
        %v3899 = vld [vmem:[%s11 + $0x58] sm:$0xff]
        %v3900 = vld [vmem:[%s11 + $0x60] sm:$0xff]
        %v3901 = vld [vmem:[%s11 + $0x68] sm:$0xff]
        %v3902 = vld [vmem:[%s11 + $0x70] sm:$0xff]
        %v3903 = vld [vmem:[%s11 + $0x78] sm:$0xff]
        %v3904 = vrot.slane %v3862, 1
        %v3905 = vsel %vm1767, %v3904, 0
        %3907 = vmatpush.msra.mxu0 0.0
        %3908 = vmatpush.msra.mxu0 0.0
        %3909 = vmatpush.msra.mxu0 0.0
        %3910 = vmatpush.msra.mxu0 0.0
        %3911 = vmatpush.msra.mxu0 0.0
        %3912 = vmatpush.msra.mxu0 0.0
        %3913 = vmatpush.msra.mxu0 0.0
        %3914 = vmatpush.msra.mxu0 0.0
        %3915 = vmatpush.msra.mxu0 %v3903
        %3916 = vmatpush.msra.mxu0 %v3902
        %3917 = vmatpush.msra.mxu0 %v3901
        %3918 = vmatpush.msra.mxu0 %v3900
        %3919 = vmatpush.msra.mxu0 %v3899
        %3920 = vmatpush.msra.mxu0 %v3898
        %3921 = vmatpush.msra.mxu0 %v3897
        %3922 = vmatpush.msra.mxu0 %v3896
        %3923 = vmatmul.f32.gmra.mxu0 %v3905
        %v3924 = vpop.f32.mrf.mxu0
        %v3925 = vadd.f32 0.0, %v3924
        %3926 = vdwg.mxu0
        %v3927 = vadd.f32 %v3895, %v3925
        %v3928 = vld [vmem:[%s11 + $0x80] sm:$0xff]
        %v3929 = vld [vmem:[%s11 + $0x88] sm:$0xff]
        %v3930 = vld [vmem:[%s11 + $0x90] sm:$0xff]
        %v3931 = vld [vmem:[%s11 + $0x98] sm:$0xff]
        %v3932 = vld [vmem:[%s11 + $0xa0] sm:$0xff]
        %v3933 = vld [vmem:[%s11 + $0xa8] sm:$0xff]
        %v3934 = vld [vmem:[%s11 + $0xb0] sm:$0xff]
        %v3935 = vld [vmem:[%s11 + $0xb8] sm:$0xff]
        %v3936 = vrot.slane %v3862, 2
        %v3937 = vsel %vm1767, %v3936, 0
        %3939 = vmatpush.msra.mxu0 0.0
        %3940 = vmatpush.msra.mxu0 0.0
        %3941 = vmatpush.msra.mxu0 0.0
        %3942 = vmatpush.msra.mxu0 0.0
        %3943 = vmatpush.msra.mxu0 0.0
        %3944 = vmatpush.msra.mxu0 0.0
        %3945 = vmatpush.msra.mxu0 0.0
        %3946 = vmatpush.msra.mxu0 0.0
        %3947 = vmatpush.msra.mxu0 %v3935
        %3948 = vmatpush.msra.mxu0 %v3934
        %3949 = vmatpush.msra.mxu0 %v3933
        %3950 = vmatpush.msra.mxu0 %v3932
        %3951 = vmatpush.msra.mxu0 %v3931
        %3952 = vmatpush.msra.mxu0 %v3930
        %3953 = vmatpush.msra.mxu0 %v3929
        %3954 = vmatpush.msra.mxu0 %v3928
        %3955 = vmatmul.f32.gmra.mxu0 %v3937
        %v3956 = vpop.f32.mrf.mxu0
        %v3957 = vadd.f32 0.0, %v3956
        %3958 = vdwg.mxu0
        %v3959 = vadd.f32 %v3927, %v3957
        %v3960 = vld [vmem:[%s11 + $0xc0] sm:$0xff]
        %v3961 = vld [vmem:[%s11 + $0xc8] sm:$0xff]
        %v3962 = vld [vmem:[%s11 + $0xd0] sm:$0xff]
        %v3963 = vld [vmem:[%s11 + $0xd8] sm:$0xff]
        %v3964 = vld [vmem:[%s11 + $0xe0] sm:$0xff]
        %v3965 = vld [vmem:[%s11 + $0xe8] sm:$0xff]
        %v3966 = vld [vmem:[%s11 + $0xf0] sm:$0xff]
        %v3967 = vld [vmem:[%s11 + $0xf8] sm:$0xff]
        %v3968 = vrot.slane %v3862, 3
        %v3969 = vsel %vm1767, %v3968, 0
        %3971 = vmatpush.msra.mxu0 0.0
        %3972 = vmatpush.msra.mxu0 0.0
        %3973 = vmatpush.msra.mxu0 0.0
        %3974 = vmatpush.msra.mxu0 0.0
        %3975 = vmatpush.msra.mxu0 0.0
        %3976 = vmatpush.msra.mxu0 0.0
        %3977 = vmatpush.msra.mxu0 0.0
        %3978 = vmatpush.msra.mxu0 0.0
        %3979 = vmatpush.msra.mxu0 %v3967
        %3980 = vmatpush.msra.mxu0 %v3966
        %3981 = vmatpush.msra.mxu0 %v3965
        %3982 = vmatpush.msra.mxu0 %v3964
        %3983 = vmatpush.msra.mxu0 %v3963
        %3984 = vmatpush.msra.mxu0 %v3962
        %3985 = vmatpush.msra.mxu0 %v3961
        %3986 = vmatpush.msra.mxu0 %v3960
        %3987 = vmatmul.f32.gmra.mxu0 %v3969
        %v3988 = vpop.f32.mrf.mxu0
        %v3989 = vadd.f32 0.0, %v3988
        %3990 = vdwg.mxu0
        %v3991 = vadd.f32 %v3959, %v3989
        %v3992 = vld [vmem:[%s11 + $0x100] sm:$0xff]
        %v3993 = vld [vmem:[%s11 + $0x108] sm:$0xff]
        %v3994 = vld [vmem:[%s11 + $0x110] sm:$0xff]
        %v3995 = vld [vmem:[%s11 + $0x118] sm:$0xff]
        %v3996 = vld [vmem:[%s11 + $0x120] sm:$0xff]
        %v3997 = vld [vmem:[%s11 + $0x128] sm:$0xff]
        %v3998 = vld [vmem:[%s11 + $0x130] sm:$0xff]
        %v3999 = vld [vmem:[%s11 + $0x138] sm:$0xff]
        %v4000 = vrot.slane %v3862, 4
        %v4001 = vsel %vm1767, %v4000, 0
        %4003 = vmatpush.msra.mxu0 0.0
        %4004 = vmatpush.msra.mxu0 0.0
        %4005 = vmatpush.msra.mxu0 0.0
        %4006 = vmatpush.msra.mxu0 0.0
        %4007 = vmatpush.msra.mxu0 0.0
        %4008 = vmatpush.msra.mxu0 0.0
        %4009 = vmatpush.msra.mxu0 0.0
        %4010 = vmatpush.msra.mxu0 0.0
        %4011 = vmatpush.msra.mxu0 %v3999
        %4012 = vmatpush.msra.mxu0 %v3998
        %4013 = vmatpush.msra.mxu0 %v3997
        %4014 = vmatpush.msra.mxu0 %v3996
        %4015 = vmatpush.msra.mxu0 %v3995
        %4016 = vmatpush.msra.mxu0 %v3994
        %4017 = vmatpush.msra.mxu0 %v3993
        %4018 = vmatpush.msra.mxu0 %v3992
        %4019 = vmatmul.f32.gmra.mxu0 %v4001
        %v4020 = vpop.f32.mrf.mxu0
        %v4021 = vadd.f32 0.0, %v4020
        %4022 = vdwg.mxu0
        %v4023 = vadd.f32 %v3991, %v4021
        %v4024 = vld [vmem:[%s11 + $0x140] sm:$0xff]
        %v4025 = vld [vmem:[%s11 + $0x148] sm:$0xff]
        %v4026 = vld [vmem:[%s11 + $0x150] sm:$0xff]
        %v4027 = vld [vmem:[%s11 + $0x158] sm:$0xff]
        %v4028 = vld [vmem:[%s11 + $0x160] sm:$0xff]
        %v4029 = vld [vmem:[%s11 + $0x168] sm:$0xff]
        %v4030 = vld [vmem:[%s11 + $0x170] sm:$0xff]
        %v4031 = vld [vmem:[%s11 + $0x178] sm:$0xff]
        %v4032 = vrot.slane %v3862, 5
        %v4033 = vsel %vm1767, %v4032, 0
        %4035 = vmatpush.msra.mxu0 0.0
        %4036 = vmatpush.msra.mxu0 0.0
        %4037 = vmatpush.msra.mxu0 0.0
        %4038 = vmatpush.msra.mxu0 0.0
        %4039 = vmatpush.msra.mxu0 0.0
        %4040 = vmatpush.msra.mxu0 0.0
        %4041 = vmatpush.msra.mxu0 0.0
        %4042 = vmatpush.msra.mxu0 0.0
        %4043 = vmatpush.msra.mxu0 %v4031
        %4044 = vmatpush.msra.mxu0 %v4030
        %4045 = vmatpush.msra.mxu0 %v4029
        %4046 = vmatpush.msra.mxu0 %v4028
        %4047 = vmatpush.msra.mxu0 %v4027
        %4048 = vmatpush.msra.mxu0 %v4026
        %4049 = vmatpush.msra.mxu0 %v4025
        %4050 = vmatpush.msra.mxu0 %v4024
        %4051 = vmatmul.f32.gmra.mxu0 %v4033
        %v4052 = vpop.f32.mrf.mxu0
        %v4053 = vadd.f32 0.0, %v4052
        %4054 = vdwg.mxu0
        %v4055 = vadd.f32 %v4023, %v4053
        %v4056 = vld [vmem:[%s11 + $0x180] sm:$0xff]
        %v4057 = vld [vmem:[%s11 + $0x188] sm:$0xff]
        %v4058 = vld [vmem:[%s11 + $0x190] sm:$0xff]
        %v4059 = vld [vmem:[%s11 + $0x198] sm:$0xff]
        %v4060 = vld [vmem:[%s11 + $0x1a0] sm:$0xff]
        %v4061 = vld [vmem:[%s11 + $0x1a8] sm:$0xff]
        %v4062 = vld [vmem:[%s11 + $0x1b0] sm:$0xff]
        %v4063 = vld [vmem:[%s11 + $0x1b8] sm:$0xff]
        %v4064 = vrot.slane %v3862, 6
        %v4065 = vsel %vm1767, %v4064, 0
        %4067 = vmatpush.msra.mxu0 0.0
        %4068 = vmatpush.msra.mxu0 0.0
        %4069 = vmatpush.msra.mxu0 0.0
        %4070 = vmatpush.msra.mxu0 0.0
        %4071 = vmatpush.msra.mxu0 0.0
        %4072 = vmatpush.msra.mxu0 0.0
        %4073 = vmatpush.msra.mxu0 0.0
        %4074 = vmatpush.msra.mxu0 0.0
        %4075 = vmatpush.msra.mxu0 %v4063
        %4076 = vmatpush.msra.mxu0 %v4062
        %4077 = vmatpush.msra.mxu0 %v4061
        %4078 = vmatpush.msra.mxu0 %v4060
        %4079 = vmatpush.msra.mxu0 %v4059
        %4080 = vmatpush.msra.mxu0 %v4058
        %4081 = vmatpush.msra.mxu0 %v4057
        %4082 = vmatpush.msra.mxu0 %v4056
        %4083 = vmatmul.f32.gmra.mxu0 %v4065
        %v4084 = vpop.f32.mrf.mxu0
        %v4085 = vadd.f32 0.0, %v4084
        %4086 = vdwg.mxu0
        %v4087 = vadd.f32 %v4055, %v4085
        %v4088 = vld [vmem:[%s11 + $0x1c0] sm:$0xff]
        %v4089 = vld [vmem:[%s11 + $0x1c8] sm:$0xff]
        %v4090 = vld [vmem:[%s11 + $0x1d0] sm:$0xff]
        %v4091 = vld [vmem:[%s11 + $0x1d8] sm:$0xff]
        %v4092 = vld [vmem:[%s11 + $0x1e0] sm:$0xff]
        %v4093 = vld [vmem:[%s11 + $0x1e8] sm:$0xff]
        %v4094 = vld [vmem:[%s11 + $0x1f0] sm:$0xff]
        %v4095 = vld [vmem:[%s11 + $0x1f8] sm:$0xff]
        %v4096 = vrot.slane %v3862, 7
        %v4097 = vsel %vm1767, %v4096, 0
        %4099 = vmatpush.msra.mxu0 0.0
        %4100 = vmatpush.msra.mxu0 0.0
        %4101 = vmatpush.msra.mxu0 0.0
        %4102 = vmatpush.msra.mxu0 0.0
        %4103 = vmatpush.msra.mxu0 0.0
        %4104 = vmatpush.msra.mxu0 0.0
        %4105 = vmatpush.msra.mxu0 0.0
        %4106 = vmatpush.msra.mxu0 0.0
        %4107 = vmatpush.msra.mxu0 %v4095
        %4108 = vmatpush.msra.mxu0 %v4094
        %4109 = vmatpush.msra.mxu0 %v4093
        %4110 = vmatpush.msra.mxu0 %v4092
        %4111 = vmatpush.msra.mxu0 %v4091
        %4112 = vmatpush.msra.mxu0 %v4090
        %4113 = vmatpush.msra.mxu0 %v4089
        %4114 = vmatpush.msra.mxu0 %v4088
        %4115 = vmatmul.f32.gmra.mxu0 %v4097
        %v4116 = vpop.f32.mrf.mxu0
        %v4117 = vadd.f32 0.0, %v4116
        %4118 = vdwg.mxu0
        %v4119 = vadd.f32 %v4087, %v4117
        %vm4120 = vcmask 8192
        %v4121 = vsel %vm4120, %v4119, 0.0
        %4122 = vadd.xlane.f32.xlu0 %v4121
        %v4123 = vpop.xlane.xlu0 %4122
        %v4124 = vrcp.pop 2.0
        %v4125 = vmul.f32 2.0, %v4124
        %v4126 = vsub.f32 1.0, %v4125
        %v4127 = vmul.f32 %v4124, %v4126
        %v4128 = vadd.f32 %v4124, %v4127
        %vm4129 = vweird.f32 %v4124
        %v4130 = vsel %vm4129, %v4124, %v4128
        %v4131 = vmul.f32 %v4123, %v4130
        %v4132 = vsub.f32 0.0, %v4131
        %v4133 = vmul.f32 %v4132, 1.442695
        %v4134 = vpow.pop %v4133
        %v4135 = vadd.f32 %v4134, 1.0
        %v4136 = vrcp.pop %v4135
        %v4137 = vmul.f32 %v4135, %v4136
        %v4138 = vsub.f32 1.0, %v4137
        %v4139 = vmul.f32 %v4136, %v4138
        %v4140 = vadd.f32 %v4136, %v4139
        %vm4141 = vweird.f32 %v4135
        %vm4142 = vweird.f32 %v4136
        %vm4143 = vmor %vm4141, %vm4142
        %v4144 = vsel %vm4143, %v4136, %v4140
        %v4145 = vand.u32 2147483647, %v4135
        %vm4146 = vcmp.eq.f32.partialorder %v4145, 8.507059e+37
        %v4147 = vand.u32 %v4135, 2147483648
        %v4148 = vor.u32 1.1754944e-38, %v4147
        %v4149 = vsel %vm4146, %v4148, %v4144
        %v4150 = vmul.f32 1.0, %v4149
        %vm4151 = vcmask 0
        %4152 = vst.msk [vmem:[%s1764] sm:$0x1] %vm4151, %v4150
        %p4153 = scmp.lt.s32.totalorder %s124, 1
        %s4154 = scalar_select %p4153, %s124, 1
        %s4155 = scalar_lea.vmem %s107, %s4154
        // Predicated region
        $region277: #{npc_cls_forward.1} parent=231 // pred_check
          %p4156 = pneg %p1270
        $region278: #{npc_cls_forward.1} parent=231 // pred_check_branch
          %4158 = sbr.rel (%p4156) target = $region280
        $region279: #{npc_cls_forward.1} parent=231 // pred_region
          _
        $region280: #{npc_cls_forward.1} parent=231 // pred_fallthru
          _
      $region232: #{npc_cls_forward.1} parent=5 // pred_fallthru
        _
      %p4159 = scmp.le.s32.totalorder 2, %s119
      // Predicated region
      $region281: #{npc_cls_forward.1} parent=5 // pred_check
        %p4160 = pneg %p4159
      $region282: #{npc_cls_forward.1} parent=5 // pred_check_branch
        %4162 = sbr.rel (%p4160) target = $region284
      $region283: #{npc_cls_forward.1} parent=5 // pred_region
        %s4163 = ssub.s32 %s119, 2
        // Predicated region
        $region285: #{npc_cls_forward.1} parent=283 // pred_check
          %p4164 = pneg %p1276
        $region286: #{npc_cls_forward.1} parent=283 // pred_check_branch
          %4166 = sbr.rel (%p4164) target = $region288
        $region287: #{npc_cls_forward.1} parent=283 // pred_region
          %p4167 = scmp.lt.s32.totalorder %s125, 1
          %s4168 = scalar_select %p4167, %s125, 1
          %s4169 = scalar_lea.vmem %s107, %s4168
        $region288: #{npc_cls_forward.1} parent=283 // pred_fallthru
          _
      $region284: #{npc_cls_forward.1} parent=5 // pred_fallthru
        _
    $region6: #{npc_cls_forward.1} parent=1 // loop_footer
      %s123 = sadd.s32 1, %s119
    $region7: #{npc_cls_forward.1} parent=1 // loop_footer_branch
      %118 = sbr.rel target = $region3
    $region8: #{npc_cls_forward.1} parent=1 // loop_exit
      _
    %4170 = vsyncpa [#allocation3], 1
    %s4171 = scalar_lea.sflag [#allocation3], 1
    %4172 = vsyncpa %s4171, 1
    %4173 = vsyncpa [#allocation5], 1
    %4174 = vsyncpa [#allocation8], 1
    %4175 = vsyncpa [#allocation11], 1
    %4176 = vsyncpa [#allocation14], 1
    %4177 = vsyncpa [#allocation17], 1

</llo_original>
